<compile_context>
chip_gen: v5e
topology: v5e:2x2
jax: 0.10.0
libtpu: 0.0.40
codegen_flags: <defaults>
</compile_context>

<pallas_src>
import jax
import jax.numpy as jnp
from jax.experimental import pallas as pl
from jax.experimental.pallas import tpu as pltpu

HIDDEN = 1024                     # the module hard-codes m = 1024 (fc1 out / fc2 in)
LANE = 128                        # TPU lane width; keep output last dim a multiple
VMEM_BUDGET = 40 * 1024 * 1024    # tile-sizing budget: fits v7x's 64 MiB physical VMEM
VMEM_LIMIT = 48 * 1024 * 1024     # scoped VMEM limit handed to Mosaic (safe on all gens)


def _mlp_kernel(x_ref, w1_ref, b1_ref, w2_ref, b2_ref, o_ref):
    # Cast the row tile to bf16 in-register; both matmuls run on the MXU in
    # bf16 with f32 accumulation; bias add on the VPU, tanh on the EUP.
    x = x_ref[...].astype(jnp.bfloat16)
    h = jnp.tanh(
        jnp.dot(x, w1_ref[...], preferred_element_type=jnp.float32) + b1_ref[...]
    )
    out = jnp.tanh(
        jnp.dot(h.astype(jnp.bfloat16), w2_ref[...],
                preferred_element_type=jnp.float32) + b2_ref[...]
    )
    o_ref[...] = out.astype(o_ref.dtype)


def _round_up(v, m):
    return -(-v // m) * m


def _choose_tm(M, N_pad, x_itemsize):
    """Row-tile size.

    Small batches (M <= cap): one full-extent tile (block_shape == array dim is
    always legal) -> one grid step on one TensorCore, so tiny weight-stream-
    bound batches never duplicate the W1/W2 DMA across v7x's two TCs and never
    pay an extra grid step on the single-TC v5e/v6e.

    Large batches: the largest multiple of 256 (MXU M granularity) that keeps
    the estimated VMEM footprint inside VMEM_BUDGET, capped at 1024.  Each grid
    step is then >= ~2 GFLOP of MXU work, amortizing both the ~0.35 us/step
    grid overhead and (on v7x) the per-TC weight fetch that megacore sharding
    implies.
    """
    # Per-row VMEM bytes: double-buffered x tile + double-buffered f32 out tile
    # + in-kernel intermediates (x bf16, fc1 f32 accum, h bf16, fc2 f32 accum).
    per_row = (2 * HIDDEN * x_itemsize      # x tile, 2 pipeline buffers
               + 2 * N_pad * 4              # out tile (f32), 2 pipeline buffers
               + HIDDEN * (2 + 4 + 2)       # x bf16, fc1 accum f32, h bf16
               + N_pad * 4)                 # fc2 accum f32
    # Grid-invariant operands (DMA'd once, allocated with the default
    # double-buffered pipeline): W1, W2 in bf16; b1, b2 in f32.
    resident = 2 * (HIDDEN * HIDDEN * 2 + HIDDEN * N_pad * 2
                    + HIDDEN * 4 + N_pad * 4)
    cap = max(0, VMEM_BUDGET - resident) // per_row
    cap = max(256, min(1024, (cap // 256) * 256))
    return M if M <= cap else cap


@jax.jit
def mlp_forward(x, w1_t, b1, w2_t, b2):
    """Fused MLP forward.

    x    : any shape whose element count is a multiple of 1024 (x.view(-1, 1024))
    w1_t : (1024, 1024)  fc1 weight, already transposed (in_features, out_features)
    b1   : (1024,)
    w2_t : (1024, output_size)  fc2 weight, transposed
    b2   : (output_size,)
    """
    din = x.reshape(-1, HIDDEN)              # x.view(-1, m); no cast, no pad of x
    M = din.shape[0]
    N = w2_t.shape[1]
    N_pad = _round_up(N, LANE)

    w1 = w1_t.astype(jnp.bfloat16)
    w2 = w2_t.astype(jnp.bfloat16)
    b1_2d = b1.reshape(1, HIDDEN).astype(jnp.float32)
    b2_2d = b2.reshape(1, N).astype(jnp.float32)
    if N_pad != N:
        # Lane-density guard: zero columns give tanh(0) = 0 and are sliced off
        # below.  This touches only the small, batch-independent weight
        # tensors, never the activation stream.
        w2 = jnp.pad(w2, ((0, 0), (0, N_pad - N)))
        b2_2d = jnp.pad(b2_2d, ((0, 0), (0, N_pad - N)))

    tm = _choose_tm(M, N_pad, din.dtype.itemsize)
    grid_m = pl.cdiv(M, tm)                  # ragged last tile handled by Pallas masking

    cost = pl.CostEstimate(
        flops=2 * M * (HIDDEN * HIDDEN + HIDDEN * N_pad),
        transcendentals=M * (HIDDEN + N_pad),
        bytes_accessed=(din.size * din.dtype.itemsize
                        + w1.size * 2 + w2.size * 2
                        + b1_2d.size * 4 + b2_2d.size * 4
                        + M * N_pad * 4),
    )

    out = pl.pallas_call(
        _mlp_kernel,
        out_shape=jax.ShapeDtypeStruct((M, N_pad), jnp.float32),
        grid_spec=pltpu.PrefetchScalarGridSpec(
            num_scalar_prefetch=0,
            grid=(grid_m,),
            in_specs=[
                pl.BlockSpec((tm, HIDDEN), lambda i: (i, 0)),      # x row tile (pipelined)
                pl.BlockSpec((HIDDEN, HIDDEN), lambda i: (0, 0)),  # W1 (grid-invariant)
                pl.BlockSpec((1, HIDDEN), lambda i: (0, 0)),       # b1
                pl.BlockSpec((HIDDEN, N_pad), lambda i: (0, 0)),   # W2 (grid-invariant)
                pl.BlockSpec((1, N_pad), lambda i: (0, 0)),        # b2
            ],
            out_specs=pl.BlockSpec((tm, N_pad), lambda i: (i, 0)),
        ),
        compiler_params=pltpu.CompilerParams(
            # Shard the independent M axis across TensorCores on v7x (no-op on
            # single-TC v5e/v6e).  Small batches have grid_m == 1 and therefore
            # never pay a duplicated per-TC weight fetch.
            dimension_semantics=("parallel",),
            vmem_limit_bytes=VMEM_LIMIT,
        ),
        cost_estimate=cost,
    )(din, w1, b1_2d, w2, b2_2d)

    if N_pad != N:
        out = out[:, :N]
    return out.astype(x.dtype)


def init_mlp_params(key, input_size, output_size,
                    weight_dtype=jnp.bfloat16, bias_dtype=jnp.float32):
    """nn.Linear-style init (U(-1/sqrt(fan_in), 1/sqrt(fan_in))).

    Weights are stored already transposed (in_features, out_features) and in
    bf16 (MXU-native; halves resident VMEM + the HBM weight stream).
    """
    k1, k2, k3, k4 = jax.random.split(key, 4)
    bound1 = float(input_size) ** -0.5
    bound2 = float(HIDDEN) ** -0.5
    w1_t = jax.random.uniform(k1, (input_size, HIDDEN), jnp.float32,
                              -bound1, bound1).astype(weight_dtype)
    b1 = jax.random.uniform(k2, (HIDDEN,), bias_dtype, -bound1, bound1)
    w2_t = jax.random.uniform(k3, (HIDDEN, output_size), jnp.float32,
                              -bound2, bound2).astype(weight_dtype)
    b2 = jax.random.uniform(k4, (output_size,), bias_dtype, -bound2, bound2)
    return w1_t, b1, w2_t, b2


if __name__ == "__main__":
    key = jax.random.PRNGKey(0)
    kx, kp = jax.random.split(key)

    input_size = 1024   # forward's view(-1, 1024) implies in_features == 1024
    output_size = 200   # not a multiple of 128 -> exercises the lane-density N padding
    batch = 16          # small batch -> single-tile / single-TC fast path

    x = jax.random.normal(kx, (batch, input_size), jnp.float32)
    w1_t, b1, w2_t, b2 = init_mlp_params(kp, input_size, output_size)

    out = mlp_forward(x, w1_t, b1, w2_t, b2)
    out = jax.block_until_ready(out)

    # correctness check against a plain-JAX f32 reference of the PyTorch forward
    ref = jnp.tanh(
        jnp.tanh(x.reshape(-1, HIDDEN) @ w1_t.astype(jnp.float32) + b1)
        @ w2_t.astype(jnp.float32) + b2
    )
    assert out.shape == (batch, output_size), out.shape
    err = float(jnp.max(jnp.abs(out - ref)))
    assert err < 2e-2, f"max abs error {err}"   # bf16 weights/activations, f32 accum

    print("KERNEL_OK")
</pallas_src>

<mosaic_0001>
module attributes {stable_mosaic.version = 11 : i64} {
  func.func @_mlp_kernel(%arg0: i32, %arg1: memref<16x1024xf32, #tpu.memory_space<vmem>>, %arg2: memref<1024x1024xbf16, #tpu.memory_space<vmem>>, %arg3: memref<1x1024xf32, #tpu.memory_space<vmem>>, %arg4: memref<1024x256xbf16, #tpu.memory_space<vmem>>, %arg5: memref<1x256xf32, #tpu.memory_space<vmem>>, %arg6: memref<16x256xf32, #tpu.memory_space<vmem>>) attributes {dimension_semantics = [#tpu.dimension_semantics<parallel>], iteration_bounds = array<i64: 1>, scalar_prefetch = 0 : i64, scratch_operands = 0 : i64, tpu.core_type = #tpu.core_type<tc>, window_params = [{transform_indices = @transform_0, window_bounds = array<i64: 16, 1024>}, {pipeline_mode = #tpu.pipeline_mode<synchronous>, transform_indices = @transform_1, window_bounds = array<i64: 1024, 1024>}, {pipeline_mode = #tpu.pipeline_mode<synchronous>, transform_indices = @transform_2, window_bounds = array<i64: 1, 1024>}, {pipeline_mode = #tpu.pipeline_mode<synchronous>, transform_indices = @transform_3, window_bounds = array<i64: 1024, 256>}, {pipeline_mode = #tpu.pipeline_mode<synchronous>, transform_indices = @transform_4, window_bounds = array<i64: 1, 256>}, {transform_indices = @transform_5, window_bounds = array<i64: 16, 256>}]} {
    %c0 = arith.constant 0 : index
    %c0_0 = arith.constant 0 : index
    %0 = vector.load %arg1[%c0, %c0_0] : memref<16x1024xf32, #tpu.memory_space<vmem>>, vector<16x1024xf32>
    %1 = arith.truncf %0 : vector<16x1024xf32> to vector<16x1024xbf16>
    %c0_1 = arith.constant 0 : index
    %c0_2 = arith.constant 0 : index
    %2 = vector.load %arg2[%c0_1, %c0_2] : memref<1024x1024xbf16, #tpu.memory_space<vmem>>, vector<1024x1024xbf16>
    %cst = arith.constant dense<0.000000e+00> : vector<16x1024xf32>
    %3 = tpu.matmul %1, %2, %cst {dimension_numbers = #tpu.dot_dimension_numbers<[1], [0], [0], [1], [0, 0, 1, 1], [], []>} : vector<16x1024xbf16>, vector<1024x1024xbf16>, vector<16x1024xf32> -> vector<16x1024xf32>
    %c0_3 = arith.constant 0 : index
    %c0_4 = arith.constant 0 : index
    %4 = vector.load %arg3[%c0_3, %c0_4] : memref<1x1024xf32, #tpu.memory_space<vmem>>, vector<1x1024xf32>
    %5 = vector.broadcast %4 : vector<1x1024xf32> to vector<16x1024xf32>
    %6 = arith.addf %3, %5 : vector<16x1024xf32>
    %7 = math.tanh %6 : vector<16x1024xf32>
    %8 = arith.truncf %7 : vector<16x1024xf32> to vector<16x1024xbf16>
    %c0_5 = arith.constant 0 : index
    %c0_6 = arith.constant 0 : index
    %9 = vector.load %arg4[%c0_5, %c0_6] : memref<1024x256xbf16, #tpu.memory_space<vmem>>, vector<1024x256xbf16>
    %cst_7 = arith.constant dense<0.000000e+00> : vector<16x256xf32>
    %10 = tpu.matmul %8, %9, %cst_7 {dimension_numbers = #tpu.dot_dimension_numbers<[1], [0], [0], [1], [0, 0, 1, 1], [], []>} : vector<16x1024xbf16>, vector<1024x256xbf16>, vector<16x256xf32> -> vector<16x256xf32>
    %c0_8 = arith.constant 0 : index
    %c0_9 = arith.constant 0 : index
    %11 = vector.load %arg5[%c0_8, %c0_9] : memref<1x256xf32, #tpu.memory_space<vmem>>, vector<1x256xf32>
    %12 = vector.broadcast %11 : vector<1x256xf32> to vector<16x256xf32>
    %13 = arith.addf %10, %12 : vector<16x256xf32>
    %14 = math.tanh %13 : vector<16x256xf32>
    %c0_10 = arith.constant 0 : index
    %c0_11 = arith.constant 0 : index
    %15 = vector.load %arg6[%c0_10, %c0_11] : memref<16x256xf32, #tpu.memory_space<vmem>>, vector<16x256xf32>
    tpu.vector_store %arg6[%c0_10, %c0_11], %14 {strides = array<i32>} : memref<16x256xf32, #tpu.memory_space<vmem>>, vector<16x256xf32>,
    return
  }
  func.func @transform_0(%arg0: i32) -> (i32, i32) {
    %c0_i32 = arith.constant 0 : i32
    %c0_i32_0 = arith.constant 0 : i32
    return %arg0, %c0_i32 : i32, i32
  }
  func.func @transform_1(%arg0: i32) -> (i32, i32) {
    %c0_i32 = arith.constant 0 : i32
    %c0_i32_0 = arith.constant 0 : i32
    %c0_i32_1 = arith.constant 0 : i32
    return %c0_i32, %c0_i32_0 : i32, i32
  }
  func.func @transform_2(%arg0: i32) -> (i32, i32) {
    %c0_i32 = arith.constant 0 : i32
    %c0_i32_0 = arith.constant 0 : i32
    %c0_i32_1 = arith.constant 0 : i32
    return %c0_i32, %c0_i32_0 : i32, i32
  }
  func.func @transform_3(%arg0: i32) -> (i32, i32) {
    %c0_i32 = arith.constant 0 : i32
    %c0_i32_0 = arith.constant 0 : i32
    %c0_i32_1 = arith.constant 0 : i32
    return %c0_i32, %c0_i32_0 : i32, i32
  }
  func.func @transform_4(%arg0: i32) -> (i32, i32) {
    %c0_i32 = arith.constant 0 : i32
    %c0_i32_0 = arith.constant 0 : i32
    %c0_i32_1 = arith.constant 0 : i32
    return %c0_i32, %c0_i32_0 : i32, i32
  }
  func.func @transform_5(%arg0: i32) -> (i32, i32) {
    %c0_i32 = arith.constant 0 : i32
    %c0_i32_0 = arith.constant 0 : i32
    return %arg0, %c0_i32 : i32, i32
  }
}

</mosaic_0001>

<llo_original>
// kernel: mlp_forward.1
$region0: #{mlp_forward.1}
  #allocation0 [shape = 'u32[]', space=smem, size = 0x4, offset = 0x4, fixed_abs, tag = 'smem constant byte address 0x4 - core index']
  #allocation1 [shape = 'u32[72,128]{1,0:T(1,128)}', space=vmem, size = 0x9000, scoped, tag = 'internal scratch']
  %s0 = inlined_call_operand.hbm [shape: f32[16,1024], index: 0, kind: input, shape index: {}]
  %s1 = inlined_call_operand.hbm [shape: bf16[1024,1024], index: 1, kind: input, shape index: {}]
  %s2 = inlined_call_operand.hbm [shape: f32[1,1024], index: 2, kind: input, shape index: {}]
  %s3 = inlined_call_operand.vmem [shape: bf16[1024,256], index: 3, kind: input, shape index: {}]
  %s4 = inlined_call_operand.vmem [shape: f32[1,256], index: 4, kind: input, shape index: {}]
  %s5 = inlined_call_operand.hbm [shape: f32[16,256], index: 5, kind: output, shape index: {}]
  %s6 = sld [smem:[#allocation0]]
  $region42: #{mlp_forward.1} parent=0
    _
  %s8 = ssub.s32 1, %s6
  %s9 = scalar_select 0, %s8, %s6
  $region1: #{mlp_forward.1} parent=0
    #allocation2 [shape = 'u8[65536]{0}', space=vmem, size = 0x10000, scoped, tag = 'input window, operand 0, single buffered']
    #allocation3 [shape = 's32[1]{0}', space=sflag, size = 0x4, scoped, tag = 'scoped memory for mlp_forward.1']
    #allocation4 [shape = 's32[1]{0}', space=sflag, size = 0x4, scoped, tag = 'scoped memory for mlp_forward.1']
    #allocation5 [shape = 'u8[2097152]{0}', space=vmem, size = 0x200000, scoped, tag = 'input window, operand 1, single buffered']
    #allocation6 [shape = 's32[1]{0}', space=sflag, size = 0x4, scoped, tag = 'scoped memory for mlp_forward.1']
    #allocation7 [shape = 'u8[4096]{0}', space=vmem, size = 0x1000, scoped, tag = 'input window, operand 2, single buffered']
    #allocation8 [shape = 'u8[16384]{0}', space=vmem, size = 0x4000, scoped, tag = 'output window, operand 0, single buffered']
    %10 = vsyncpa [#allocation3], 0
    %11 = vsyncpa [#allocation6], 0
    %12 = vsyncpa [#allocation4], 0
    // Predicated region
    $region2: #{mlp_forward.1} parent=1 // pred_check
      _
    $region3: #{mlp_forward.1} parent=1 // pred_check_branch
      %14 = sbr.rel (0) target = $region5
    $region4: #{mlp_forward.1} parent=1 // pred_region
      %16 = vsyncadd [#allocation3], 0
      %s17 = sshll.u32 %s0, 4
      %s18 = int_to_ptr.hbm [resolvable:$true] %s17
      %s19 = sshll.u32 [#allocation2], 4
      %s20 = int_to_ptr.vmem [resolvable:$true] %s19
      %25 = dma.hbm_to_vmem [thread:$0]  %s18, 2048, %s20, [#allocation3], 1024, 1024, 64
    $region5: #{mlp_forward.1} parent=1 // pred_fallthru
      _
    // Predicated region
    $region6: #{mlp_forward.1} parent=1 // pred_check
      _
    $region7: #{mlp_forward.1} parent=1 // pred_check_branch
      %27 = sbr.rel (0) target = $region9
    $region8: #{mlp_forward.1} parent=1 // pred_region
      %29 = vsyncadd [#allocation6], 0
      %s30 = sshll.u32 %s1, 4
      %s31 = int_to_ptr.hbm [resolvable:$true] %s30
      %s32 = sshll.u32 [#allocation5], 4
      %s33 = int_to_ptr.vmem [resolvable:$true] %s32
      %38 = dma.hbm_to_vmem [thread:$0]  %s31, 65536, %s33, [#allocation6], 512, 512, 32
    $region9: #{mlp_forward.1} parent=1 // pred_fallthru
      _
    // Predicated region
    $region10: #{mlp_forward.1} parent=1 // pred_check
      _
    $region11: #{mlp_forward.1} parent=1 // pred_check_branch
      %40 = sbr.rel (0) target = $region13
    $region12: #{mlp_forward.1} parent=1 // pred_region
      %42 = vsyncadd [#allocation6], 0
      %s44 = sshll.u32 %s2, 4
      %s45 = int_to_ptr.hbm [resolvable:$true] %s44
      %s46 = sshll.u32 [#allocation7], 4
      %s47 = int_to_ptr.vmem [resolvable:$true] %s46
      %49 = dma.hbm_to_vmem [thread:$0]  %s45, 128, %s47, [#allocation6]
    $region13: #{mlp_forward.1} parent=1 // pred_fallthru
      _
    // Predicated region
    $region14: #{mlp_forward.1} parent=1 // pred_check
      _
    $region15: #{mlp_forward.1} parent=1 // pred_check_branch
      %51 = sbr.rel (0) target = $region17
    $region16: #{mlp_forward.1} parent=1 // pred_region
      _
    $region17: #{mlp_forward.1} parent=1 // pred_fallthru
      _
    // Predicated region
    $region18: #{mlp_forward.1} parent=1 // pred_check
      _
    $region19: #{mlp_forward.1} parent=1 // pred_check_branch
      %53 = sbr.rel (0) target = $region21
    $region20: #{mlp_forward.1} parent=1 // pred_region
      _
    $region21: #{mlp_forward.1} parent=1 // pred_fallthru
      _
    // Predicated region
    $region22: #{mlp_forward.1} parent=1 // pred_check
      _
    $region23: #{mlp_forward.1} parent=1 // pred_check_branch
      %55 = sbr.rel (0) target = $region25
    $region24: #{mlp_forward.1} parent=1 // pred_region
      %57 = dma.done [#allocation3], 2048
    $region25: #{mlp_forward.1} parent=1 // pred_fallthru
      _
    // Predicated region
    $region26: #{mlp_forward.1} parent=1 // pred_check
      _
    $region27: #{mlp_forward.1} parent=1 // pred_check_branch
      %59 = sbr.rel (0) target = $region29
    $region28: #{mlp_forward.1} parent=1 // pred_region
      %61 = dma.done [#allocation6], 65536
    $region29: #{mlp_forward.1} parent=1 // pred_fallthru
      _
    // Predicated region
    $region30: #{mlp_forward.1} parent=1 // pred_check
      _
    $region31: #{mlp_forward.1} parent=1 // pred_check_branch
      %63 = sbr.rel (0) target = $region33
    $region32: #{mlp_forward.1} parent=1 // pred_region
      %65 = dma.done [#allocation6], 128
    $region33: #{mlp_forward.1} parent=1 // pred_fallthru
      _
    %v66 = vld [vmem:[#allocation2] sm:$0xff]
    %v67 = vld [vmem:[#allocation2 + $0x8] sm:$0xff]
    %v68 = vld [vmem:[#allocation2 + $0x10] sm:$0xff]
    %v69 = vld [vmem:[#allocation2 + $0x18] sm:$0xff]
    %v70 = vld [vmem:[#allocation2 + $0x20] sm:$0xff]
    %v71 = vld [vmem:[#allocation2 + $0x28] sm:$0xff]
    %v72 = vld [vmem:[#allocation2 + $0x30] sm:$0xff]
    %v73 = vld [vmem:[#allocation2 + $0x38] sm:$0xff]
    %v74 = vld [vmem:[#allocation2 + $0x40] sm:$0xff]
    %v75 = vld [vmem:[#allocation2 + $0x48] sm:$0xff]
    %v76 = vld [vmem:[#allocation2 + $0x50] sm:$0xff]
    %v77 = vld [vmem:[#allocation2 + $0x58] sm:$0xff]
    %v78 = vld [vmem:[#allocation2 + $0x60] sm:$0xff]
    %v79 = vld [vmem:[#allocation2 + $0x68] sm:$0xff]
    %v80 = vld [vmem:[#allocation2 + $0x70] sm:$0xff]
    %v81 = vld [vmem:[#allocation2 + $0x78] sm:$0xff]
    %v82 = vpack.c.bf16 %v74, %v66
    %v83 = vpack.c.bf16 %v75, %v67
    %v84 = vpack.c.bf16 %v76, %v68
    %v85 = vpack.c.bf16 %v77, %v69
    %v86 = vpack.c.bf16 %v78, %v70
    %v87 = vpack.c.bf16 %v79, %v71
    %v88 = vpack.c.bf16 %v80, %v72
    %v89 = vpack.c.bf16 %v81, %v73
    %v90 = vld [vmem:[#allocation5] sm:$0xff]
    %v91 = vld [vmem:[#allocation5 + $0x8] sm:$0xff]
    %v92 = vld [vmem:[#allocation5 + $0x10] sm:$0xff]
    %v93 = vld [vmem:[#allocation5 + $0x18] sm:$0xff]
    %v94 = vld [vmem:[#allocation5 + $0x20] sm:$0xff]
    %v95 = vld [vmem:[#allocation5 + $0x28] sm:$0xff]
    %v96 = vld [vmem:[#allocation5 + $0x30] sm:$0xff]
    %v97 = vld [vmem:[#allocation5 + $0x38] sm:$0xff]
    %v98 = vld [vmem:[#allocation5 + $0x40] sm:$0xff]
    %v99 = vld [vmem:[#allocation5 + $0x48] sm:$0xff]
    %v100 = vld [vmem:[#allocation5 + $0x50] sm:$0xff]
    %v101 = vld [vmem:[#allocation5 + $0x58] sm:$0xff]
    %v102 = vld [vmem:[#allocation5 + $0x60] sm:$0xff]
    %v103 = vld [vmem:[#allocation5 + $0x68] sm:$0xff]
    %v104 = vld [vmem:[#allocation5 + $0x70] sm:$0xff]
    %v105 = vld [vmem:[#allocation5 + $0x78] sm:$0xff]
    %v106 = vld [vmem:[#allocation5 + $0x80] sm:$0xff]
    %v107 = vld [vmem:[#allocation5 + $0x88] sm:$0xff]
    %v108 = vld [vmem:[#allocation5 + $0x90] sm:$0xff]
    %v109 = vld [vmem:[#allocation5 + $0x98] sm:$0xff]
    %v110 = vld [vmem:[#allocation5 + $0xa0] sm:$0xff]
    %v111 = vld [vmem:[#allocation5 + $0xa8] sm:$0xff]
    %v112 = vld [vmem:[#allocation5 + $0xb0] sm:$0xff]
    %v113 = vld [vmem:[#allocation5 + $0xb8] sm:$0xff]
    %v114 = vld [vmem:[#allocation5 + $0xc0] sm:$0xff]
    %v115 = vld [vmem:[#allocation5 + $0xc8] sm:$0xff]
    %v116 = vld [vmem:[#allocation5 + $0xd0] sm:$0xff]
    %v117 = vld [vmem:[#allocation5 + $0xd8] sm:$0xff]
    %v118 = vld [vmem:[#allocation5 + $0xe0] sm:$0xff]
    %v119 = vld [vmem:[#allocation5 + $0xe8] sm:$0xff]
    %v120 = vld [vmem:[#allocation5 + $0xf0] sm:$0xff]
    %v121 = vld [vmem:[#allocation5 + $0xf8] sm:$0xff]
    %v122 = vld [vmem:[#allocation5 + $0x100] sm:$0xff]
    %v123 = vld [vmem:[#allocation5 + $0x108] sm:$0xff]
    %v124 = vld [vmem:[#allocation5 + $0x110] sm:$0xff]
    %v125 = vld [vmem:[#allocation5 + $0x118] sm:$0xff]
    %v126 = vld [vmem:[#allocation5 + $0x120] sm:$0xff]
    %v127 = vld [vmem:[#allocation5 + $0x128] sm:$0xff]
    %v128 = vld [vmem:[#allocation5 + $0x130] sm:$0xff]
    %v129 = vld [vmem:[#allocation5 + $0x138] sm:$0xff]
    %v130 = vld [vmem:[#allocation5 + $0x140] sm:$0xff]
    %v131 = vld [vmem:[#allocation5 + $0x148] sm:$0xff]
    %v132 = vld [vmem:[#allocation5 + $0x150] sm:$0xff]
    %v133 = vld [vmem:[#allocation5 + $0x158] sm:$0xff]
    %v134 = vld [vmem:[#allocation5 + $0x160] sm:$0xff]
    %v135 = vld [vmem:[#allocation5 + $0x168] sm:$0xff]
    %v136 = vld [vmem:[#allocation5 + $0x170] sm:$0xff]
    %v137 = vld [vmem:[#allocation5 + $0x178] sm:$0xff]
    %v138 = vld [vmem:[#allocation5 + $0x180] sm:$0xff]
    %v139 = vld [vmem:[#allocation5 + $0x188] sm:$0xff]
    %v140 = vld [vmem:[#allocation5 + $0x190] sm:$0xff]
    %v141 = vld [vmem:[#allocation5 + $0x198] sm:$0xff]
    %v142 = vld [vmem:[#allocation5 + $0x1a0] sm:$0xff]
    %v143 = vld [vmem:[#allocation5 + $0x1a8] sm:$0xff]
    %v144 = vld [vmem:[#allocation5 + $0x1b0] sm:$0xff]
    %v145 = vld [vmem:[#allocation5 + $0x1b8] sm:$0xff]
    %v146 = vld [vmem:[#allocation5 + $0x1c0] sm:$0xff]
    %v147 = vld [vmem:[#allocation5 + $0x1c8] sm:$0xff]
    %v148 = vld [vmem:[#allocation5 + $0x1d0] sm:$0xff]
    %v149 = vld [vmem:[#allocation5 + $0x1d8] sm:$0xff]
    %v150 = vld [vmem:[#allocation5 + $0x1e0] sm:$0xff]
    %v151 = vld [vmem:[#allocation5 + $0x1e8] sm:$0xff]
    %v152 = vld [vmem:[#allocation5 + $0x1f0] sm:$0xff]
    %v153 = vld [vmem:[#allocation5 + $0x1f8] sm:$0xff]
    %v154 = vld [vmem:[#allocation5 + $0x200] sm:$0xff]
    %v155 = vld [vmem:[#allocation5 + $0x208] sm:$0xff]
    %v156 = vld [vmem:[#allocation5 + $0x210] sm:$0xff]
    %v157 = vld [vmem:[#allocation5 + $0x218] sm:$0xff]
    %v158 = vld [vmem:[#allocation5 + $0x220] sm:$0xff]
    %v159 = vld [vmem:[#allocation5 + $0x228] sm:$0xff]
    %v160 = vld [vmem:[#allocation5 + $0x230] sm:$0xff]
    %v161 = vld [vmem:[#allocation5 + $0x238] sm:$0xff]
    %v162 = vld [vmem:[#allocation5 + $0x240] sm:$0xff]
    %v163 = vld [vmem:[#allocation5 + $0x248] sm:$0xff]
    %v164 = vld [vmem:[#allocation5 + $0x250] sm:$0xff]
    %v165 = vld [vmem:[#allocation5 + $0x258] sm:$0xff]
    %v166 = vld [vmem:[#allocation5 + $0x260] sm:$0xff]
    %v167 = vld [vmem:[#allocation5 + $0x268] sm:$0xff]
    %v168 = vld [vmem:[#allocation5 + $0x270] sm:$0xff]
    %v169 = vld [vmem:[#allocation5 + $0x278] sm:$0xff]
    %v170 = vld [vmem:[#allocation5 + $0x280] sm:$0xff]
    %v171 = vld [vmem:[#allocation5 + $0x288] sm:$0xff]
    %v172 = vld [vmem:[#allocation5 + $0x290] sm:$0xff]
    %v173 = vld [vmem:[#allocation5 + $0x298] sm:$0xff]
    %v174 = vld [vmem:[#allocation5 + $0x2a0] sm:$0xff]
    %v175 = vld [vmem:[#allocation5 + $0x2a8] sm:$0xff]
    %v176 = vld [vmem:[#allocation5 + $0x2b0] sm:$0xff]
    %v177 = vld [vmem:[#allocation5 + $0x2b8] sm:$0xff]
    %v178 = vld [vmem:[#allocation5 + $0x2c0] sm:$0xff]
    %v179 = vld [vmem:[#allocation5 + $0x2c8] sm:$0xff]
    %v180 = vld [vmem:[#allocation5 + $0x2d0] sm:$0xff]
    %v181 = vld [vmem:[#allocation5 + $0x2d8] sm:$0xff]
    %v182 = vld [vmem:[#allocation5 + $0x2e0] sm:$0xff]
    %v183 = vld [vmem:[#allocation5 + $0x2e8] sm:$0xff]
    %v184 = vld [vmem:[#allocation5 + $0x2f0] sm:$0xff]
    %v185 = vld [vmem:[#allocation5 + $0x2f8] sm:$0xff]
    %v186 = vld [vmem:[#allocation5 + $0x300] sm:$0xff]
    %v187 = vld [vmem:[#allocation5 + $0x308] sm:$0xff]
    %v188 = vld [vmem:[#allocation5 + $0x310] sm:$0xff]
    %v189 = vld [vmem:[#allocation5 + $0x318] sm:$0xff]
    %v190 = vld [vmem:[#allocation5 + $0x320] sm:$0xff]
    %v191 = vld [vmem:[#allocation5 + $0x328] sm:$0xff]
    %v192 = vld [vmem:[#allocation5 + $0x330] sm:$0xff]
    %v193 = vld [vmem:[#allocation5 + $0x338] sm:$0xff]
    %v194 = vld [vmem:[#allocation5 + $0x340] sm:$0xff]
    %v195 = vld [vmem:[#allocation5 + $0x348] sm:$0xff]
    %v196 = vld [vmem:[#allocation5 + $0x350] sm:$0xff]
    %v197 = vld [vmem:[#allocation5 + $0x358] sm:$0xff]
    %v198 = vld [vmem:[#allocation5 + $0x360] sm:$0xff]
    %v199 = vld [vmem:[#allocation5 + $0x368] sm:$0xff]
    %v200 = vld [vmem:[#allocation5 + $0x370] sm:$0xff]
    %v201 = vld [vmem:[#allocation5 + $0x378] sm:$0xff]
    %v202 = vld [vmem:[#allocation5 + $0x380] sm:$0xff]
    %v203 = vld [vmem:[#allocation5 + $0x388] sm:$0xff]
    %v204 = vld [vmem:[#allocation5 + $0x390] sm:$0xff]
    %v205 = vld [vmem:[#allocation5 + $0x398] sm:$0xff]
    %v206 = vld [vmem:[#allocation5 + $0x3a0] sm:$0xff]
    %v207 = vld [vmem:[#allocation5 + $0x3a8] sm:$0xff]
    %v208 = vld [vmem:[#allocation5 + $0x3b0] sm:$0xff]
    %v209 = vld [vmem:[#allocation5 + $0x3b8] sm:$0xff]
    %v210 = vld [vmem:[#allocation5 + $0x3c0] sm:$0xff]
    %v211 = vld [vmem:[#allocation5 + $0x3c8] sm:$0xff]
    %v212 = vld [vmem:[#allocation5 + $0x3d0] sm:$0xff]
    %v213 = vld [vmem:[#allocation5 + $0x3d8] sm:$0xff]
    %v214 = vld [vmem:[#allocation5 + $0x3e0] sm:$0xff]
    %v215 = vld [vmem:[#allocation5 + $0x3e8] sm:$0xff]
    %v216 = vld [vmem:[#allocation5 + $0x3f0] sm:$0xff]
    %v217 = vld [vmem:[#allocation5 + $0x3f8] sm:$0xff]
    %v218 = vld [vmem:[#allocation5 + $0x400] sm:$0xff]
    %v219 = vld [vmem:[#allocation5 + $0x408] sm:$0xff]
    %v220 = vld [vmem:[#allocation5 + $0x410] sm:$0xff]
    %v221 = vld [vmem:[#allocation5 + $0x418] sm:$0xff]
    %v222 = vld [vmem:[#allocation5 + $0x420] sm:$0xff]
    %v223 = vld [vmem:[#allocation5 + $0x428] sm:$0xff]
    %v224 = vld [vmem:[#allocation5 + $0x430] sm:$0xff]
    %v225 = vld [vmem:[#allocation5 + $0x438] sm:$0xff]
    %v226 = vld [vmem:[#allocation5 + $0x440] sm:$0xff]
    %v227 = vld [vmem:[#allocation5 + $0x448] sm:$0xff]
    %v228 = vld [vmem:[#allocation5 + $0x450] sm:$0xff]
    %v229 = vld [vmem:[#allocation5 + $0x458] sm:$0xff]
    %v230 = vld [vmem:[#allocation5 + $0x460] sm:$0xff]
    %v231 = vld [vmem:[#allocation5 + $0x468] sm:$0xff]
    %v232 = vld [vmem:[#allocation5 + $0x470] sm:$0xff]
    %v233 = vld [vmem:[#allocation5 + $0x478] sm:$0xff]
    %v234 = vld [vmem:[#allocation5 + $0x480] sm:$0xff]
    %v235 = vld [vmem:[#allocation5 + $0x488] sm:$0xff]
    %v236 = vld [vmem:[#allocation5 + $0x490] sm:$0xff]
    %v237 = vld [vmem:[#allocation5 + $0x498] sm:$0xff]
    %v238 = vld [vmem:[#allocation5 + $0x4a0] sm:$0xff]
    %v239 = vld [vmem:[#allocation5 + $0x4a8] sm:$0xff]
    %v240 = vld [vmem:[#allocation5 + $0x4b0] sm:$0xff]
    %v241 = vld [vmem:[#allocation5 + $0x4b8] sm:$0xff]
    %v242 = vld [vmem:[#allocation5 + $0x4c0] sm:$0xff]
    %v243 = vld [vmem:[#allocation5 + $0x4c8] sm:$0xff]
    %v244 = vld [vmem:[#allocation5 + $0x4d0] sm:$0xff]
    %v245 = vld [vmem:[#allocation5 + $0x4d8] sm:$0xff]
    %v246 = vld [vmem:[#allocation5 + $0x4e0] sm:$0xff]
    %v247 = vld [vmem:[#allocation5 + $0x4e8] sm:$0xff]
    %v248 = vld [vmem:[#allocation5 + $0x4f0] sm:$0xff]
    %v249 = vld [vmem:[#allocation5 + $0x4f8] sm:$0xff]
    %v250 = vld [vmem:[#allocation5 + $0x500] sm:$0xff]
    %v251 = vld [vmem:[#allocation5 + $0x508] sm:$0xff]
    %v252 = vld [vmem:[#allocation5 + $0x510] sm:$0xff]
    %v253 = vld [vmem:[#allocation5 + $0x518] sm:$0xff]
    %v254 = vld [vmem:[#allocation5 + $0x520] sm:$0xff]
    %v255 = vld [vmem:[#allocation5 + $0x528] sm:$0xff]
    %v256 = vld [vmem:[#allocation5 + $0x530] sm:$0xff]
    %v257 = vld [vmem:[#allocation5 + $0x538] sm:$0xff]
    %v258 = vld [vmem:[#allocation5 + $0x540] sm:$0xff]
    %v259 = vld [vmem:[#allocation5 + $0x548] sm:$0xff]
    %v260 = vld [vmem:[#allocation5 + $0x550] sm:$0xff]
    %v261 = vld [vmem:[#allocation5 + $0x558] sm:$0xff]
    %v262 = vld [vmem:[#allocation5 + $0x560] sm:$0xff]
    %v263 = vld [vmem:[#allocation5 + $0x568] sm:$0xff]
    %v264 = vld [vmem:[#allocation5 + $0x570] sm:$0xff]
    %v265 = vld [vmem:[#allocation5 + $0x578] sm:$0xff]
    %v266 = vld [vmem:[#allocation5 + $0x580] sm:$0xff]
    %v267 = vld [vmem:[#allocation5 + $0x588] sm:$0xff]
    %v268 = vld [vmem:[#allocation5 + $0x590] sm:$0xff]
    %v269 = vld [vmem:[#allocation5 + $0x598] sm:$0xff]
    %v270 = vld [vmem:[#allocation5 + $0x5a0] sm:$0xff]
    %v271 = vld [vmem:[#allocation5 + $0x5a8] sm:$0xff]
    %v272 = vld [vmem:[#allocation5 + $0x5b0] sm:$0xff]
    %v273 = vld [vmem:[#allocation5 + $0x5b8] sm:$0xff]
    %v274 = vld [vmem:[#allocation5 + $0x5c0] sm:$0xff]
    %v275 = vld [vmem:[#allocation5 + $0x5c8] sm:$0xff]
    %v276 = vld [vmem:[#allocation5 + $0x5d0] sm:$0xff]
    %v277 = vld [vmem:[#allocation5 + $0x5d8] sm:$0xff]
    %v278 = vld [vmem:[#allocation5 + $0x5e0] sm:$0xff]
    %v279 = vld [vmem:[#allocation5 + $0x5e8] sm:$0xff]
    %v280 = vld [vmem:[#allocation5 + $0x5f0] sm:$0xff]
    %v281 = vld [vmem:[#allocation5 + $0x5f8] sm:$0xff]
    %v282 = vld [vmem:[#allocation5 + $0x600] sm:$0xff]
    %v283 = vld [vmem:[#allocation5 + $0x608] sm:$0xff]
    %v284 = vld [vmem:[#allocation5 + $0x610] sm:$0xff]
    %v285 = vld [vmem:[#allocation5 + $0x618] sm:$0xff]
    %v286 = vld [vmem:[#allocation5 + $0x620] sm:$0xff]
    %v287 = vld [vmem:[#allocation5 + $0x628] sm:$0xff]
    %v288 = vld [vmem:[#allocation5 + $0x630] sm:$0xff]
    %v289 = vld [vmem:[#allocation5 + $0x638] sm:$0xff]
    %v290 = vld [vmem:[#allocation5 + $0x640] sm:$0xff]
    %v291 = vld [vmem:[#allocation5 + $0x648] sm:$0xff]
    %v292 = vld [vmem:[#allocation5 + $0x650] sm:$0xff]
    %v293 = vld [vmem:[#allocation5 + $0x658] sm:$0xff]
    %v294 = vld [vmem:[#allocation5 + $0x660] sm:$0xff]
    %v295 = vld [vmem:[#allocation5 + $0x668] sm:$0xff]
    %v296 = vld [vmem:[#allocation5 + $0x670] sm:$0xff]
    %v297 = vld [vmem:[#allocation5 + $0x678] sm:$0xff]
    %v298 = vld [vmem:[#allocation5 + $0x680] sm:$0xff]
    %v299 = vld [vmem:[#allocation5 + $0x688] sm:$0xff]
    %v300 = vld [vmem:[#allocation5 + $0x690] sm:$0xff]
    %v301 = vld [vmem:[#allocation5 + $0x698] sm:$0xff]
    %v302 = vld [vmem:[#allocation5 + $0x6a0] sm:$0xff]
    %v303 = vld [vmem:[#allocation5 + $0x6a8] sm:$0xff]
    %v304 = vld [vmem:[#allocation5 + $0x6b0] sm:$0xff]
    %v305 = vld [vmem:[#allocation5 + $0x6b8] sm:$0xff]
    %v306 = vld [vmem:[#allocation5 + $0x6c0] sm:$0xff]
    %v307 = vld [vmem:[#allocation5 + $0x6c8] sm:$0xff]
    %v308 = vld [vmem:[#allocation5 + $0x6d0] sm:$0xff]
    %v309 = vld [vmem:[#allocation5 + $0x6d8] sm:$0xff]
    %v310 = vld [vmem:[#allocation5 + $0x6e0] sm:$0xff]
    %v311 = vld [vmem:[#allocation5 + $0x6e8] sm:$0xff]
    %v312 = vld [vmem:[#allocation5 + $0x6f0] sm:$0xff]
    %v313 = vld [vmem:[#allocation5 + $0x6f8] sm:$0xff]
    %v314 = vld [vmem:[#allocation5 + $0x700] sm:$0xff]
    %v315 = vld [vmem:[#allocation5 + $0x708] sm:$0xff]
    %v316 = vld [vmem:[#allocation5 + $0x710] sm:$0xff]
    %v317 = vld [vmem:[#allocation5 + $0x718] sm:$0xff]
    %v318 = vld [vmem:[#allocation5 + $0x720] sm:$0xff]
    %v319 = vld [vmem:[#allocation5 + $0x728] sm:$0xff]
    %v320 = vld [vmem:[#allocation5 + $0x730] sm:$0xff]
    %v321 = vld [vmem:[#allocation5 + $0x738] sm:$0xff]
    %v322 = vld [vmem:[#allocation5 + $0x740] sm:$0xff]
    %v323 = vld [vmem:[#allocation5 + $0x748] sm:$0xff]
    %v324 = vld [vmem:[#allocation5 + $0x750] sm:$0xff]
    %v325 = vld [vmem:[#allocation5 + $0x758] sm:$0xff]
    %v326 = vld [vmem:[#allocation5 + $0x760] sm:$0xff]
    %v327 = vld [vmem:[#allocation5 + $0x768] sm:$0xff]
    %v328 = vld [vmem:[#allocation5 + $0x770] sm:$0xff]
    %v329 = vld [vmem:[#allocation5 + $0x778] sm:$0xff]
    %v330 = vld [vmem:[#allocation5 + $0x780] sm:$0xff]
    %v331 = vld [vmem:[#allocation5 + $0x788] sm:$0xff]
    %v332 = vld [vmem:[#allocation5 + $0x790] sm:$0xff]
    %v333 = vld [vmem:[#allocation5 + $0x798] sm:$0xff]
    %v334 = vld [vmem:[#allocation5 + $0x7a0] sm:$0xff]
    %v335 = vld [vmem:[#allocation5 + $0x7a8] sm:$0xff]
    %v336 = vld [vmem:[#allocation5 + $0x7b0] sm:$0xff]
    %v337 = vld [vmem:[#allocation5 + $0x7b8] sm:$0xff]
    %v338 = vld [vmem:[#allocation5 + $0x7c0] sm:$0xff]
    %v339 = vld [vmem:[#allocation5 + $0x7c8] sm:$0xff]
    %v340 = vld [vmem:[#allocation5 + $0x7d0] sm:$0xff]
    %v341 = vld [vmem:[#allocation5 + $0x7d8] sm:$0xff]
    %v342 = vld [vmem:[#allocation5 + $0x7e0] sm:$0xff]
    %v343 = vld [vmem:[#allocation5 + $0x7e8] sm:$0xff]
    %v344 = vld [vmem:[#allocation5 + $0x7f0] sm:$0xff]
    %v345 = vld [vmem:[#allocation5 + $0x7f8] sm:$0xff]
    %v346 = vld [vmem:[#allocation5 + $0x800] sm:$0xff]
    %v347 = vld [vmem:[#allocation5 + $0x808] sm:$0xff]
    %v348 = vld [vmem:[#allocation5 + $0x810] sm:$0xff]
    %v349 = vld [vmem:[#allocation5 + $0x818] sm:$0xff]
    %v350 = vld [vmem:[#allocation5 + $0x820] sm:$0xff]
    %v351 = vld [vmem:[#allocation5 + $0x828] sm:$0xff]
    %v352 = vld [vmem:[#allocation5 + $0x830] sm:$0xff]
    %v353 = vld [vmem:[#allocation5 + $0x838] sm:$0xff]
    %v354 = vld [vmem:[#allocation5 + $0x840] sm:$0xff]
    %v355 = vld [vmem:[#allocation5 + $0x848] sm:$0xff]
    %v356 = vld [vmem:[#allocation5 + $0x850] sm:$0xff]
    %v357 = vld [vmem:[#allocation5 + $0x858] sm:$0xff]
    %v358 = vld [vmem:[#allocation5 + $0x860] sm:$0xff]
    %v359 = vld [vmem:[#allocation5 + $0x868] sm:$0xff]
    %v360 = vld [vmem:[#allocation5 + $0x870] sm:$0xff]
    %v361 = vld [vmem:[#allocation5 + $0x878] sm:$0xff]
    %v362 = vld [vmem:[#allocation5 + $0x880] sm:$0xff]
    %v363 = vld [vmem:[#allocation5 + $0x888] sm:$0xff]
    %v364 = vld [vmem:[#allocation5 + $0x890] sm:$0xff]
    %v365 = vld [vmem:[#allocation5 + $0x898] sm:$0xff]
    %v366 = vld [vmem:[#allocation5 + $0x8a0] sm:$0xff]
    %v367 = vld [vmem:[#allocation5 + $0x8a8] sm:$0xff]
    %v368 = vld [vmem:[#allocation5 + $0x8b0] sm:$0xff]
    %v369 = vld [vmem:[#allocation5 + $0x8b8] sm:$0xff]
    %v370 = vld [vmem:[#allocation5 + $0x8c0] sm:$0xff]
    %v371 = vld [vmem:[#allocation5 + $0x8c8] sm:$0xff]
    %v372 = vld [vmem:[#allocation5 + $0x8d0] sm:$0xff]
    %v373 = vld [vmem:[#allocation5 + $0x8d8] sm:$0xff]
    %v374 = vld [vmem:[#allocation5 + $0x8e0] sm:$0xff]
    %v375 = vld [vmem:[#allocation5 + $0x8e8] sm:$0xff]
    %v376 = vld [vmem:[#allocation5 + $0x8f0] sm:$0xff]
    %v377 = vld [vmem:[#allocation5 + $0x8f8] sm:$0xff]
    %v378 = vld [vmem:[#allocation5 + $0x900] sm:$0xff]
    %v379 = vld [vmem:[#allocation5 + $0x908] sm:$0xff]
    %v380 = vld [vmem:[#allocation5 + $0x910] sm:$0xff]
    %v381 = vld [vmem:[#allocation5 + $0x918] sm:$0xff]
    %v382 = vld [vmem:[#allocation5 + $0x920] sm:$0xff]
    %v383 = vld [vmem:[#allocation5 + $0x928] sm:$0xff]
    %v384 = vld [vmem:[#allocation5 + $0x930] sm:$0xff]
    %v385 = vld [vmem:[#allocation5 + $0x938] sm:$0xff]
    %v386 = vld [vmem:[#allocation5 + $0x940] sm:$0xff]
    %v387 = vld [vmem:[#allocation5 + $0x948] sm:$0xff]
    %v388 = vld [vmem:[#allocation5 + $0x950] sm:$0xff]
    %v389 = vld [vmem:[#allocation5 + $0x958] sm:$0xff]
    %v390 = vld [vmem:[#allocation5 + $0x960] sm:$0xff]
    %v391 = vld [vmem:[#allocation5 + $0x968] sm:$0xff]
    %v392 = vld [vmem:[#allocation5 + $0x970] sm:$0xff]
    %v393 = vld [vmem:[#allocation5 + $0x978] sm:$0xff]
    %v394 = vld [vmem:[#allocation5 + $0x980] sm:$0xff]
    %v395 = vld [vmem:[#allocation5 + $0x988] sm:$0xff]
    %v396 = vld [vmem:[#allocation5 + $0x990] sm:$0xff]
    %v397 = vld [vmem:[#allocation5 + $0x998] sm:$0xff]
    %v398 = vld [vmem:[#allocation5 + $0x9a0] sm:$0xff]
    %v399 = vld [vmem:[#allocation5 + $0x9a8] sm:$0xff]
    %v400 = vld [vmem:[#allocation5 + $0x9b0] sm:$0xff]
    %v401 = vld [vmem:[#allocation5 + $0x9b8] sm:$0xff]
    %v402 = vld [vmem:[#allocation5 + $0x9c0] sm:$0xff]
    %v403 = vld [vmem:[#allocation5 + $0x9c8] sm:$0xff]
    %v404 = vld [vmem:[#allocation5 + $0x9d0] sm:$0xff]
    %v405 = vld [vmem:[#allocation5 + $0x9d8] sm:$0xff]
    %v406 = vld [vmem:[#allocation5 + $0x9e0] sm:$0xff]
    %v407 = vld [vmem:[#allocation5 + $0x9e8] sm:$0xff]
    %v408 = vld [vmem:[#allocation5 + $0x9f0] sm:$0xff]
    %v409 = vld [vmem:[#allocation5 + $0x9f8] sm:$0xff]
    %v410 = vld [vmem:[#allocation5 + $0xa00] sm:$0xff]
    %v411 = vld [vmem:[#allocation5 + $0xa08] sm:$0xff]
    %v412 = vld [vmem:[#allocation5 + $0xa10] sm:$0xff]
    %v413 = vld [vmem:[#allocation5 + $0xa18] sm:$0xff]
    %v414 = vld [vmem:[#allocation5 + $0xa20] sm:$0xff]
    %v415 = vld [vmem:[#allocation5 + $0xa28] sm:$0xff]
    %v416 = vld [vmem:[#allocation5 + $0xa30] sm:$0xff]
    %v417 = vld [vmem:[#allocation5 + $0xa38] sm:$0xff]
    %v418 = vld [vmem:[#allocation5 + $0xa40] sm:$0xff]
    %v419 = vld [vmem:[#allocation5 + $0xa48] sm:$0xff]
    %v420 = vld [vmem:[#allocation5 + $0xa50] sm:$0xff]
    %v421 = vld [vmem:[#allocation5 + $0xa58] sm:$0xff]
    %v422 = vld [vmem:[#allocation5 + $0xa60] sm:$0xff]
    %v423 = vld [vmem:[#allocation5 + $0xa68] sm:$0xff]
    %v424 = vld [vmem:[#allocation5 + $0xa70] sm:$0xff]
    %v425 = vld [vmem:[#allocation5 + $0xa78] sm:$0xff]
    %v426 = vld [vmem:[#allocation5 + $0xa80] sm:$0xff]
    %v427 = vld [vmem:[#allocation5 + $0xa88] sm:$0xff]
    %v428 = vld [vmem:[#allocation5 + $0xa90] sm:$0xff]
    %v429 = vld [vmem:[#allocation5 + $0xa98] sm:$0xff]
    %v430 = vld [vmem:[#allocation5 + $0xaa0] sm:$0xff]
    %v431 = vld [vmem:[#allocation5 + $0xaa8] sm:$0xff]
    %v432 = vld [vmem:[#allocation5 + $0xab0] sm:$0xff]
    %v433 = vld [vmem:[#allocation5 + $0xab8] sm:$0xff]
    %v434 = vld [vmem:[#allocation5 + $0xac0] sm:$0xff]
    %v435 = vld [vmem:[#allocation5 + $0xac8] sm:$0xff]
    %v436 = vld [vmem:[#allocation5 + $0xad0] sm:$0xff]
    %v437 = vld [vmem:[#allocation5 + $0xad8] sm:$0xff]
    %v438 = vld [vmem:[#allocation5 + $0xae0] sm:$0xff]
    %v439 = vld [vmem:[#allocation5 + $0xae8] sm:$0xff]
    %v440 = vld [vmem:[#allocation5 + $0xaf0] sm:$0xff]
    %v441 = vld [vmem:[#allocation5 + $0xaf8] sm:$0xff]
    %v442 = vld [vmem:[#allocation5 + $0xb00] sm:$0xff]
    %v443 = vld [vmem:[#allocation5 + $0xb08] sm:$0xff]
    %v444 = vld [vmem:[#allocation5 + $0xb10] sm:$0xff]
    %v445 = vld [vmem:[#allocation5 + $0xb18] sm:$0xff]
    %v446 = vld [vmem:[#allocation5 + $0xb20] sm:$0xff]
    %v447 = vld [vmem:[#allocation5 + $0xb28] sm:$0xff]
    %v448 = vld [vmem:[#allocation5 + $0xb30] sm:$0xff]
    %v449 = vld [vmem:[#allocation5 + $0xb38] sm:$0xff]
    %v450 = vld [vmem:[#allocation5 + $0xb40] sm:$0xff]
    %v451 = vld [vmem:[#allocation5 + $0xb48] sm:$0xff]
    %v452 = vld [vmem:[#allocation5 + $0xb50] sm:$0xff]
    %v453 = vld [vmem:[#allocation5 + $0xb58] sm:$0xff]
    %v454 = vld [vmem:[#allocation5 + $0xb60] sm:$0xff]
    %v455 = vld [vmem:[#allocation5 + $0xb68] sm:$0xff]
    %v456 = vld [vmem:[#allocation5 + $0xb70] sm:$0xff]
    %v457 = vld [vmem:[#allocation5 + $0xb78] sm:$0xff]
    %v458 = vld [vmem:[#allocation5 + $0xb80] sm:$0xff]
    %v459 = vld [vmem:[#allocation5 + $0xb88] sm:$0xff]
    %v460 = vld [vmem:[#allocation5 + $0xb90] sm:$0xff]
    %v461 = vld [vmem:[#allocation5 + $0xb98] sm:$0xff]
    %v462 = vld [vmem:[#allocation5 + $0xba0] sm:$0xff]
    %v463 = vld [vmem:[#allocation5 + $0xba8] sm:$0xff]
    %v464 = vld [vmem:[#allocation5 + $0xbb0] sm:$0xff]
    %v465 = vld [vmem:[#allocation5 + $0xbb8] sm:$0xff]
    %v466 = vld [vmem:[#allocation5 + $0xbc0] sm:$0xff]
    %v467 = vld [vmem:[#allocation5 + $0xbc8] sm:$0xff]
    %v468 = vld [vmem:[#allocation5 + $0xbd0] sm:$0xff]
    %v469 = vld [vmem:[#allocation5 + $0xbd8] sm:$0xff]
    %v470 = vld [vmem:[#allocation5 + $0xbe0] sm:$0xff]
    %v471 = vld [vmem:[#allocation5 + $0xbe8] sm:$0xff]
    %v472 = vld [vmem:[#allocation5 + $0xbf0] sm:$0xff]
    %v473 = vld [vmem:[#allocation5 + $0xbf8] sm:$0xff]
    %v474 = vld [vmem:[#allocation5 + $0xc00] sm:$0xff]
    %v475 = vld [vmem:[#allocation5 + $0xc08] sm:$0xff]
    %v476 = vld [vmem:[#allocation5 + $0xc10] sm:$0xff]
    %v477 = vld [vmem:[#allocation5 + $0xc18] sm:$0xff]
    %v478 = vld [vmem:[#allocation5 + $0xc20] sm:$0xff]
    %v479 = vld [vmem:[#allocation5 + $0xc28] sm:$0xff]
    %v480 = vld [vmem:[#allocation5 + $0xc30] sm:$0xff]
    %v481 = vld [vmem:[#allocation5 + $0xc38] sm:$0xff]
    %v482 = vld [vmem:[#allocation5 + $0xc40] sm:$0xff]
    %v483 = vld [vmem:[#allocation5 + $0xc48] sm:$0xff]
    %v484 = vld [vmem:[#allocation5 + $0xc50] sm:$0xff]
    %v485 = vld [vmem:[#allocation5 + $0xc58] sm:$0xff]
    %v486 = vld [vmem:[#allocation5 + $0xc60] sm:$0xff]
    %v487 = vld [vmem:[#allocation5 + $0xc68] sm:$0xff]
    %v488 = vld [vmem:[#allocation5 + $0xc70] sm:$0xff]
    %v489 = vld [vmem:[#allocation5 + $0xc78] sm:$0xff]
    %v490 = vld [vmem:[#allocation5 + $0xc80] sm:$0xff]
    %v491 = vld [vmem:[#allocation5 + $0xc88] sm:$0xff]
    %v492 = vld [vmem:[#allocation5 + $0xc90] sm:$0xff]
    %v493 = vld [vmem:[#allocation5 + $0xc98] sm:$0xff]
    %v494 = vld [vmem:[#allocation5 + $0xca0] sm:$0xff]
    %v495 = vld [vmem:[#allocation5 + $0xca8] sm:$0xff]
    %v496 = vld [vmem:[#allocation5 + $0xcb0] sm:$0xff]
    %v497 = vld [vmem:[#allocation5 + $0xcb8] sm:$0xff]
    %v498 = vld [vmem:[#allocation5 + $0xcc0] sm:$0xff]
    %v499 = vld [vmem:[#allocation5 + $0xcc8] sm:$0xff]
    %v500 = vld [vmem:[#allocation5 + $0xcd0] sm:$0xff]
    %v501 = vld [vmem:[#allocation5 + $0xcd8] sm:$0xff]
    %v502 = vld [vmem:[#allocation5 + $0xce0] sm:$0xff]
    %v503 = vld [vmem:[#allocation5 + $0xce8] sm:$0xff]
    %v504 = vld [vmem:[#allocation5 + $0xcf0] sm:$0xff]
    %v505 = vld [vmem:[#allocation5 + $0xcf8] sm:$0xff]
    %v506 = vld [vmem:[#allocation5 + $0xd00] sm:$0xff]
    %v507 = vld [vmem:[#allocation5 + $0xd08] sm:$0xff]
    %v508 = vld [vmem:[#allocation5 + $0xd10] sm:$0xff]
    %v509 = vld [vmem:[#allocation5 + $0xd18] sm:$0xff]
    %v510 = vld [vmem:[#allocation5 + $0xd20] sm:$0xff]
    %v511 = vld [vmem:[#allocation5 + $0xd28] sm:$0xff]
    %v512 = vld [vmem:[#allocation5 + $0xd30] sm:$0xff]
    %v513 = vld [vmem:[#allocation5 + $0xd38] sm:$0xff]
    %v514 = vld [vmem:[#allocation5 + $0xd40] sm:$0xff]
    %v515 = vld [vmem:[#allocation5 + $0xd48] sm:$0xff]
    %v516 = vld [vmem:[#allocation5 + $0xd50] sm:$0xff]
    %v517 = vld [vmem:[#allocation5 + $0xd58] sm:$0xff]
    %v518 = vld [vmem:[#allocation5 + $0xd60] sm:$0xff]
    %v519 = vld [vmem:[#allocation5 + $0xd68] sm:$0xff]
    %v520 = vld [vmem:[#allocation5 + $0xd70] sm:$0xff]
    %v521 = vld [vmem:[#allocation5 + $0xd78] sm:$0xff]
    %v522 = vld [vmem:[#allocation5 + $0xd80] sm:$0xff]
    %v523 = vld [vmem:[#allocation5 + $0xd88] sm:$0xff]
    %v524 = vld [vmem:[#allocation5 + $0xd90] sm:$0xff]
    %v525 = vld [vmem:[#allocation5 + $0xd98] sm:$0xff]
    %v526 = vld [vmem:[#allocation5 + $0xda0] sm:$0xff]
    %v527 = vld [vmem:[#allocation5 + $0xda8] sm:$0xff]
    %v528 = vld [vmem:[#allocation5 + $0xdb0] sm:$0xff]
    %v529 = vld [vmem:[#allocation5 + $0xdb8] sm:$0xff]
    %v530 = vld [vmem:[#allocation5 + $0xdc0] sm:$0xff]
    %v531 = vld [vmem:[#allocation5 + $0xdc8] sm:$0xff]
    %v532 = vld [vmem:[#allocation5 + $0xdd0] sm:$0xff]
    %v533 = vld [vmem:[#allocation5 + $0xdd8] sm:$0xff]
    %v534 = vld [vmem:[#allocation5 + $0xde0] sm:$0xff]
    %v535 = vld [vmem:[#allocation5 + $0xde8] sm:$0xff]
    %v536 = vld [vmem:[#allocation5 + $0xdf0] sm:$0xff]
    %v537 = vld [vmem:[#allocation5 + $0xdf8] sm:$0xff]
    %v538 = vld [vmem:[#allocation5 + $0xe00] sm:$0xff]
    %v539 = vld [vmem:[#allocation5 + $0xe08] sm:$0xff]
    %v540 = vld [vmem:[#allocation5 + $0xe10] sm:$0xff]
    %v541 = vld [vmem:[#allocation5 + $0xe18] sm:$0xff]
    %v542 = vld [vmem:[#allocation5 + $0xe20] sm:$0xff]
    %v543 = vld [vmem:[#allocation5 + $0xe28] sm:$0xff]
    %v544 = vld [vmem:[#allocation5 + $0xe30] sm:$0xff]
    %v545 = vld [vmem:[#allocation5 + $0xe38] sm:$0xff]
    %v546 = vld [vmem:[#allocation5 + $0xe40] sm:$0xff]
    %v547 = vld [vmem:[#allocation5 + $0xe48] sm:$0xff]
    %v548 = vld [vmem:[#allocation5 + $0xe50] sm:$0xff]
    %v549 = vld [vmem:[#allocation5 + $0xe58] sm:$0xff]
    %v550 = vld [vmem:[#allocation5 + $0xe60] sm:$0xff]
    %v551 = vld [vmem:[#allocation5 + $0xe68] sm:$0xff]
    %v552 = vld [vmem:[#allocation5 + $0xe70] sm:$0xff]
    %v553 = vld [vmem:[#allocation5 + $0xe78] sm:$0xff]
    %v554 = vld [vmem:[#allocation5 + $0xe80] sm:$0xff]
    %v555 = vld [vmem:[#allocation5 + $0xe88] sm:$0xff]
    %v556 = vld [vmem:[#allocation5 + $0xe90] sm:$0xff]
    %v557 = vld [vmem:[#allocation5 + $0xe98] sm:$0xff]
    %v558 = vld [vmem:[#allocation5 + $0xea0] sm:$0xff]
    %v559 = vld [vmem:[#allocation5 + $0xea8] sm:$0xff]
    %v560 = vld [vmem:[#allocation5 + $0xeb0] sm:$0xff]
    %v561 = vld [vmem:[#allocation5 + $0xeb8] sm:$0xff]
    %v562 = vld [vmem:[#allocation5 + $0xec0] sm:$0xff]
    %v563 = vld [vmem:[#allocation5 + $0xec8] sm:$0xff]
    %v564 = vld [vmem:[#allocation5 + $0xed0] sm:$0xff]
    %v565 = vld [vmem:[#allocation5 + $0xed8] sm:$0xff]
    %v566 = vld [vmem:[#allocation5 + $0xee0] sm:$0xff]
    %v567 = vld [vmem:[#allocation5 + $0xee8] sm:$0xff]
    %v568 = vld [vmem:[#allocation5 + $0xef0] sm:$0xff]
    %v569 = vld [vmem:[#allocation5 + $0xef8] sm:$0xff]
    %v570 = vld [vmem:[#allocation5 + $0xf00] sm:$0xff]
    %v571 = vld [vmem:[#allocation5 + $0xf08] sm:$0xff]
    %v572 = vld [vmem:[#allocation5 + $0xf10] sm:$0xff]
    %v573 = vld [vmem:[#allocation5 + $0xf18] sm:$0xff]
    %v574 = vld [vmem:[#allocation5 + $0xf20] sm:$0xff]
    %v575 = vld [vmem:[#allocation5 + $0xf28] sm:$0xff]
    %v576 = vld [vmem:[#allocation5 + $0xf30] sm:$0xff]
    %v577 = vld [vmem:[#allocation5 + $0xf38] sm:$0xff]
    %v578 = vld [vmem:[#allocation5 + $0xf40] sm:$0xff]
    %v579 = vld [vmem:[#allocation5 + $0xf48] sm:$0xff]
    %v580 = vld [vmem:[#allocation5 + $0xf50] sm:$0xff]
    %v581 = vld [vmem:[#allocation5 + $0xf58] sm:$0xff]
    %v582 = vld [vmem:[#allocation5 + $0xf60] sm:$0xff]
    %v583 = vld [vmem:[#allocation5 + $0xf68] sm:$0xff]
    %v584 = vld [vmem:[#allocation5 + $0xf70] sm:$0xff]
    %v585 = vld [vmem:[#allocation5 + $0xf78] sm:$0xff]
    %v586 = vld [vmem:[#allocation5 + $0xf80] sm:$0xff]
    %v587 = vld [vmem:[#allocation5 + $0xf88] sm:$0xff]
    %v588 = vld [vmem:[#allocation5 + $0xf90] sm:$0xff]
    %v589 = vld [vmem:[#allocation5 + $0xf98] sm:$0xff]
    %v590 = vld [vmem:[#allocation5 + $0xfa0] sm:$0xff]
    %v591 = vld [vmem:[#allocation5 + $0xfa8] sm:$0xff]
    %v592 = vld [vmem:[#allocation5 + $0xfb0] sm:$0xff]
    %v593 = vld [vmem:[#allocation5 + $0xfb8] sm:$0xff]
    %v594 = vld [vmem:[#allocation5 + $0xfc0] sm:$0xff]
    %v595 = vld [vmem:[#allocation5 + $0xfc8] sm:$0xff]
    %v596 = vld [vmem:[#allocation5 + $0xfd0] sm:$0xff]
    %v597 = vld [vmem:[#allocation5 + $0xfd8] sm:$0xff]
    %v598 = vld [vmem:[#allocation5 + $0xfe0] sm:$0xff]
    %v599 = vld [vmem:[#allocation5 + $0xfe8] sm:$0xff]
    %v600 = vld [vmem:[#allocation5 + $0xff0] sm:$0xff]
    %v601 = vld [vmem:[#allocation5 + $0xff8] sm:$0xff]
    %v602 = vld [vmem:[#allocation7] sm:$0xff]
    %v604 = vperm.slane %v602, 0
    %v605 = vperm.slane %v602, 1
    %v606 = vperm.slane %v602, 2
    %v607 = vperm.slane %v602, 3
    %v608 = vperm.slane %v602, 4
    %v609 = vperm.slane %v602, 5
    %v610 = vperm.slane %v602, 6
    %v611 = vperm.slane %v602, 7
    %v1132 = vunpack.c.l.b16 %v90
    %v1133 = vunpack.c.h.b16 %v90
    %v1134 = vunpack.c.l.b16 %v91
    %v1135 = vunpack.c.h.b16 %v91
    %v1136 = vunpack.c.l.b16 %v92
    %v1137 = vunpack.c.h.b16 %v92
    %v1138 = vunpack.c.l.b16 %v93
    %v1139 = vunpack.c.h.b16 %v93
    %v1140 = vunpack.c.l.b16 %v94
    %v1141 = vunpack.c.h.b16 %v94
    %v1142 = vunpack.c.l.b16 %v95
    %v1143 = vunpack.c.h.b16 %v95
    %v1144 = vunpack.c.l.b16 %v96
    %v1145 = vunpack.c.h.b16 %v96
    %v1146 = vunpack.c.l.b16 %v97
    %v1147 = vunpack.c.h.b16 %v97
    %v1148 = vunpack.c.l.b16 %v98
    %v1149 = vunpack.c.h.b16 %v98
    %v1150 = vunpack.c.l.b16 %v99
    %v1151 = vunpack.c.h.b16 %v99
    %v1152 = vunpack.c.l.b16 %v100
    %v1153 = vunpack.c.h.b16 %v100
    %v1154 = vunpack.c.l.b16 %v101
    %v1155 = vunpack.c.h.b16 %v101
    %v1156 = vunpack.c.l.b16 %v102
    %v1157 = vunpack.c.h.b16 %v102
    %v1158 = vunpack.c.l.b16 %v103
    %v1159 = vunpack.c.h.b16 %v103
    %v1160 = vunpack.c.l.b16 %v104
    %v1161 = vunpack.c.h.b16 %v104
    %v1162 = vunpack.c.l.b16 %v105
    %v1163 = vunpack.c.h.b16 %v105
    %v1164 = vunpack.c.l.b16 %v106
    %v1165 = vunpack.c.h.b16 %v106
    %v1166 = vunpack.c.l.b16 %v107
    %v1167 = vunpack.c.h.b16 %v107
    %v1168 = vunpack.c.l.b16 %v108
    %v1169 = vunpack.c.h.b16 %v108
    %v1170 = vunpack.c.l.b16 %v109
    %v1171 = vunpack.c.h.b16 %v109
    %v1172 = vunpack.c.l.b16 %v110
    %v1173 = vunpack.c.h.b16 %v110
    %v1174 = vunpack.c.l.b16 %v111
    %v1175 = vunpack.c.h.b16 %v111
    %v1176 = vunpack.c.l.b16 %v112
    %v1177 = vunpack.c.h.b16 %v112
    %v1178 = vunpack.c.l.b16 %v113
    %v1179 = vunpack.c.h.b16 %v113
    %v1180 = vunpack.c.l.b16 %v114
    %v1181 = vunpack.c.h.b16 %v114
    %v1182 = vunpack.c.l.b16 %v115
    %v1183 = vunpack.c.h.b16 %v115
    %v1184 = vunpack.c.l.b16 %v116
    %v1185 = vunpack.c.h.b16 %v116
    %v1186 = vunpack.c.l.b16 %v117
    %v1187 = vunpack.c.h.b16 %v117
    %v1188 = vunpack.c.l.b16 %v118
    %v1189 = vunpack.c.h.b16 %v118
    %v1190 = vunpack.c.l.b16 %v119
    %v1191 = vunpack.c.h.b16 %v119
    %v1192 = vunpack.c.l.b16 %v120
    %v1193 = vunpack.c.h.b16 %v120
    %v1194 = vunpack.c.l.b16 %v121
    %v1195 = vunpack.c.h.b16 %v121
    %v1196 = vunpack.c.l.b16 %v122
    %v1197 = vunpack.c.h.b16 %v122
    %v1198 = vunpack.c.l.b16 %v123
    %v1199 = vunpack.c.h.b16 %v123
    %v1200 = vunpack.c.l.b16 %v124
    %v1201 = vunpack.c.h.b16 %v124
    %v1202 = vunpack.c.l.b16 %v125
    %v1203 = vunpack.c.h.b16 %v125
    %v1204 = vunpack.c.l.b16 %v126
    %v1205 = vunpack.c.h.b16 %v126
    %v1206 = vunpack.c.l.b16 %v127
    %v1207 = vunpack.c.h.b16 %v127
    %v1208 = vunpack.c.l.b16 %v128
    %v1209 = vunpack.c.h.b16 %v128
    %v1210 = vunpack.c.l.b16 %v129
    %v1211 = vunpack.c.h.b16 %v129
    %v1212 = vunpack.c.l.b16 %v130
    %v1213 = vunpack.c.h.b16 %v130
    %v1214 = vunpack.c.l.b16 %v131
    %v1215 = vunpack.c.h.b16 %v131
    %v1216 = vunpack.c.l.b16 %v132
    %v1217 = vunpack.c.h.b16 %v132
    %v1218 = vunpack.c.l.b16 %v133
    %v1219 = vunpack.c.h.b16 %v133
    %v1220 = vunpack.c.l.b16 %v134
    %v1221 = vunpack.c.h.b16 %v134
    %v1222 = vunpack.c.l.b16 %v135
    %v1223 = vunpack.c.h.b16 %v135
    %v1224 = vunpack.c.l.b16 %v136
    %v1225 = vunpack.c.h.b16 %v136
    %v1226 = vunpack.c.l.b16 %v137
    %v1227 = vunpack.c.h.b16 %v137
    %v1228 = vunpack.c.l.b16 %v138
    %v1229 = vunpack.c.h.b16 %v138
    %v1230 = vunpack.c.l.b16 %v139
    %v1231 = vunpack.c.h.b16 %v139
    %v1232 = vunpack.c.l.b16 %v140
    %v1233 = vunpack.c.h.b16 %v140
    %v1234 = vunpack.c.l.b16 %v141
    %v1235 = vunpack.c.h.b16 %v141
    %v1236 = vunpack.c.l.b16 %v142
    %v1237 = vunpack.c.h.b16 %v142
    %v1238 = vunpack.c.l.b16 %v143
    %v1239 = vunpack.c.h.b16 %v143
    %v1240 = vunpack.c.l.b16 %v144
    %v1241 = vunpack.c.h.b16 %v144
    %v1242 = vunpack.c.l.b16 %v145
    %v1243 = vunpack.c.h.b16 %v145
    %v1244 = vunpack.c.l.b16 %v146
    %v1245 = vunpack.c.h.b16 %v146
    %v1246 = vunpack.c.l.b16 %v147
    %v1247 = vunpack.c.h.b16 %v147
    %v1248 = vunpack.c.l.b16 %v148
    %v1249 = vunpack.c.h.b16 %v148
    %v1250 = vunpack.c.l.b16 %v149
    %v1251 = vunpack.c.h.b16 %v149
    %v1252 = vunpack.c.l.b16 %v150
    %v1253 = vunpack.c.h.b16 %v150
    %v1254 = vunpack.c.l.b16 %v151
    %v1255 = vunpack.c.h.b16 %v151
    %v1256 = vunpack.c.l.b16 %v152
    %v1257 = vunpack.c.h.b16 %v152
    %v1258 = vunpack.c.l.b16 %v153
    %v1259 = vunpack.c.h.b16 %v153
    %v1260 = vunpack.c.l.b16 %v154
    %v1261 = vunpack.c.h.b16 %v154
    %v1262 = vunpack.c.l.b16 %v155
    %v1263 = vunpack.c.h.b16 %v155
    %v1264 = vunpack.c.l.b16 %v156
    %v1265 = vunpack.c.h.b16 %v156
    %v1266 = vunpack.c.l.b16 %v157
    %v1267 = vunpack.c.h.b16 %v157
    %v1268 = vunpack.c.l.b16 %v158
    %v1269 = vunpack.c.h.b16 %v158
    %v1270 = vunpack.c.l.b16 %v159
    %v1271 = vunpack.c.h.b16 %v159
    %v1272 = vunpack.c.l.b16 %v160
    %v1273 = vunpack.c.h.b16 %v160
    %v1274 = vunpack.c.l.b16 %v161
    %v1275 = vunpack.c.h.b16 %v161
    %v1276 = vunpack.c.l.b16 %v162
    %v1277 = vunpack.c.h.b16 %v162
    %v1278 = vunpack.c.l.b16 %v163
    %v1279 = vunpack.c.h.b16 %v163
    %v1280 = vunpack.c.l.b16 %v164
    %v1281 = vunpack.c.h.b16 %v164
    %v1282 = vunpack.c.l.b16 %v165
    %v1283 = vunpack.c.h.b16 %v165
    %v1284 = vunpack.c.l.b16 %v166
    %v1285 = vunpack.c.h.b16 %v166
    %v1286 = vunpack.c.l.b16 %v167
    %v1287 = vunpack.c.h.b16 %v167
    %v1288 = vunpack.c.l.b16 %v168
    %v1289 = vunpack.c.h.b16 %v168
    %v1290 = vunpack.c.l.b16 %v169
    %v1291 = vunpack.c.h.b16 %v169
    %v1292 = vunpack.c.l.b16 %v170
    %v1293 = vunpack.c.h.b16 %v170
    %v1294 = vunpack.c.l.b16 %v171
    %v1295 = vunpack.c.h.b16 %v171
    %v1296 = vunpack.c.l.b16 %v172
    %v1297 = vunpack.c.h.b16 %v172
    %v1298 = vunpack.c.l.b16 %v173
    %v1299 = vunpack.c.h.b16 %v173
    %v1300 = vunpack.c.l.b16 %v174
    %v1301 = vunpack.c.h.b16 %v174
    %v1302 = vunpack.c.l.b16 %v175
    %v1303 = vunpack.c.h.b16 %v175
    %v1304 = vunpack.c.l.b16 %v176
    %v1305 = vunpack.c.h.b16 %v176
    %v1306 = vunpack.c.l.b16 %v177
    %v1307 = vunpack.c.h.b16 %v177
    %v1308 = vunpack.c.l.b16 %v178
    %v1309 = vunpack.c.h.b16 %v178
    %v1310 = vunpack.c.l.b16 %v179
    %v1311 = vunpack.c.h.b16 %v179
    %v1312 = vunpack.c.l.b16 %v180
    %v1313 = vunpack.c.h.b16 %v180
    %v1314 = vunpack.c.l.b16 %v181
    %v1315 = vunpack.c.h.b16 %v181
    %v1316 = vunpack.c.l.b16 %v182
    %v1317 = vunpack.c.h.b16 %v182
    %v1318 = vunpack.c.l.b16 %v183
    %v1319 = vunpack.c.h.b16 %v183
    %v1320 = vunpack.c.l.b16 %v184
    %v1321 = vunpack.c.h.b16 %v184
    %v1322 = vunpack.c.l.b16 %v185
    %v1323 = vunpack.c.h.b16 %v185
    %v1324 = vunpack.c.l.b16 %v186
    %v1325 = vunpack.c.h.b16 %v186
    %v1326 = vunpack.c.l.b16 %v187
    %v1327 = vunpack.c.h.b16 %v187
    %v1328 = vunpack.c.l.b16 %v188
    %v1329 = vunpack.c.h.b16 %v188
    %v1330 = vunpack.c.l.b16 %v189
    %v1331 = vunpack.c.h.b16 %v189
    %v1332 = vunpack.c.l.b16 %v190
    %v1333 = vunpack.c.h.b16 %v190
    %v1334 = vunpack.c.l.b16 %v191
    %v1335 = vunpack.c.h.b16 %v191
    %v1336 = vunpack.c.l.b16 %v192
    %v1337 = vunpack.c.h.b16 %v192
    %v1338 = vunpack.c.l.b16 %v193
    %v1339 = vunpack.c.h.b16 %v193
    %v1340 = vunpack.c.l.b16 %v194
    %v1341 = vunpack.c.h.b16 %v194
    %v1342 = vunpack.c.l.b16 %v195
    %v1343 = vunpack.c.h.b16 %v195
    %v1344 = vunpack.c.l.b16 %v196
    %v1345 = vunpack.c.h.b16 %v196
    %v1346 = vunpack.c.l.b16 %v197
    %v1347 = vunpack.c.h.b16 %v197
    %v1348 = vunpack.c.l.b16 %v198
    %v1349 = vunpack.c.h.b16 %v198
    %v1350 = vunpack.c.l.b16 %v199
    %v1351 = vunpack.c.h.b16 %v199
    %v1352 = vunpack.c.l.b16 %v200
    %v1353 = vunpack.c.h.b16 %v200
    %v1354 = vunpack.c.l.b16 %v201
    %v1355 = vunpack.c.h.b16 %v201
    %v1356 = vunpack.c.l.b16 %v202
    %v1357 = vunpack.c.h.b16 %v202
    %v1358 = vunpack.c.l.b16 %v203
    %v1359 = vunpack.c.h.b16 %v203
    %v1360 = vunpack.c.l.b16 %v204
    %v1361 = vunpack.c.h.b16 %v204
    %v1362 = vunpack.c.l.b16 %v205
    %v1363 = vunpack.c.h.b16 %v205
    %v1364 = vunpack.c.l.b16 %v206
    %v1365 = vunpack.c.h.b16 %v206
    %v1366 = vunpack.c.l.b16 %v207
    %v1367 = vunpack.c.h.b16 %v207
    %v1368 = vunpack.c.l.b16 %v208
    %v1369 = vunpack.c.h.b16 %v208
    %v1370 = vunpack.c.l.b16 %v209
    %v1371 = vunpack.c.h.b16 %v209
    %v1372 = vunpack.c.l.b16 %v210
    %v1373 = vunpack.c.h.b16 %v210
    %v1374 = vunpack.c.l.b16 %v211
    %v1375 = vunpack.c.h.b16 %v211
    %v1376 = vunpack.c.l.b16 %v212
    %v1377 = vunpack.c.h.b16 %v212
    %v1378 = vunpack.c.l.b16 %v213
    %v1379 = vunpack.c.h.b16 %v213
    %v1380 = vunpack.c.l.b16 %v214
    %v1381 = vunpack.c.h.b16 %v214
    %v1382 = vunpack.c.l.b16 %v215
    %v1383 = vunpack.c.h.b16 %v215
    %v1384 = vunpack.c.l.b16 %v216
    %v1385 = vunpack.c.h.b16 %v216
    %v1386 = vunpack.c.l.b16 %v217
    %v1387 = vunpack.c.h.b16 %v217
    %v1388 = vunpack.c.l.b16 %v218
    %v1389 = vunpack.c.h.b16 %v218
    %v1390 = vunpack.c.l.b16 %v219
    %v1391 = vunpack.c.h.b16 %v219
    %v1392 = vunpack.c.l.b16 %v220
    %v1393 = vunpack.c.h.b16 %v220
    %v1394 = vunpack.c.l.b16 %v221
    %v1395 = vunpack.c.h.b16 %v221
    %v1396 = vunpack.c.l.b16 %v222
    %v1397 = vunpack.c.h.b16 %v222
    %v1398 = vunpack.c.l.b16 %v223
    %v1399 = vunpack.c.h.b16 %v223
    %v1400 = vunpack.c.l.b16 %v224
    %v1401 = vunpack.c.h.b16 %v224
    %v1402 = vunpack.c.l.b16 %v225
    %v1403 = vunpack.c.h.b16 %v225
    %v1404 = vunpack.c.l.b16 %v226
    %v1405 = vunpack.c.h.b16 %v226
    %v1406 = vunpack.c.l.b16 %v227
    %v1407 = vunpack.c.h.b16 %v227
    %v1408 = vunpack.c.l.b16 %v228
    %v1409 = vunpack.c.h.b16 %v228
    %v1410 = vunpack.c.l.b16 %v229
    %v1411 = vunpack.c.h.b16 %v229
    %v1412 = vunpack.c.l.b16 %v230
    %v1413 = vunpack.c.h.b16 %v230
    %v1414 = vunpack.c.l.b16 %v231
    %v1415 = vunpack.c.h.b16 %v231
    %v1416 = vunpack.c.l.b16 %v232
    %v1417 = vunpack.c.h.b16 %v232
    %v1418 = vunpack.c.l.b16 %v233
    %v1419 = vunpack.c.h.b16 %v233
    %v1420 = vunpack.c.l.b16 %v234
    %v1421 = vunpack.c.h.b16 %v234
    %v1422 = vunpack.c.l.b16 %v235
    %v1423 = vunpack.c.h.b16 %v235
    %v1424 = vunpack.c.l.b16 %v236
    %v1425 = vunpack.c.h.b16 %v236
    %v1426 = vunpack.c.l.b16 %v237
    %v1427 = vunpack.c.h.b16 %v237
    %v1428 = vunpack.c.l.b16 %v238
    %v1429 = vunpack.c.h.b16 %v238
    %v1430 = vunpack.c.l.b16 %v239
    %v1431 = vunpack.c.h.b16 %v239
    %v1432 = vunpack.c.l.b16 %v240
    %v1433 = vunpack.c.h.b16 %v240
    %v1434 = vunpack.c.l.b16 %v241
    %v1435 = vunpack.c.h.b16 %v241
    %v1436 = vunpack.c.l.b16 %v242
    %v1437 = vunpack.c.h.b16 %v242
    %v1438 = vunpack.c.l.b16 %v243
    %v1439 = vunpack.c.h.b16 %v243
    %v1440 = vunpack.c.l.b16 %v244
    %v1441 = vunpack.c.h.b16 %v244
    %v1442 = vunpack.c.l.b16 %v245
    %v1443 = vunpack.c.h.b16 %v245
    %v1444 = vunpack.c.l.b16 %v246
    %v1445 = vunpack.c.h.b16 %v246
    %v1446 = vunpack.c.l.b16 %v247
    %v1447 = vunpack.c.h.b16 %v247
    %v1448 = vunpack.c.l.b16 %v248
    %v1449 = vunpack.c.h.b16 %v248
    %v1450 = vunpack.c.l.b16 %v249
    %v1451 = vunpack.c.h.b16 %v249
    %v1452 = vunpack.c.l.b16 %v250
    %v1453 = vunpack.c.h.b16 %v250
    %v1454 = vunpack.c.l.b16 %v251
    %v1455 = vunpack.c.h.b16 %v251
    %v1456 = vunpack.c.l.b16 %v252
    %v1457 = vunpack.c.h.b16 %v252
    %v1458 = vunpack.c.l.b16 %v253
    %v1459 = vunpack.c.h.b16 %v253
    %v1460 = vunpack.c.l.b16 %v254
    %v1461 = vunpack.c.h.b16 %v254
    %v1462 = vunpack.c.l.b16 %v255
    %v1463 = vunpack.c.h.b16 %v255
    %v1464 = vunpack.c.l.b16 %v256
    %v1465 = vunpack.c.h.b16 %v256
    %v1466 = vunpack.c.l.b16 %v257
    %v1467 = vunpack.c.h.b16 %v257
    %v1468 = vunpack.c.l.b16 %v258
    %v1469 = vunpack.c.h.b16 %v258
    %v1470 = vunpack.c.l.b16 %v259
    %v1471 = vunpack.c.h.b16 %v259
    %v1472 = vunpack.c.l.b16 %v260
    %v1473 = vunpack.c.h.b16 %v260
    %v1474 = vunpack.c.l.b16 %v261
    %v1475 = vunpack.c.h.b16 %v261
    %v1476 = vunpack.c.l.b16 %v262
    %v1477 = vunpack.c.h.b16 %v262
    %v1478 = vunpack.c.l.b16 %v263
    %v1479 = vunpack.c.h.b16 %v263
    %v1480 = vunpack.c.l.b16 %v264
    %v1481 = vunpack.c.h.b16 %v264
    %v1482 = vunpack.c.l.b16 %v265
    %v1483 = vunpack.c.h.b16 %v265
    %v1484 = vunpack.c.l.b16 %v266
    %v1485 = vunpack.c.h.b16 %v266
    %v1486 = vunpack.c.l.b16 %v267
    %v1487 = vunpack.c.h.b16 %v267
    %v1488 = vunpack.c.l.b16 %v268
    %v1489 = vunpack.c.h.b16 %v268
    %v1490 = vunpack.c.l.b16 %v269
    %v1491 = vunpack.c.h.b16 %v269
    %v1492 = vunpack.c.l.b16 %v270
    %v1493 = vunpack.c.h.b16 %v270
    %v1494 = vunpack.c.l.b16 %v271
    %v1495 = vunpack.c.h.b16 %v271
    %v1496 = vunpack.c.l.b16 %v272
    %v1497 = vunpack.c.h.b16 %v272
    %v1498 = vunpack.c.l.b16 %v273
    %v1499 = vunpack.c.h.b16 %v273
    %v1500 = vunpack.c.l.b16 %v274
    %v1501 = vunpack.c.h.b16 %v274
    %v1502 = vunpack.c.l.b16 %v275
    %v1503 = vunpack.c.h.b16 %v275
    %v1504 = vunpack.c.l.b16 %v276
    %v1505 = vunpack.c.h.b16 %v276
    %v1506 = vunpack.c.l.b16 %v277
    %v1507 = vunpack.c.h.b16 %v277
    %v1508 = vunpack.c.l.b16 %v278
    %v1509 = vunpack.c.h.b16 %v278
    %v1510 = vunpack.c.l.b16 %v279
    %v1511 = vunpack.c.h.b16 %v279
    %v1512 = vunpack.c.l.b16 %v280
    %v1513 = vunpack.c.h.b16 %v280
    %v1514 = vunpack.c.l.b16 %v281
    %v1515 = vunpack.c.h.b16 %v281
    %v1516 = vunpack.c.l.b16 %v282
    %v1517 = vunpack.c.h.b16 %v282
    %v1518 = vunpack.c.l.b16 %v283
    %v1519 = vunpack.c.h.b16 %v283
    %v1520 = vunpack.c.l.b16 %v284
    %v1521 = vunpack.c.h.b16 %v284
    %v1522 = vunpack.c.l.b16 %v285
    %v1523 = vunpack.c.h.b16 %v285
    %v1524 = vunpack.c.l.b16 %v286
    %v1525 = vunpack.c.h.b16 %v286
    %v1526 = vunpack.c.l.b16 %v287
    %v1527 = vunpack.c.h.b16 %v287
    %v1528 = vunpack.c.l.b16 %v288
    %v1529 = vunpack.c.h.b16 %v288
    %v1530 = vunpack.c.l.b16 %v289
    %v1531 = vunpack.c.h.b16 %v289
    %v1532 = vunpack.c.l.b16 %v290
    %v1533 = vunpack.c.h.b16 %v290
    %v1534 = vunpack.c.l.b16 %v291
    %v1535 = vunpack.c.h.b16 %v291
    %v1536 = vunpack.c.l.b16 %v292
    %v1537 = vunpack.c.h.b16 %v292
    %v1538 = vunpack.c.l.b16 %v293
    %v1539 = vunpack.c.h.b16 %v293
    %v1540 = vunpack.c.l.b16 %v294
    %v1541 = vunpack.c.h.b16 %v294
    %v1542 = vunpack.c.l.b16 %v295
    %v1543 = vunpack.c.h.b16 %v295
    %v1544 = vunpack.c.l.b16 %v296
    %v1545 = vunpack.c.h.b16 %v296
    %v1546 = vunpack.c.l.b16 %v297
    %v1547 = vunpack.c.h.b16 %v297
    %v1548 = vunpack.c.l.b16 %v298
    %v1549 = vunpack.c.h.b16 %v298
    %v1550 = vunpack.c.l.b16 %v299
    %v1551 = vunpack.c.h.b16 %v299
    %v1552 = vunpack.c.l.b16 %v300
    %v1553 = vunpack.c.h.b16 %v300
    %v1554 = vunpack.c.l.b16 %v301
    %v1555 = vunpack.c.h.b16 %v301
    %v1556 = vunpack.c.l.b16 %v302
    %v1557 = vunpack.c.h.b16 %v302
    %v1558 = vunpack.c.l.b16 %v303
    %v1559 = vunpack.c.h.b16 %v303
    %v1560 = vunpack.c.l.b16 %v304
    %v1561 = vunpack.c.h.b16 %v304
    %v1562 = vunpack.c.l.b16 %v305
    %v1563 = vunpack.c.h.b16 %v305
    %v1564 = vunpack.c.l.b16 %v306
    %v1565 = vunpack.c.h.b16 %v306
    %v1566 = vunpack.c.l.b16 %v307
    %v1567 = vunpack.c.h.b16 %v307
    %v1568 = vunpack.c.l.b16 %v308
    %v1569 = vunpack.c.h.b16 %v308
    %v1570 = vunpack.c.l.b16 %v309
    %v1571 = vunpack.c.h.b16 %v309
    %v1572 = vunpack.c.l.b16 %v310
    %v1573 = vunpack.c.h.b16 %v310
    %v1574 = vunpack.c.l.b16 %v311
    %v1575 = vunpack.c.h.b16 %v311
    %v1576 = vunpack.c.l.b16 %v312
    %v1577 = vunpack.c.h.b16 %v312
    %v1578 = vunpack.c.l.b16 %v313
    %v1579 = vunpack.c.h.b16 %v313
    %v1580 = vunpack.c.l.b16 %v314
    %v1581 = vunpack.c.h.b16 %v314
    %v1582 = vunpack.c.l.b16 %v315
    %v1583 = vunpack.c.h.b16 %v315
    %v1584 = vunpack.c.l.b16 %v316
    %v1585 = vunpack.c.h.b16 %v316
    %v1586 = vunpack.c.l.b16 %v317
    %v1587 = vunpack.c.h.b16 %v317
    %v1588 = vunpack.c.l.b16 %v318
    %v1589 = vunpack.c.h.b16 %v318
    %v1590 = vunpack.c.l.b16 %v319
    %v1591 = vunpack.c.h.b16 %v319
    %v1592 = vunpack.c.l.b16 %v320
    %v1593 = vunpack.c.h.b16 %v320
    %v1594 = vunpack.c.l.b16 %v321
    %v1595 = vunpack.c.h.b16 %v321
    %v1596 = vunpack.c.l.b16 %v322
    %v1597 = vunpack.c.h.b16 %v322
    %v1598 = vunpack.c.l.b16 %v323
    %v1599 = vunpack.c.h.b16 %v323
    %v1600 = vunpack.c.l.b16 %v324
    %v1601 = vunpack.c.h.b16 %v324
    %v1602 = vunpack.c.l.b16 %v325
    %v1603 = vunpack.c.h.b16 %v325
    %v1604 = vunpack.c.l.b16 %v326
    %v1605 = vunpack.c.h.b16 %v326
    %v1606 = vunpack.c.l.b16 %v327
    %v1607 = vunpack.c.h.b16 %v327
    %v1608 = vunpack.c.l.b16 %v328
    %v1609 = vunpack.c.h.b16 %v328
    %v1610 = vunpack.c.l.b16 %v329
    %v1611 = vunpack.c.h.b16 %v329
    %v1612 = vunpack.c.l.b16 %v330
    %v1613 = vunpack.c.h.b16 %v330
    %v1614 = vunpack.c.l.b16 %v331
    %v1615 = vunpack.c.h.b16 %v331
    %v1616 = vunpack.c.l.b16 %v332
    %v1617 = vunpack.c.h.b16 %v332
    %v1618 = vunpack.c.l.b16 %v333
    %v1619 = vunpack.c.h.b16 %v333
    %v1620 = vunpack.c.l.b16 %v334
    %v1621 = vunpack.c.h.b16 %v334
    %v1622 = vunpack.c.l.b16 %v335
    %v1623 = vunpack.c.h.b16 %v335
    %v1624 = vunpack.c.l.b16 %v336
    %v1625 = vunpack.c.h.b16 %v336
    %v1626 = vunpack.c.l.b16 %v337
    %v1627 = vunpack.c.h.b16 %v337
    %v1628 = vunpack.c.l.b16 %v338
    %v1629 = vunpack.c.h.b16 %v338
    %v1630 = vunpack.c.l.b16 %v339
    %v1631 = vunpack.c.h.b16 %v339
    %v1632 = vunpack.c.l.b16 %v340
    %v1633 = vunpack.c.h.b16 %v340
    %v1634 = vunpack.c.l.b16 %v341
    %v1635 = vunpack.c.h.b16 %v341
    %v1636 = vunpack.c.l.b16 %v342
    %v1637 = vunpack.c.h.b16 %v342
    %v1638 = vunpack.c.l.b16 %v343
    %v1639 = vunpack.c.h.b16 %v343
    %v1640 = vunpack.c.l.b16 %v344
    %v1641 = vunpack.c.h.b16 %v344
    %v1642 = vunpack.c.l.b16 %v345
    %v1643 = vunpack.c.h.b16 %v345
    %v1644 = vunpack.c.l.b16 %v346
    %v1645 = vunpack.c.h.b16 %v346
    %v1646 = vunpack.c.l.b16 %v347
    %v1647 = vunpack.c.h.b16 %v347
    %v1648 = vunpack.c.l.b16 %v348
    %v1649 = vunpack.c.h.b16 %v348
    %v1650 = vunpack.c.l.b16 %v349
    %v1651 = vunpack.c.h.b16 %v349
    %v1652 = vunpack.c.l.b16 %v350
    %v1653 = vunpack.c.h.b16 %v350
    %v1654 = vunpack.c.l.b16 %v351
    %v1655 = vunpack.c.h.b16 %v351
    %v1656 = vunpack.c.l.b16 %v352
    %v1657 = vunpack.c.h.b16 %v352
    %v1658 = vunpack.c.l.b16 %v353
    %v1659 = vunpack.c.h.b16 %v353
    %v1660 = vunpack.c.l.b16 %v354
    %v1661 = vunpack.c.h.b16 %v354
    %v1662 = vunpack.c.l.b16 %v355
    %v1663 = vunpack.c.h.b16 %v355
    %v1664 = vunpack.c.l.b16 %v356
    %v1665 = vunpack.c.h.b16 %v356
    %v1666 = vunpack.c.l.b16 %v357
    %v1667 = vunpack.c.h.b16 %v357
    %v1668 = vunpack.c.l.b16 %v358
    %v1669 = vunpack.c.h.b16 %v358
    %v1670 = vunpack.c.l.b16 %v359
    %v1671 = vunpack.c.h.b16 %v359
    %v1672 = vunpack.c.l.b16 %v360
    %v1673 = vunpack.c.h.b16 %v360
    %v1674 = vunpack.c.l.b16 %v361
    %v1675 = vunpack.c.h.b16 %v361
    %v1676 = vunpack.c.l.b16 %v362
    %v1677 = vunpack.c.h.b16 %v362
    %v1678 = vunpack.c.l.b16 %v363
    %v1679 = vunpack.c.h.b16 %v363
    %v1680 = vunpack.c.l.b16 %v364
    %v1681 = vunpack.c.h.b16 %v364
    %v1682 = vunpack.c.l.b16 %v365
    %v1683 = vunpack.c.h.b16 %v365
    %v1684 = vunpack.c.l.b16 %v366
    %v1685 = vunpack.c.h.b16 %v366
    %v1686 = vunpack.c.l.b16 %v367
    %v1687 = vunpack.c.h.b16 %v367
    %v1688 = vunpack.c.l.b16 %v368
    %v1689 = vunpack.c.h.b16 %v368
    %v1690 = vunpack.c.l.b16 %v369
    %v1691 = vunpack.c.h.b16 %v369
    %v1692 = vunpack.c.l.b16 %v370
    %v1693 = vunpack.c.h.b16 %v370
    %v1694 = vunpack.c.l.b16 %v371
    %v1695 = vunpack.c.h.b16 %v371
    %v1696 = vunpack.c.l.b16 %v372
    %v1697 = vunpack.c.h.b16 %v372
    %v1698 = vunpack.c.l.b16 %v373
    %v1699 = vunpack.c.h.b16 %v373
    %v1700 = vunpack.c.l.b16 %v374
    %v1701 = vunpack.c.h.b16 %v374
    %v1702 = vunpack.c.l.b16 %v375
    %v1703 = vunpack.c.h.b16 %v375
    %v1704 = vunpack.c.l.b16 %v376
    %v1705 = vunpack.c.h.b16 %v376
    %v1706 = vunpack.c.l.b16 %v377
    %v1707 = vunpack.c.h.b16 %v377
    %v1708 = vunpack.c.l.b16 %v378
    %v1709 = vunpack.c.h.b16 %v378
    %v1710 = vunpack.c.l.b16 %v379
    %v1711 = vunpack.c.h.b16 %v379
    %v1712 = vunpack.c.l.b16 %v380
    %v1713 = vunpack.c.h.b16 %v380
    %v1714 = vunpack.c.l.b16 %v381
    %v1715 = vunpack.c.h.b16 %v381
    %v1716 = vunpack.c.l.b16 %v382
    %v1717 = vunpack.c.h.b16 %v382
    %v1718 = vunpack.c.l.b16 %v383
    %v1719 = vunpack.c.h.b16 %v383
    %v1720 = vunpack.c.l.b16 %v384
    %v1721 = vunpack.c.h.b16 %v384
    %v1722 = vunpack.c.l.b16 %v385
    %v1723 = vunpack.c.h.b16 %v385
    %v1724 = vunpack.c.l.b16 %v386
    %v1725 = vunpack.c.h.b16 %v386
    %v1726 = vunpack.c.l.b16 %v387
    %v1727 = vunpack.c.h.b16 %v387
    %v1728 = vunpack.c.l.b16 %v388
    %v1729 = vunpack.c.h.b16 %v388
    %v1730 = vunpack.c.l.b16 %v389
    %v1731 = vunpack.c.h.b16 %v389
    %v1732 = vunpack.c.l.b16 %v390
    %v1733 = vunpack.c.h.b16 %v390
    %v1734 = vunpack.c.l.b16 %v391
    %v1735 = vunpack.c.h.b16 %v391
    %v1736 = vunpack.c.l.b16 %v392
    %v1737 = vunpack.c.h.b16 %v392
    %v1738 = vunpack.c.l.b16 %v393
    %v1739 = vunpack.c.h.b16 %v393
    %v1740 = vunpack.c.l.b16 %v394
    %v1741 = vunpack.c.h.b16 %v394
    %v1742 = vunpack.c.l.b16 %v395
    %v1743 = vunpack.c.h.b16 %v395
    %v1744 = vunpack.c.l.b16 %v396
    %v1745 = vunpack.c.h.b16 %v396
    %v1746 = vunpack.c.l.b16 %v397
    %v1747 = vunpack.c.h.b16 %v397
    %v1748 = vunpack.c.l.b16 %v398
    %v1749 = vunpack.c.h.b16 %v398
    %v1750 = vunpack.c.l.b16 %v399
    %v1751 = vunpack.c.h.b16 %v399
    %v1752 = vunpack.c.l.b16 %v400
    %v1753 = vunpack.c.h.b16 %v400
    %v1754 = vunpack.c.l.b16 %v401
    %v1755 = vunpack.c.h.b16 %v401
    %v1756 = vunpack.c.l.b16 %v402
    %v1757 = vunpack.c.h.b16 %v402
    %v1758 = vunpack.c.l.b16 %v403
    %v1759 = vunpack.c.h.b16 %v403
    %v1760 = vunpack.c.l.b16 %v404
    %v1761 = vunpack.c.h.b16 %v404
    %v1762 = vunpack.c.l.b16 %v405
    %v1763 = vunpack.c.h.b16 %v405
    %v1764 = vunpack.c.l.b16 %v406
    %v1765 = vunpack.c.h.b16 %v406
    %v1766 = vunpack.c.l.b16 %v407
    %v1767 = vunpack.c.h.b16 %v407
    %v1768 = vunpack.c.l.b16 %v408
    %v1769 = vunpack.c.h.b16 %v408
    %v1770 = vunpack.c.l.b16 %v409
    %v1771 = vunpack.c.h.b16 %v409
    %v1772 = vunpack.c.l.b16 %v410
    %v1773 = vunpack.c.h.b16 %v410
    %v1774 = vunpack.c.l.b16 %v411
    %v1775 = vunpack.c.h.b16 %v411
    %v1776 = vunpack.c.l.b16 %v412
    %v1777 = vunpack.c.h.b16 %v412
    %v1778 = vunpack.c.l.b16 %v413
    %v1779 = vunpack.c.h.b16 %v413
    %v1780 = vunpack.c.l.b16 %v414
    %v1781 = vunpack.c.h.b16 %v414
    %v1782 = vunpack.c.l.b16 %v415
    %v1783 = vunpack.c.h.b16 %v415
    %v1784 = vunpack.c.l.b16 %v416
    %v1785 = vunpack.c.h.b16 %v416
    %v1786 = vunpack.c.l.b16 %v417
    %v1787 = vunpack.c.h.b16 %v417
    %v1788 = vunpack.c.l.b16 %v418
    %v1789 = vunpack.c.h.b16 %v418
    %v1790 = vunpack.c.l.b16 %v419
    %v1791 = vunpack.c.h.b16 %v419
    %v1792 = vunpack.c.l.b16 %v420
    %v1793 = vunpack.c.h.b16 %v420
    %v1794 = vunpack.c.l.b16 %v421
    %v1795 = vunpack.c.h.b16 %v421
    %v1796 = vunpack.c.l.b16 %v422
    %v1797 = vunpack.c.h.b16 %v422
    %v1798 = vunpack.c.l.b16 %v423
    %v1799 = vunpack.c.h.b16 %v423
    %v1800 = vunpack.c.l.b16 %v424
    %v1801 = vunpack.c.h.b16 %v424
    %v1802 = vunpack.c.l.b16 %v425
    %v1803 = vunpack.c.h.b16 %v425
    %v1804 = vunpack.c.l.b16 %v426
    %v1805 = vunpack.c.h.b16 %v426
    %v1806 = vunpack.c.l.b16 %v427
    %v1807 = vunpack.c.h.b16 %v427
    %v1808 = vunpack.c.l.b16 %v428
    %v1809 = vunpack.c.h.b16 %v428
    %v1810 = vunpack.c.l.b16 %v429
    %v1811 = vunpack.c.h.b16 %v429
    %v1812 = vunpack.c.l.b16 %v430
    %v1813 = vunpack.c.h.b16 %v430
    %v1814 = vunpack.c.l.b16 %v431
    %v1815 = vunpack.c.h.b16 %v431
    %v1816 = vunpack.c.l.b16 %v432
    %v1817 = vunpack.c.h.b16 %v432
    %v1818 = vunpack.c.l.b16 %v433
    %v1819 = vunpack.c.h.b16 %v433
    %v1820 = vunpack.c.l.b16 %v434
    %v1821 = vunpack.c.h.b16 %v434
    %v1822 = vunpack.c.l.b16 %v435
    %v1823 = vunpack.c.h.b16 %v435
    %v1824 = vunpack.c.l.b16 %v436
    %v1825 = vunpack.c.h.b16 %v436
    %v1826 = vunpack.c.l.b16 %v437
    %v1827 = vunpack.c.h.b16 %v437
    %v1828 = vunpack.c.l.b16 %v438
    %v1829 = vunpack.c.h.b16 %v438
    %v1830 = vunpack.c.l.b16 %v439
    %v1831 = vunpack.c.h.b16 %v439
    %v1832 = vunpack.c.l.b16 %v440
    %v1833 = vunpack.c.h.b16 %v440
    %v1834 = vunpack.c.l.b16 %v441
    %v1835 = vunpack.c.h.b16 %v441
    %v1836 = vunpack.c.l.b16 %v442
    %v1837 = vunpack.c.h.b16 %v442
    %v1838 = vunpack.c.l.b16 %v443
    %v1839 = vunpack.c.h.b16 %v443
    %v1840 = vunpack.c.l.b16 %v444
    %v1841 = vunpack.c.h.b16 %v444
    %v1842 = vunpack.c.l.b16 %v445
    %v1843 = vunpack.c.h.b16 %v445
    %v1844 = vunpack.c.l.b16 %v446
    %v1845 = vunpack.c.h.b16 %v446
    %v1846 = vunpack.c.l.b16 %v447
    %v1847 = vunpack.c.h.b16 %v447
    %v1848 = vunpack.c.l.b16 %v448
    %v1849 = vunpack.c.h.b16 %v448
    %v1850 = vunpack.c.l.b16 %v449
    %v1851 = vunpack.c.h.b16 %v449
    %v1852 = vunpack.c.l.b16 %v450
    %v1853 = vunpack.c.h.b16 %v450
    %v1854 = vunpack.c.l.b16 %v451
    %v1855 = vunpack.c.h.b16 %v451
    %v1856 = vunpack.c.l.b16 %v452
    %v1857 = vunpack.c.h.b16 %v452
    %v1858 = vunpack.c.l.b16 %v453
    %v1859 = vunpack.c.h.b16 %v453
    %v1860 = vunpack.c.l.b16 %v454
    %v1861 = vunpack.c.h.b16 %v454
    %v1862 = vunpack.c.l.b16 %v455
    %v1863 = vunpack.c.h.b16 %v455
    %v1864 = vunpack.c.l.b16 %v456
    %v1865 = vunpack.c.h.b16 %v456
    %v1866 = vunpack.c.l.b16 %v457
    %v1867 = vunpack.c.h.b16 %v457
    %v1868 = vunpack.c.l.b16 %v458
    %v1869 = vunpack.c.h.b16 %v458
    %v1870 = vunpack.c.l.b16 %v459
    %v1871 = vunpack.c.h.b16 %v459
    %v1872 = vunpack.c.l.b16 %v460
    %v1873 = vunpack.c.h.b16 %v460
    %v1874 = vunpack.c.l.b16 %v461
    %v1875 = vunpack.c.h.b16 %v461
    %v1876 = vunpack.c.l.b16 %v462
    %v1877 = vunpack.c.h.b16 %v462
    %v1878 = vunpack.c.l.b16 %v463
    %v1879 = vunpack.c.h.b16 %v463
    %v1880 = vunpack.c.l.b16 %v464
    %v1881 = vunpack.c.h.b16 %v464
    %v1882 = vunpack.c.l.b16 %v465
    %v1883 = vunpack.c.h.b16 %v465
    %v1884 = vunpack.c.l.b16 %v466
    %v1885 = vunpack.c.h.b16 %v466
    %v1886 = vunpack.c.l.b16 %v467
    %v1887 = vunpack.c.h.b16 %v467
    %v1888 = vunpack.c.l.b16 %v468
    %v1889 = vunpack.c.h.b16 %v468
    %v1890 = vunpack.c.l.b16 %v469
    %v1891 = vunpack.c.h.b16 %v469
    %v1892 = vunpack.c.l.b16 %v470
    %v1893 = vunpack.c.h.b16 %v470
    %v1894 = vunpack.c.l.b16 %v471
    %v1895 = vunpack.c.h.b16 %v471
    %v1896 = vunpack.c.l.b16 %v472
    %v1897 = vunpack.c.h.b16 %v472
    %v1898 = vunpack.c.l.b16 %v473
    %v1899 = vunpack.c.h.b16 %v473
    %v1900 = vunpack.c.l.b16 %v474
    %v1901 = vunpack.c.h.b16 %v474
    %v1902 = vunpack.c.l.b16 %v475
    %v1903 = vunpack.c.h.b16 %v475
    %v1904 = vunpack.c.l.b16 %v476
    %v1905 = vunpack.c.h.b16 %v476
    %v1906 = vunpack.c.l.b16 %v477
    %v1907 = vunpack.c.h.b16 %v477
    %v1908 = vunpack.c.l.b16 %v478
    %v1909 = vunpack.c.h.b16 %v478
    %v1910 = vunpack.c.l.b16 %v479
    %v1911 = vunpack.c.h.b16 %v479
    %v1912 = vunpack.c.l.b16 %v480
    %v1913 = vunpack.c.h.b16 %v480
    %v1914 = vunpack.c.l.b16 %v481
    %v1915 = vunpack.c.h.b16 %v481
    %v1916 = vunpack.c.l.b16 %v482
    %v1917 = vunpack.c.h.b16 %v482
    %v1918 = vunpack.c.l.b16 %v483
    %v1919 = vunpack.c.h.b16 %v483
    %v1920 = vunpack.c.l.b16 %v484
    %v1921 = vunpack.c.h.b16 %v484
    %v1922 = vunpack.c.l.b16 %v485
    %v1923 = vunpack.c.h.b16 %v485
    %v1924 = vunpack.c.l.b16 %v486
    %v1925 = vunpack.c.h.b16 %v486
    %v1926 = vunpack.c.l.b16 %v487
    %v1927 = vunpack.c.h.b16 %v487
    %v1928 = vunpack.c.l.b16 %v488
    %v1929 = vunpack.c.h.b16 %v488
    %v1930 = vunpack.c.l.b16 %v489
    %v1931 = vunpack.c.h.b16 %v489
    %v1932 = vunpack.c.l.b16 %v490
    %v1933 = vunpack.c.h.b16 %v490
    %v1934 = vunpack.c.l.b16 %v491
    %v1935 = vunpack.c.h.b16 %v491
    %v1936 = vunpack.c.l.b16 %v492
    %v1937 = vunpack.c.h.b16 %v492
    %v1938 = vunpack.c.l.b16 %v493
    %v1939 = vunpack.c.h.b16 %v493
    %v1940 = vunpack.c.l.b16 %v494
    %v1941 = vunpack.c.h.b16 %v494
    %v1942 = vunpack.c.l.b16 %v495
    %v1943 = vunpack.c.h.b16 %v495
    %v1944 = vunpack.c.l.b16 %v496
    %v1945 = vunpack.c.h.b16 %v496
    %v1946 = vunpack.c.l.b16 %v497
    %v1947 = vunpack.c.h.b16 %v497
    %v1948 = vunpack.c.l.b16 %v498
    %v1949 = vunpack.c.h.b16 %v498
    %v1950 = vunpack.c.l.b16 %v499
    %v1951 = vunpack.c.h.b16 %v499
    %v1952 = vunpack.c.l.b16 %v500
    %v1953 = vunpack.c.h.b16 %v500
    %v1954 = vunpack.c.l.b16 %v501
    %v1955 = vunpack.c.h.b16 %v501
    %v1956 = vunpack.c.l.b16 %v502
    %v1957 = vunpack.c.h.b16 %v502
    %v1958 = vunpack.c.l.b16 %v503
    %v1959 = vunpack.c.h.b16 %v503
    %v1960 = vunpack.c.l.b16 %v504
    %v1961 = vunpack.c.h.b16 %v504
    %v1962 = vunpack.c.l.b16 %v505
    %v1963 = vunpack.c.h.b16 %v505
    %v1964 = vunpack.c.l.b16 %v506
    %v1965 = vunpack.c.h.b16 %v506
    %v1966 = vunpack.c.l.b16 %v507
    %v1967 = vunpack.c.h.b16 %v507
    %v1968 = vunpack.c.l.b16 %v508
    %v1969 = vunpack.c.h.b16 %v508
    %v1970 = vunpack.c.l.b16 %v509
    %v1971 = vunpack.c.h.b16 %v509
    %v1972 = vunpack.c.l.b16 %v510
    %v1973 = vunpack.c.h.b16 %v510
    %v1974 = vunpack.c.l.b16 %v511
    %v1975 = vunpack.c.h.b16 %v511
    %v1976 = vunpack.c.l.b16 %v512
    %v1977 = vunpack.c.h.b16 %v512
    %v1978 = vunpack.c.l.b16 %v513
    %v1979 = vunpack.c.h.b16 %v513
    %v1980 = vunpack.c.l.b16 %v514
    %v1981 = vunpack.c.h.b16 %v514
    %v1982 = vunpack.c.l.b16 %v515
    %v1983 = vunpack.c.h.b16 %v515
    %v1984 = vunpack.c.l.b16 %v516
    %v1985 = vunpack.c.h.b16 %v516
    %v1986 = vunpack.c.l.b16 %v517
    %v1987 = vunpack.c.h.b16 %v517
    %v1988 = vunpack.c.l.b16 %v518
    %v1989 = vunpack.c.h.b16 %v518
    %v1990 = vunpack.c.l.b16 %v519
    %v1991 = vunpack.c.h.b16 %v519
    %v1992 = vunpack.c.l.b16 %v520
    %v1993 = vunpack.c.h.b16 %v520
    %v1994 = vunpack.c.l.b16 %v521
    %v1995 = vunpack.c.h.b16 %v521
    %v1996 = vunpack.c.l.b16 %v522
    %v1997 = vunpack.c.h.b16 %v522
    %v1998 = vunpack.c.l.b16 %v523
    %v1999 = vunpack.c.h.b16 %v523
    %v2000 = vunpack.c.l.b16 %v524
    %v2001 = vunpack.c.h.b16 %v524
    %v2002 = vunpack.c.l.b16 %v525
    %v2003 = vunpack.c.h.b16 %v525
    %v2004 = vunpack.c.l.b16 %v526
    %v2005 = vunpack.c.h.b16 %v526
    %v2006 = vunpack.c.l.b16 %v527
    %v2007 = vunpack.c.h.b16 %v527
    %v2008 = vunpack.c.l.b16 %v528
    %v2009 = vunpack.c.h.b16 %v528
    %v2010 = vunpack.c.l.b16 %v529
    %v2011 = vunpack.c.h.b16 %v529
    %v2012 = vunpack.c.l.b16 %v530
    %v2013 = vunpack.c.h.b16 %v530
    %v2014 = vunpack.c.l.b16 %v531
    %v2015 = vunpack.c.h.b16 %v531
    %v2016 = vunpack.c.l.b16 %v532
    %v2017 = vunpack.c.h.b16 %v532
    %v2018 = vunpack.c.l.b16 %v533
    %v2019 = vunpack.c.h.b16 %v533
    %v2020 = vunpack.c.l.b16 %v534
    %v2021 = vunpack.c.h.b16 %v534
    %v2022 = vunpack.c.l.b16 %v535
    %v2023 = vunpack.c.h.b16 %v535
    %v2024 = vunpack.c.l.b16 %v536
    %v2025 = vunpack.c.h.b16 %v536
    %v2026 = vunpack.c.l.b16 %v537
    %v2027 = vunpack.c.h.b16 %v537
    %v2028 = vunpack.c.l.b16 %v538
    %v2029 = vunpack.c.h.b16 %v538
    %v2030 = vunpack.c.l.b16 %v539
    %v2031 = vunpack.c.h.b16 %v539
    %v2032 = vunpack.c.l.b16 %v540
    %v2033 = vunpack.c.h.b16 %v540
    %v2034 = vunpack.c.l.b16 %v541
    %v2035 = vunpack.c.h.b16 %v541
    %v2036 = vunpack.c.l.b16 %v542
    %v2037 = vunpack.c.h.b16 %v542
    %v2038 = vunpack.c.l.b16 %v543
    %v2039 = vunpack.c.h.b16 %v543
    %v2040 = vunpack.c.l.b16 %v544
    %v2041 = vunpack.c.h.b16 %v544
    %v2042 = vunpack.c.l.b16 %v545
    %v2043 = vunpack.c.h.b16 %v545
    %v2044 = vunpack.c.l.b16 %v546
    %v2045 = vunpack.c.h.b16 %v546
    %v2046 = vunpack.c.l.b16 %v547
    %v2047 = vunpack.c.h.b16 %v547
    %v2048 = vunpack.c.l.b16 %v548
    %v2049 = vunpack.c.h.b16 %v548
    %v2050 = vunpack.c.l.b16 %v549
    %v2051 = vunpack.c.h.b16 %v549
    %v2052 = vunpack.c.l.b16 %v550
    %v2053 = vunpack.c.h.b16 %v550
    %v2054 = vunpack.c.l.b16 %v551
    %v2055 = vunpack.c.h.b16 %v551
    %v2056 = vunpack.c.l.b16 %v552
    %v2057 = vunpack.c.h.b16 %v552
    %v2058 = vunpack.c.l.b16 %v553
    %v2059 = vunpack.c.h.b16 %v553
    %v2060 = vunpack.c.l.b16 %v554
    %v2061 = vunpack.c.h.b16 %v554
    %v2062 = vunpack.c.l.b16 %v555
    %v2063 = vunpack.c.h.b16 %v555
    %v2064 = vunpack.c.l.b16 %v556
    %v2065 = vunpack.c.h.b16 %v556
    %v2066 = vunpack.c.l.b16 %v557
    %v2067 = vunpack.c.h.b16 %v557
    %v2068 = vunpack.c.l.b16 %v558
    %v2069 = vunpack.c.h.b16 %v558
    %v2070 = vunpack.c.l.b16 %v559
    %v2071 = vunpack.c.h.b16 %v559
    %v2072 = vunpack.c.l.b16 %v560
    %v2073 = vunpack.c.h.b16 %v560
    %v2074 = vunpack.c.l.b16 %v561
    %v2075 = vunpack.c.h.b16 %v561
    %v2076 = vunpack.c.l.b16 %v562
    %v2077 = vunpack.c.h.b16 %v562
    %v2078 = vunpack.c.l.b16 %v563
    %v2079 = vunpack.c.h.b16 %v563
    %v2080 = vunpack.c.l.b16 %v564
    %v2081 = vunpack.c.h.b16 %v564
    %v2082 = vunpack.c.l.b16 %v565
    %v2083 = vunpack.c.h.b16 %v565
    %v2084 = vunpack.c.l.b16 %v566
    %v2085 = vunpack.c.h.b16 %v566
    %v2086 = vunpack.c.l.b16 %v567
    %v2087 = vunpack.c.h.b16 %v567
    %v2088 = vunpack.c.l.b16 %v568
    %v2089 = vunpack.c.h.b16 %v568
    %v2090 = vunpack.c.l.b16 %v569
    %v2091 = vunpack.c.h.b16 %v569
    %v2092 = vunpack.c.l.b16 %v570
    %v2093 = vunpack.c.h.b16 %v570
    %v2094 = vunpack.c.l.b16 %v571
    %v2095 = vunpack.c.h.b16 %v571
    %v2096 = vunpack.c.l.b16 %v572
    %v2097 = vunpack.c.h.b16 %v572
    %v2098 = vunpack.c.l.b16 %v573
    %v2099 = vunpack.c.h.b16 %v573
    %v2100 = vunpack.c.l.b16 %v574
    %v2101 = vunpack.c.h.b16 %v574
    %v2102 = vunpack.c.l.b16 %v575
    %v2103 = vunpack.c.h.b16 %v575
    %v2104 = vunpack.c.l.b16 %v576
    %v2105 = vunpack.c.h.b16 %v576
    %v2106 = vunpack.c.l.b16 %v577
    %v2107 = vunpack.c.h.b16 %v577
    %v2108 = vunpack.c.l.b16 %v578
    %v2109 = vunpack.c.h.b16 %v578
    %v2110 = vunpack.c.l.b16 %v579
    %v2111 = vunpack.c.h.b16 %v579
    %v2112 = vunpack.c.l.b16 %v580
    %v2113 = vunpack.c.h.b16 %v580
    %v2114 = vunpack.c.l.b16 %v581
    %v2115 = vunpack.c.h.b16 %v581
    %v2116 = vunpack.c.l.b16 %v582
    %v2117 = vunpack.c.h.b16 %v582
    %v2118 = vunpack.c.l.b16 %v583
    %v2119 = vunpack.c.h.b16 %v583
    %v2120 = vunpack.c.l.b16 %v584
    %v2121 = vunpack.c.h.b16 %v584
    %v2122 = vunpack.c.l.b16 %v585
    %v2123 = vunpack.c.h.b16 %v585
    %v2124 = vunpack.c.l.b16 %v586
    %v2125 = vunpack.c.h.b16 %v586
    %v2126 = vunpack.c.l.b16 %v587
    %v2127 = vunpack.c.h.b16 %v587
    %v2128 = vunpack.c.l.b16 %v588
    %v2129 = vunpack.c.h.b16 %v588
    %v2130 = vunpack.c.l.b16 %v589
    %v2131 = vunpack.c.h.b16 %v589
    %v2132 = vunpack.c.l.b16 %v590
    %v2133 = vunpack.c.h.b16 %v590
    %v2134 = vunpack.c.l.b16 %v591
    %v2135 = vunpack.c.h.b16 %v591
    %v2136 = vunpack.c.l.b16 %v592
    %v2137 = vunpack.c.h.b16 %v592
    %v2138 = vunpack.c.l.b16 %v593
    %v2139 = vunpack.c.h.b16 %v593
    %v2140 = vunpack.c.l.b16 %v594
    %v2141 = vunpack.c.h.b16 %v594
    %v2142 = vunpack.c.l.b16 %v595
    %v2143 = vunpack.c.h.b16 %v595
    %v2144 = vunpack.c.l.b16 %v596
    %v2145 = vunpack.c.h.b16 %v596
    %v2146 = vunpack.c.l.b16 %v597
    %v2147 = vunpack.c.h.b16 %v597
    %v2148 = vunpack.c.l.b16 %v598
    %v2149 = vunpack.c.h.b16 %v598
    %v2150 = vunpack.c.l.b16 %v599
    %v2151 = vunpack.c.h.b16 %v599
    %v2152 = vunpack.c.l.b16 %v600
    %v2153 = vunpack.c.h.b16 %v600
    %v2154 = vunpack.c.l.b16 %v601
    %v2155 = vunpack.c.h.b16 %v601
    %v2156 = vpack.c.b16 %v1140, %v1132
    %v2157 = vpack.c.b16 %v1141, %v1133
    %v2158 = vpack.c.b16 %v1142, %v1134
    %v2159 = vpack.c.b16 %v1143, %v1135
    %v2160 = vpack.c.b16 %v1144, %v1136
    %v2161 = vpack.c.b16 %v1145, %v1137
    %v2162 = vpack.c.b16 %v1146, %v1138
    %v2163 = vpack.c.b16 %v1147, %v1139
    %v2164 = vpack.c.b16 %v1156, %v1148
    %v2165 = vpack.c.b16 %v1157, %v1149
    %v2166 = vpack.c.b16 %v1158, %v1150
    %v2167 = vpack.c.b16 %v1159, %v1151
    %v2168 = vpack.c.b16 %v1160, %v1152
    %v2169 = vpack.c.b16 %v1161, %v1153
    %v2170 = vpack.c.b16 %v1162, %v1154
    %v2171 = vpack.c.b16 %v1163, %v1155
    %v2172 = vpack.c.b16 %v1172, %v1164
    %v2173 = vpack.c.b16 %v1173, %v1165
    %v2174 = vpack.c.b16 %v1174, %v1166
    %v2175 = vpack.c.b16 %v1175, %v1167
    %v2176 = vpack.c.b16 %v1176, %v1168
    %v2177 = vpack.c.b16 %v1177, %v1169
    %v2178 = vpack.c.b16 %v1178, %v1170
    %v2179 = vpack.c.b16 %v1179, %v1171
    %v2180 = vpack.c.b16 %v1188, %v1180
    %v2181 = vpack.c.b16 %v1189, %v1181
    %v2182 = vpack.c.b16 %v1190, %v1182
    %v2183 = vpack.c.b16 %v1191, %v1183
    %v2184 = vpack.c.b16 %v1192, %v1184
    %v2185 = vpack.c.b16 %v1193, %v1185
    %v2186 = vpack.c.b16 %v1194, %v1186
    %v2187 = vpack.c.b16 %v1195, %v1187
    %v2188 = vpack.c.b16 %v1204, %v1196
    %v2189 = vpack.c.b16 %v1205, %v1197
    %v2190 = vpack.c.b16 %v1206, %v1198
    %v2191 = vpack.c.b16 %v1207, %v1199
    %v2192 = vpack.c.b16 %v1208, %v1200
    %v2193 = vpack.c.b16 %v1209, %v1201
    %v2194 = vpack.c.b16 %v1210, %v1202
    %v2195 = vpack.c.b16 %v1211, %v1203
    %v2196 = vpack.c.b16 %v1220, %v1212
    %v2197 = vpack.c.b16 %v1221, %v1213
    %v2198 = vpack.c.b16 %v1222, %v1214
    %v2199 = vpack.c.b16 %v1223, %v1215
    %v2200 = vpack.c.b16 %v1224, %v1216
    %v2201 = vpack.c.b16 %v1225, %v1217
    %v2202 = vpack.c.b16 %v1226, %v1218
    %v2203 = vpack.c.b16 %v1227, %v1219
    %v2204 = vpack.c.b16 %v1236, %v1228
    %v2205 = vpack.c.b16 %v1237, %v1229
    %v2206 = vpack.c.b16 %v1238, %v1230
    %v2207 = vpack.c.b16 %v1239, %v1231
    %v2208 = vpack.c.b16 %v1240, %v1232
    %v2209 = vpack.c.b16 %v1241, %v1233
    %v2210 = vpack.c.b16 %v1242, %v1234
    %v2211 = vpack.c.b16 %v1243, %v1235
    %v2212 = vpack.c.b16 %v1252, %v1244
    %v2213 = vpack.c.b16 %v1253, %v1245
    %v2214 = vpack.c.b16 %v1254, %v1246
    %v2215 = vpack.c.b16 %v1255, %v1247
    %v2216 = vpack.c.b16 %v1256, %v1248
    %v2217 = vpack.c.b16 %v1257, %v1249
    %v2218 = vpack.c.b16 %v1258, %v1250
    %v2219 = vpack.c.b16 %v1259, %v1251
    %v2220 = vpack.c.b16 %v1268, %v1260
    %v2221 = vpack.c.b16 %v1269, %v1261
    %v2222 = vpack.c.b16 %v1270, %v1262
    %v2223 = vpack.c.b16 %v1271, %v1263
    %v2224 = vpack.c.b16 %v1272, %v1264
    %v2225 = vpack.c.b16 %v1273, %v1265
    %v2226 = vpack.c.b16 %v1274, %v1266
    %v2227 = vpack.c.b16 %v1275, %v1267
    %v2228 = vpack.c.b16 %v1284, %v1276
    %v2229 = vpack.c.b16 %v1285, %v1277
    %v2230 = vpack.c.b16 %v1286, %v1278
    %v2231 = vpack.c.b16 %v1287, %v1279
    %v2232 = vpack.c.b16 %v1288, %v1280
    %v2233 = vpack.c.b16 %v1289, %v1281
    %v2234 = vpack.c.b16 %v1290, %v1282
    %v2235 = vpack.c.b16 %v1291, %v1283
    %v2236 = vpack.c.b16 %v1300, %v1292
    %v2237 = vpack.c.b16 %v1301, %v1293
    %v2238 = vpack.c.b16 %v1302, %v1294
    %v2239 = vpack.c.b16 %v1303, %v1295
    %v2240 = vpack.c.b16 %v1304, %v1296
    %v2241 = vpack.c.b16 %v1305, %v1297
    %v2242 = vpack.c.b16 %v1306, %v1298
    %v2243 = vpack.c.b16 %v1307, %v1299
    %v2244 = vpack.c.b16 %v1316, %v1308
    %v2245 = vpack.c.b16 %v1317, %v1309
    %v2246 = vpack.c.b16 %v1318, %v1310
    %v2247 = vpack.c.b16 %v1319, %v1311
    %v2248 = vpack.c.b16 %v1320, %v1312
    %v2249 = vpack.c.b16 %v1321, %v1313
    %v2250 = vpack.c.b16 %v1322, %v1314
    %v2251 = vpack.c.b16 %v1323, %v1315
    %v2252 = vpack.c.b16 %v1332, %v1324
    %v2253 = vpack.c.b16 %v1333, %v1325
    %v2254 = vpack.c.b16 %v1334, %v1326
    %v2255 = vpack.c.b16 %v1335, %v1327
    %v2256 = vpack.c.b16 %v1336, %v1328
    %v2257 = vpack.c.b16 %v1337, %v1329
    %v2258 = vpack.c.b16 %v1338, %v1330
    %v2259 = vpack.c.b16 %v1339, %v1331
    %v2260 = vpack.c.b16 %v1348, %v1340
    %v2261 = vpack.c.b16 %v1349, %v1341
    %v2262 = vpack.c.b16 %v1350, %v1342
    %v2263 = vpack.c.b16 %v1351, %v1343
    %v2264 = vpack.c.b16 %v1352, %v1344
    %v2265 = vpack.c.b16 %v1353, %v1345
    %v2266 = vpack.c.b16 %v1354, %v1346
    %v2267 = vpack.c.b16 %v1355, %v1347
    %v2268 = vpack.c.b16 %v1364, %v1356
    %v2269 = vpack.c.b16 %v1365, %v1357
    %v2270 = vpack.c.b16 %v1366, %v1358
    %v2271 = vpack.c.b16 %v1367, %v1359
    %v2272 = vpack.c.b16 %v1368, %v1360
    %v2273 = vpack.c.b16 %v1369, %v1361
    %v2274 = vpack.c.b16 %v1370, %v1362
    %v2275 = vpack.c.b16 %v1371, %v1363
    %v2276 = vpack.c.b16 %v1380, %v1372
    %v2277 = vpack.c.b16 %v1381, %v1373
    %v2278 = vpack.c.b16 %v1382, %v1374
    %v2279 = vpack.c.b16 %v1383, %v1375
    %v2280 = vpack.c.b16 %v1384, %v1376
    %v2281 = vpack.c.b16 %v1385, %v1377
    %v2282 = vpack.c.b16 %v1386, %v1378
    %v2283 = vpack.c.b16 %v1387, %v1379
    %v2284 = vpack.c.b16 %v1396, %v1388
    %v2285 = vpack.c.b16 %v1397, %v1389
    %v2286 = vpack.c.b16 %v1398, %v1390
    %v2287 = vpack.c.b16 %v1399, %v1391
    %v2288 = vpack.c.b16 %v1400, %v1392
    %v2289 = vpack.c.b16 %v1401, %v1393
    %v2290 = vpack.c.b16 %v1402, %v1394
    %v2291 = vpack.c.b16 %v1403, %v1395
    %v2292 = vpack.c.b16 %v1412, %v1404
    %v2293 = vpack.c.b16 %v1413, %v1405
    %v2294 = vpack.c.b16 %v1414, %v1406
    %v2295 = vpack.c.b16 %v1415, %v1407
    %v2296 = vpack.c.b16 %v1416, %v1408
    %v2297 = vpack.c.b16 %v1417, %v1409
    %v2298 = vpack.c.b16 %v1418, %v1410
    %v2299 = vpack.c.b16 %v1419, %v1411
    %v2300 = vpack.c.b16 %v1428, %v1420
    %v2301 = vpack.c.b16 %v1429, %v1421
    %v2302 = vpack.c.b16 %v1430, %v1422
    %v2303 = vpack.c.b16 %v1431, %v1423
    %v2304 = vpack.c.b16 %v1432, %v1424
    %v2305 = vpack.c.b16 %v1433, %v1425
    %v2306 = vpack.c.b16 %v1434, %v1426
    %v2307 = vpack.c.b16 %v1435, %v1427
    %v2308 = vpack.c.b16 %v1444, %v1436
    %v2309 = vpack.c.b16 %v1445, %v1437
    %v2310 = vpack.c.b16 %v1446, %v1438
    %v2311 = vpack.c.b16 %v1447, %v1439
    %v2312 = vpack.c.b16 %v1448, %v1440
    %v2313 = vpack.c.b16 %v1449, %v1441
    %v2314 = vpack.c.b16 %v1450, %v1442
    %v2315 = vpack.c.b16 %v1451, %v1443
    %v2316 = vpack.c.b16 %v1460, %v1452
    %v2317 = vpack.c.b16 %v1461, %v1453
    %v2318 = vpack.c.b16 %v1462, %v1454
    %v2319 = vpack.c.b16 %v1463, %v1455
    %v2320 = vpack.c.b16 %v1464, %v1456
    %v2321 = vpack.c.b16 %v1465, %v1457
    %v2322 = vpack.c.b16 %v1466, %v1458
    %v2323 = vpack.c.b16 %v1467, %v1459
    %v2324 = vpack.c.b16 %v1476, %v1468
    %v2325 = vpack.c.b16 %v1477, %v1469
    %v2326 = vpack.c.b16 %v1478, %v1470
    %v2327 = vpack.c.b16 %v1479, %v1471
    %v2328 = vpack.c.b16 %v1480, %v1472
    %v2329 = vpack.c.b16 %v1481, %v1473
    %v2330 = vpack.c.b16 %v1482, %v1474
    %v2331 = vpack.c.b16 %v1483, %v1475
    %v2332 = vpack.c.b16 %v1492, %v1484
    %v2333 = vpack.c.b16 %v1493, %v1485
    %v2334 = vpack.c.b16 %v1494, %v1486
    %v2335 = vpack.c.b16 %v1495, %v1487
    %v2336 = vpack.c.b16 %v1496, %v1488
    %v2337 = vpack.c.b16 %v1497, %v1489
    %v2338 = vpack.c.b16 %v1498, %v1490
    %v2339 = vpack.c.b16 %v1499, %v1491
    %v2340 = vpack.c.b16 %v1508, %v1500
    %v2341 = vpack.c.b16 %v1509, %v1501
    %v2342 = vpack.c.b16 %v1510, %v1502
    %v2343 = vpack.c.b16 %v1511, %v1503
    %v2344 = vpack.c.b16 %v1512, %v1504
    %v2345 = vpack.c.b16 %v1513, %v1505
    %v2346 = vpack.c.b16 %v1514, %v1506
    %v2347 = vpack.c.b16 %v1515, %v1507
    %v2348 = vpack.c.b16 %v1524, %v1516
    %v2349 = vpack.c.b16 %v1525, %v1517
    %v2350 = vpack.c.b16 %v1526, %v1518
    %v2351 = vpack.c.b16 %v1527, %v1519
    %v2352 = vpack.c.b16 %v1528, %v1520
    %v2353 = vpack.c.b16 %v1529, %v1521
    %v2354 = vpack.c.b16 %v1530, %v1522
    %v2355 = vpack.c.b16 %v1531, %v1523
    %v2356 = vpack.c.b16 %v1540, %v1532
    %v2357 = vpack.c.b16 %v1541, %v1533
    %v2358 = vpack.c.b16 %v1542, %v1534
    %v2359 = vpack.c.b16 %v1543, %v1535
    %v2360 = vpack.c.b16 %v1544, %v1536
    %v2361 = vpack.c.b16 %v1545, %v1537
    %v2362 = vpack.c.b16 %v1546, %v1538
    %v2363 = vpack.c.b16 %v1547, %v1539
    %v2364 = vpack.c.b16 %v1556, %v1548
    %v2365 = vpack.c.b16 %v1557, %v1549
    %v2366 = vpack.c.b16 %v1558, %v1550
    %v2367 = vpack.c.b16 %v1559, %v1551
    %v2368 = vpack.c.b16 %v1560, %v1552
    %v2369 = vpack.c.b16 %v1561, %v1553
    %v2370 = vpack.c.b16 %v1562, %v1554
    %v2371 = vpack.c.b16 %v1563, %v1555
    %v2372 = vpack.c.b16 %v1572, %v1564
    %v2373 = vpack.c.b16 %v1573, %v1565
    %v2374 = vpack.c.b16 %v1574, %v1566
    %v2375 = vpack.c.b16 %v1575, %v1567
    %v2376 = vpack.c.b16 %v1576, %v1568
    %v2377 = vpack.c.b16 %v1577, %v1569
    %v2378 = vpack.c.b16 %v1578, %v1570
    %v2379 = vpack.c.b16 %v1579, %v1571
    %v2380 = vpack.c.b16 %v1588, %v1580
    %v2381 = vpack.c.b16 %v1589, %v1581
    %v2382 = vpack.c.b16 %v1590, %v1582
    %v2383 = vpack.c.b16 %v1591, %v1583
    %v2384 = vpack.c.b16 %v1592, %v1584
    %v2385 = vpack.c.b16 %v1593, %v1585
    %v2386 = vpack.c.b16 %v1594, %v1586
    %v2387 = vpack.c.b16 %v1595, %v1587
    %v2388 = vpack.c.b16 %v1604, %v1596
    %v2389 = vpack.c.b16 %v1605, %v1597
    %v2390 = vpack.c.b16 %v1606, %v1598
    %v2391 = vpack.c.b16 %v1607, %v1599
    %v2392 = vpack.c.b16 %v1608, %v1600
    %v2393 = vpack.c.b16 %v1609, %v1601
    %v2394 = vpack.c.b16 %v1610, %v1602
    %v2395 = vpack.c.b16 %v1611, %v1603
    %v2396 = vpack.c.b16 %v1620, %v1612
    %v2397 = vpack.c.b16 %v1621, %v1613
    %v2398 = vpack.c.b16 %v1622, %v1614
    %v2399 = vpack.c.b16 %v1623, %v1615
    %v2400 = vpack.c.b16 %v1624, %v1616
    %v2401 = vpack.c.b16 %v1625, %v1617
    %v2402 = vpack.c.b16 %v1626, %v1618
    %v2403 = vpack.c.b16 %v1627, %v1619
    %v2404 = vpack.c.b16 %v1636, %v1628
    %v2405 = vpack.c.b16 %v1637, %v1629
    %v2406 = vpack.c.b16 %v1638, %v1630
    %v2407 = vpack.c.b16 %v1639, %v1631
    %v2408 = vpack.c.b16 %v1640, %v1632
    %v2409 = vpack.c.b16 %v1641, %v1633
    %v2410 = vpack.c.b16 %v1642, %v1634
    %v2411 = vpack.c.b16 %v1643, %v1635
    %v2412 = vpack.c.b16 %v1652, %v1644
    %v2413 = vpack.c.b16 %v1653, %v1645
    %v2414 = vpack.c.b16 %v1654, %v1646
    %v2415 = vpack.c.b16 %v1655, %v1647
    %v2416 = vpack.c.b16 %v1656, %v1648
    %v2417 = vpack.c.b16 %v1657, %v1649
    %v2418 = vpack.c.b16 %v1658, %v1650
    %v2419 = vpack.c.b16 %v1659, %v1651
    %v2420 = vpack.c.b16 %v1668, %v1660
    %v2421 = vpack.c.b16 %v1669, %v1661
    %v2422 = vpack.c.b16 %v1670, %v1662
    %v2423 = vpack.c.b16 %v1671, %v1663
    %v2424 = vpack.c.b16 %v1672, %v1664
    %v2425 = vpack.c.b16 %v1673, %v1665
    %v2426 = vpack.c.b16 %v1674, %v1666
    %v2427 = vpack.c.b16 %v1675, %v1667
    %v2428 = vpack.c.b16 %v1684, %v1676
    %v2429 = vpack.c.b16 %v1685, %v1677
    %v2430 = vpack.c.b16 %v1686, %v1678
    %v2431 = vpack.c.b16 %v1687, %v1679
    %v2432 = vpack.c.b16 %v1688, %v1680
    %v2433 = vpack.c.b16 %v1689, %v1681
    %v2434 = vpack.c.b16 %v1690, %v1682
    %v2435 = vpack.c.b16 %v1691, %v1683
    %v2436 = vpack.c.b16 %v1700, %v1692
    %v2437 = vpack.c.b16 %v1701, %v1693
    %v2438 = vpack.c.b16 %v1702, %v1694
    %v2439 = vpack.c.b16 %v1703, %v1695
    %v2440 = vpack.c.b16 %v1704, %v1696
    %v2441 = vpack.c.b16 %v1705, %v1697
    %v2442 = vpack.c.b16 %v1706, %v1698
    %v2443 = vpack.c.b16 %v1707, %v1699
    %v2444 = vpack.c.b16 %v1716, %v1708
    %v2445 = vpack.c.b16 %v1717, %v1709
    %v2446 = vpack.c.b16 %v1718, %v1710
    %v2447 = vpack.c.b16 %v1719, %v1711
    %v2448 = vpack.c.b16 %v1720, %v1712
    %v2449 = vpack.c.b16 %v1721, %v1713
    %v2450 = vpack.c.b16 %v1722, %v1714
    %v2451 = vpack.c.b16 %v1723, %v1715
    %v2452 = vpack.c.b16 %v1732, %v1724
    %v2453 = vpack.c.b16 %v1733, %v1725
    %v2454 = vpack.c.b16 %v1734, %v1726
    %v2455 = vpack.c.b16 %v1735, %v1727
    %v2456 = vpack.c.b16 %v1736, %v1728
    %v2457 = vpack.c.b16 %v1737, %v1729
    %v2458 = vpack.c.b16 %v1738, %v1730
    %v2459 = vpack.c.b16 %v1739, %v1731
    %v2460 = vpack.c.b16 %v1748, %v1740
    %v2461 = vpack.c.b16 %v1749, %v1741
    %v2462 = vpack.c.b16 %v1750, %v1742
    %v2463 = vpack.c.b16 %v1751, %v1743
    %v2464 = vpack.c.b16 %v1752, %v1744
    %v2465 = vpack.c.b16 %v1753, %v1745
    %v2466 = vpack.c.b16 %v1754, %v1746
    %v2467 = vpack.c.b16 %v1755, %v1747
    %v2468 = vpack.c.b16 %v1764, %v1756
    %v2469 = vpack.c.b16 %v1765, %v1757
    %v2470 = vpack.c.b16 %v1766, %v1758
    %v2471 = vpack.c.b16 %v1767, %v1759
    %v2472 = vpack.c.b16 %v1768, %v1760
    %v2473 = vpack.c.b16 %v1769, %v1761
    %v2474 = vpack.c.b16 %v1770, %v1762
    %v2475 = vpack.c.b16 %v1771, %v1763
    %v2476 = vpack.c.b16 %v1780, %v1772
    %v2477 = vpack.c.b16 %v1781, %v1773
    %v2478 = vpack.c.b16 %v1782, %v1774
    %v2479 = vpack.c.b16 %v1783, %v1775
    %v2480 = vpack.c.b16 %v1784, %v1776
    %v2481 = vpack.c.b16 %v1785, %v1777
    %v2482 = vpack.c.b16 %v1786, %v1778
    %v2483 = vpack.c.b16 %v1787, %v1779
    %v2484 = vpack.c.b16 %v1796, %v1788
    %v2485 = vpack.c.b16 %v1797, %v1789
    %v2486 = vpack.c.b16 %v1798, %v1790
    %v2487 = vpack.c.b16 %v1799, %v1791
    %v2488 = vpack.c.b16 %v1800, %v1792
    %v2489 = vpack.c.b16 %v1801, %v1793
    %v2490 = vpack.c.b16 %v1802, %v1794
    %v2491 = vpack.c.b16 %v1803, %v1795
    %v2492 = vpack.c.b16 %v1812, %v1804
    %v2493 = vpack.c.b16 %v1813, %v1805
    %v2494 = vpack.c.b16 %v1814, %v1806
    %v2495 = vpack.c.b16 %v1815, %v1807
    %v2496 = vpack.c.b16 %v1816, %v1808
    %v2497 = vpack.c.b16 %v1817, %v1809
    %v2498 = vpack.c.b16 %v1818, %v1810
    %v2499 = vpack.c.b16 %v1819, %v1811
    %v2500 = vpack.c.b16 %v1828, %v1820
    %v2501 = vpack.c.b16 %v1829, %v1821
    %v2502 = vpack.c.b16 %v1830, %v1822
    %v2503 = vpack.c.b16 %v1831, %v1823
    %v2504 = vpack.c.b16 %v1832, %v1824
    %v2505 = vpack.c.b16 %v1833, %v1825
    %v2506 = vpack.c.b16 %v1834, %v1826
    %v2507 = vpack.c.b16 %v1835, %v1827
    %v2508 = vpack.c.b16 %v1844, %v1836
    %v2509 = vpack.c.b16 %v1845, %v1837
    %v2510 = vpack.c.b16 %v1846, %v1838
    %v2511 = vpack.c.b16 %v1847, %v1839
    %v2512 = vpack.c.b16 %v1848, %v1840
    %v2513 = vpack.c.b16 %v1849, %v1841
    %v2514 = vpack.c.b16 %v1850, %v1842
    %v2515 = vpack.c.b16 %v1851, %v1843
    %v2516 = vpack.c.b16 %v1860, %v1852
    %v2517 = vpack.c.b16 %v1861, %v1853
    %v2518 = vpack.c.b16 %v1862, %v1854
    %v2519 = vpack.c.b16 %v1863, %v1855
    %v2520 = vpack.c.b16 %v1864, %v1856
    %v2521 = vpack.c.b16 %v1865, %v1857
    %v2522 = vpack.c.b16 %v1866, %v1858
    %v2523 = vpack.c.b16 %v1867, %v1859
    %v2524 = vpack.c.b16 %v1876, %v1868
    %v2525 = vpack.c.b16 %v1877, %v1869
    %v2526 = vpack.c.b16 %v1878, %v1870
    %v2527 = vpack.c.b16 %v1879, %v1871
    %v2528 = vpack.c.b16 %v1880, %v1872
    %v2529 = vpack.c.b16 %v1881, %v1873
    %v2530 = vpack.c.b16 %v1882, %v1874
    %v2531 = vpack.c.b16 %v1883, %v1875
    %v2532 = vpack.c.b16 %v1892, %v1884
    %v2533 = vpack.c.b16 %v1893, %v1885
    %v2534 = vpack.c.b16 %v1894, %v1886
    %v2535 = vpack.c.b16 %v1895, %v1887
    %v2536 = vpack.c.b16 %v1896, %v1888
    %v2537 = vpack.c.b16 %v1897, %v1889
    %v2538 = vpack.c.b16 %v1898, %v1890
    %v2539 = vpack.c.b16 %v1899, %v1891
    %v2540 = vpack.c.b16 %v1908, %v1900
    %v2541 = vpack.c.b16 %v1909, %v1901
    %v2542 = vpack.c.b16 %v1910, %v1902
    %v2543 = vpack.c.b16 %v1911, %v1903
    %v2544 = vpack.c.b16 %v1912, %v1904
    %v2545 = vpack.c.b16 %v1913, %v1905
    %v2546 = vpack.c.b16 %v1914, %v1906
    %v2547 = vpack.c.b16 %v1915, %v1907
    %v2548 = vpack.c.b16 %v1924, %v1916
    %v2549 = vpack.c.b16 %v1925, %v1917
    %v2550 = vpack.c.b16 %v1926, %v1918
    %v2551 = vpack.c.b16 %v1927, %v1919
    %v2552 = vpack.c.b16 %v1928, %v1920
    %v2553 = vpack.c.b16 %v1929, %v1921
    %v2554 = vpack.c.b16 %v1930, %v1922
    %v2555 = vpack.c.b16 %v1931, %v1923
    %v2556 = vpack.c.b16 %v1940, %v1932
    %v2557 = vpack.c.b16 %v1941, %v1933
    %v2558 = vpack.c.b16 %v1942, %v1934
    %v2559 = vpack.c.b16 %v1943, %v1935
    %v2560 = vpack.c.b16 %v1944, %v1936
    %v2561 = vpack.c.b16 %v1945, %v1937
    %v2562 = vpack.c.b16 %v1946, %v1938
    %v2563 = vpack.c.b16 %v1947, %v1939
    %v2564 = vpack.c.b16 %v1956, %v1948
    %v2565 = vpack.c.b16 %v1957, %v1949
    %v2566 = vpack.c.b16 %v1958, %v1950
    %v2567 = vpack.c.b16 %v1959, %v1951
    %v2568 = vpack.c.b16 %v1960, %v1952
    %v2569 = vpack.c.b16 %v1961, %v1953
    %v2570 = vpack.c.b16 %v1962, %v1954
    %v2571 = vpack.c.b16 %v1963, %v1955
    %v2572 = vpack.c.b16 %v1972, %v1964
    %v2573 = vpack.c.b16 %v1973, %v1965
    %v2574 = vpack.c.b16 %v1974, %v1966
    %v2575 = vpack.c.b16 %v1975, %v1967
    %v2576 = vpack.c.b16 %v1976, %v1968
    %v2577 = vpack.c.b16 %v1977, %v1969
    %v2578 = vpack.c.b16 %v1978, %v1970
    %v2579 = vpack.c.b16 %v1979, %v1971
    %v2580 = vpack.c.b16 %v1988, %v1980
    %v2581 = vpack.c.b16 %v1989, %v1981
    %v2582 = vpack.c.b16 %v1990, %v1982
    %v2583 = vpack.c.b16 %v1991, %v1983
    %v2584 = vpack.c.b16 %v1992, %v1984
    %v2585 = vpack.c.b16 %v1993, %v1985
    %v2586 = vpack.c.b16 %v1994, %v1986
    %v2587 = vpack.c.b16 %v1995, %v1987
    %v2588 = vpack.c.b16 %v2004, %v1996
    %v2589 = vpack.c.b16 %v2005, %v1997
    %v2590 = vpack.c.b16 %v2006, %v1998
    %v2591 = vpack.c.b16 %v2007, %v1999
    %v2592 = vpack.c.b16 %v2008, %v2000
    %v2593 = vpack.c.b16 %v2009, %v2001
    %v2594 = vpack.c.b16 %v2010, %v2002
    %v2595 = vpack.c.b16 %v2011, %v2003
    %v2596 = vpack.c.b16 %v2020, %v2012
    %v2597 = vpack.c.b16 %v2021, %v2013
    %v2598 = vpack.c.b16 %v2022, %v2014
    %v2599 = vpack.c.b16 %v2023, %v2015
    %v2600 = vpack.c.b16 %v2024, %v2016
    %v2601 = vpack.c.b16 %v2025, %v2017
    %v2602 = vpack.c.b16 %v2026, %v2018
    %v2603 = vpack.c.b16 %v2027, %v2019
    %v2604 = vpack.c.b16 %v2036, %v2028
    %v2605 = vpack.c.b16 %v2037, %v2029
    %v2606 = vpack.c.b16 %v2038, %v2030
    %v2607 = vpack.c.b16 %v2039, %v2031
    %v2608 = vpack.c.b16 %v2040, %v2032
    %v2609 = vpack.c.b16 %v2041, %v2033
    %v2610 = vpack.c.b16 %v2042, %v2034
    %v2611 = vpack.c.b16 %v2043, %v2035
    %v2612 = vpack.c.b16 %v2052, %v2044
    %v2613 = vpack.c.b16 %v2053, %v2045
    %v2614 = vpack.c.b16 %v2054, %v2046
    %v2615 = vpack.c.b16 %v2055, %v2047
    %v2616 = vpack.c.b16 %v2056, %v2048
    %v2617 = vpack.c.b16 %v2057, %v2049
    %v2618 = vpack.c.b16 %v2058, %v2050
    %v2619 = vpack.c.b16 %v2059, %v2051
    %v2620 = vpack.c.b16 %v2068, %v2060
    %v2621 = vpack.c.b16 %v2069, %v2061
    %v2622 = vpack.c.b16 %v2070, %v2062
    %v2623 = vpack.c.b16 %v2071, %v2063
    %v2624 = vpack.c.b16 %v2072, %v2064
    %v2625 = vpack.c.b16 %v2073, %v2065
    %v2626 = vpack.c.b16 %v2074, %v2066
    %v2627 = vpack.c.b16 %v2075, %v2067
    %v2628 = vpack.c.b16 %v2084, %v2076
    %v2629 = vpack.c.b16 %v2085, %v2077
    %v2630 = vpack.c.b16 %v2086, %v2078
    %v2631 = vpack.c.b16 %v2087, %v2079
    %v2632 = vpack.c.b16 %v2088, %v2080
    %v2633 = vpack.c.b16 %v2089, %v2081
    %v2634 = vpack.c.b16 %v2090, %v2082
    %v2635 = vpack.c.b16 %v2091, %v2083
    %v2636 = vpack.c.b16 %v2100, %v2092
    %v2637 = vpack.c.b16 %v2101, %v2093
    %v2638 = vpack.c.b16 %v2102, %v2094
    %v2639 = vpack.c.b16 %v2103, %v2095
    %v2640 = vpack.c.b16 %v2104, %v2096
    %v2641 = vpack.c.b16 %v2105, %v2097
    %v2642 = vpack.c.b16 %v2106, %v2098
    %v2643 = vpack.c.b16 %v2107, %v2099
    %v2644 = vpack.c.b16 %v2116, %v2108
    %v2645 = vpack.c.b16 %v2117, %v2109
    %v2646 = vpack.c.b16 %v2118, %v2110
    %v2647 = vpack.c.b16 %v2119, %v2111
    %v2648 = vpack.c.b16 %v2120, %v2112
    %v2649 = vpack.c.b16 %v2121, %v2113
    %v2650 = vpack.c.b16 %v2122, %v2114
    %v2651 = vpack.c.b16 %v2123, %v2115
    %v2652 = vpack.c.b16 %v2132, %v2124
    %v2653 = vpack.c.b16 %v2133, %v2125
    %v2654 = vpack.c.b16 %v2134, %v2126
    %v2655 = vpack.c.b16 %v2135, %v2127
    %v2656 = vpack.c.b16 %v2136, %v2128
    %v2657 = vpack.c.b16 %v2137, %v2129
    %v2658 = vpack.c.b16 %v2138, %v2130
    %v2659 = vpack.c.b16 %v2139, %v2131
    %v2660 = vpack.c.b16 %v2148, %v2140
    %v2661 = vpack.c.b16 %v2149, %v2141
    %v2662 = vpack.c.b16 %v2150, %v2142
    %v2663 = vpack.c.b16 %v2151, %v2143
    %v2664 = vpack.c.b16 %v2152, %v2144
    %v2665 = vpack.c.b16 %v2153, %v2145
    %v2666 = vpack.c.b16 %v2154, %v2146
    %v2667 = vpack.c.b16 %v2155, %v2147
    %3180 = vmatpush.bf16.msra.mxu0 %v2212
    %3181 = vmatpush.bf16.msra.mxu0 %v2204
    %3182 = vmatpush.bf16.msra.mxu0 %v2196
    %3183 = vmatpush.bf16.msra.mxu0 %v2188
    %3184 = vmatpush.bf16.msra.mxu0 %v2180
    %3185 = vmatpush.bf16.msra.mxu0 %v2172
    %3186 = vmatpush.bf16.msra.mxu0 %v2164
    %3187 = vmatpush.bf16.msra.mxu0 %v2156
    %3188 = vmatmul.bf16.gmra.mxu0 %v82
    %v3189 = vpop.f32.mrf.mxu0
    %v3190 = vadd.f32 %v604, %v3189
    %v3191 = vpop.f32.mrf.mxu0
    %v3192 = vadd.f32 %v604, %v3191
    %3193 = vdwg.mxu0
    %3194 = vmatpush.bf16.msra.mxu0 %v2276
    %3195 = vmatpush.bf16.msra.mxu0 %v2268
    %3196 = vmatpush.bf16.msra.mxu0 %v2260
    %3197 = vmatpush.bf16.msra.mxu0 %v2252
    %3198 = vmatpush.bf16.msra.mxu0 %v2244
    %3199 = vmatpush.bf16.msra.mxu0 %v2236
    %3200 = vmatpush.bf16.msra.mxu0 %v2228
    %3201 = vmatpush.bf16.msra.mxu0 %v2220
    %3202 = vmatmul.bf16.gmra.mxu0 %v83
    %v3203 = vpop.f32.mrf.mxu0
    %v3204 = vadd.f32 %v3190, %v3203
    %v3205 = vpop.f32.mrf.mxu0
    %v3206 = vadd.f32 %v3192, %v3205
    %3207 = vdwg.mxu0
    %3208 = vmatpush.bf16.msra.mxu0 %v2340
    %3209 = vmatpush.bf16.msra.mxu0 %v2332
    %3210 = vmatpush.bf16.msra.mxu0 %v2324
    %3211 = vmatpush.bf16.msra.mxu0 %v2316
    %3212 = vmatpush.bf16.msra.mxu0 %v2308
    %3213 = vmatpush.bf16.msra.mxu0 %v2300
    %3214 = vmatpush.bf16.msra.mxu0 %v2292
    %3215 = vmatpush.bf16.msra.mxu0 %v2284
    %3216 = vmatmul.bf16.gmra.mxu0 %v84
    %v3217 = vpop.f32.mrf.mxu0
    %v3218 = vadd.f32 %v3204, %v3217
    %v3219 = vpop.f32.mrf.mxu0
    %v3220 = vadd.f32 %v3206, %v3219
    %3221 = vdwg.mxu0
    %3222 = vmatpush.bf16.msra.mxu0 %v2404
    %3223 = vmatpush.bf16.msra.mxu0 %v2396
    %3224 = vmatpush.bf16.msra.mxu0 %v2388
    %3225 = vmatpush.bf16.msra.mxu0 %v2380
    %3226 = vmatpush.bf16.msra.mxu0 %v2372
    %3227 = vmatpush.bf16.msra.mxu0 %v2364
    %3228 = vmatpush.bf16.msra.mxu0 %v2356
    %3229 = vmatpush.bf16.msra.mxu0 %v2348
    %3230 = vmatmul.bf16.gmra.mxu0 %v85
    %v3231 = vpop.f32.mrf.mxu0
    %v3232 = vadd.f32 %v3218, %v3231
    %v3233 = vpop.f32.mrf.mxu0
    %v3234 = vadd.f32 %v3220, %v3233
    %3235 = vdwg.mxu0
    %3236 = vmatpush.bf16.msra.mxu0 %v2468
    %3237 = vmatpush.bf16.msra.mxu0 %v2460
    %3238 = vmatpush.bf16.msra.mxu0 %v2452
    %3239 = vmatpush.bf16.msra.mxu0 %v2444
    %3240 = vmatpush.bf16.msra.mxu0 %v2436
    %3241 = vmatpush.bf16.msra.mxu0 %v2428
    %3242 = vmatpush.bf16.msra.mxu0 %v2420
    %3243 = vmatpush.bf16.msra.mxu0 %v2412
    %3244 = vmatmul.bf16.gmra.mxu0 %v86
    %v3245 = vpop.f32.mrf.mxu0
    %v3246 = vadd.f32 %v3232, %v3245
    %v3247 = vpop.f32.mrf.mxu0
    %v3248 = vadd.f32 %v3234, %v3247
    %3249 = vdwg.mxu0
    %3250 = vmatpush.bf16.msra.mxu0 %v2532
    %3251 = vmatpush.bf16.msra.mxu0 %v2524
    %3252 = vmatpush.bf16.msra.mxu0 %v2516
    %3253 = vmatpush.bf16.msra.mxu0 %v2508
    %3254 = vmatpush.bf16.msra.mxu0 %v2500
    %3255 = vmatpush.bf16.msra.mxu0 %v2492
    %3256 = vmatpush.bf16.msra.mxu0 %v2484
    %3257 = vmatpush.bf16.msra.mxu0 %v2476
    %3258 = vmatmul.bf16.gmra.mxu0 %v87
    %v3259 = vpop.f32.mrf.mxu0
    %v3260 = vadd.f32 %v3246, %v3259
    %v3261 = vpop.f32.mrf.mxu0
    %v3262 = vadd.f32 %v3248, %v3261
    %3263 = vdwg.mxu0
    %3264 = vmatpush.bf16.msra.mxu0 %v2596
    %3265 = vmatpush.bf16.msra.mxu0 %v2588
    %3266 = vmatpush.bf16.msra.mxu0 %v2580
    %3267 = vmatpush.bf16.msra.mxu0 %v2572
    %3268 = vmatpush.bf16.msra.mxu0 %v2564
    %3269 = vmatpush.bf16.msra.mxu0 %v2556
    %3270 = vmatpush.bf16.msra.mxu0 %v2548
    %3271 = vmatpush.bf16.msra.mxu0 %v2540
    %3272 = vmatmul.bf16.gmra.mxu0 %v88
    %v3273 = vpop.f32.mrf.mxu0
    %v3274 = vadd.f32 %v3260, %v3273
    %v3275 = vpop.f32.mrf.mxu0
    %v3276 = vadd.f32 %v3262, %v3275
    %3277 = vdwg.mxu0
    %3278 = vmatpush.bf16.msra.mxu0 %v2660
    %3279 = vmatpush.bf16.msra.mxu0 %v2652
    %3280 = vmatpush.bf16.msra.mxu0 %v2644
    %3281 = vmatpush.bf16.msra.mxu0 %v2636
    %3282 = vmatpush.bf16.msra.mxu0 %v2628
    %3283 = vmatpush.bf16.msra.mxu0 %v2620
    %3284 = vmatpush.bf16.msra.mxu0 %v2612
    %3285 = vmatpush.bf16.msra.mxu0 %v2604
    %3286 = vmatmul.bf16.gmra.mxu0 %v89
    %v3287 = vpop.f32.mrf.mxu0
    %v3288 = vadd.f32 %v3274, %v3287
    %v3289 = vpop.f32.mrf.mxu0
    %v3290 = vadd.f32 %v3276, %v3289
    %3291 = vdwg.mxu0
    %3292 = vmatpush.bf16.msra.mxu0 %v2213
    %3293 = vmatpush.bf16.msra.mxu0 %v2205
    %3294 = vmatpush.bf16.msra.mxu0 %v2197
    %3295 = vmatpush.bf16.msra.mxu0 %v2189
    %3296 = vmatpush.bf16.msra.mxu0 %v2181
    %3297 = vmatpush.bf16.msra.mxu0 %v2173
    %3298 = vmatpush.bf16.msra.mxu0 %v2165
    %3299 = vmatpush.bf16.msra.mxu0 %v2157
    %3300 = vmatmul.bf16.gmra.mxu0 %v82
    %v3301 = vpop.f32.mrf.mxu0
    %v3302 = vadd.f32 %v605, %v3301
    %v3303 = vpop.f32.mrf.mxu0
    %v3304 = vadd.f32 %v605, %v3303
    %3305 = vdwg.mxu0
    %3306 = vmatpush.bf16.msra.mxu0 %v2277
    %3307 = vmatpush.bf16.msra.mxu0 %v2269
    %3308 = vmatpush.bf16.msra.mxu0 %v2261
    %3309 = vmatpush.bf16.msra.mxu0 %v2253
    %3310 = vmatpush.bf16.msra.mxu0 %v2245
    %3311 = vmatpush.bf16.msra.mxu0 %v2237
    %3312 = vmatpush.bf16.msra.mxu0 %v2229
    %3313 = vmatpush.bf16.msra.mxu0 %v2221
    %3314 = vmatmul.bf16.gmra.mxu0 %v83
    %v3315 = vpop.f32.mrf.mxu0
    %v3316 = vadd.f32 %v3302, %v3315
    %v3317 = vpop.f32.mrf.mxu0
    %v3318 = vadd.f32 %v3304, %v3317
    %3319 = vdwg.mxu0
    %3320 = vmatpush.bf16.msra.mxu0 %v2341
    %3321 = vmatpush.bf16.msra.mxu0 %v2333
    %3322 = vmatpush.bf16.msra.mxu0 %v2325
    %3323 = vmatpush.bf16.msra.mxu0 %v2317
    %3324 = vmatpush.bf16.msra.mxu0 %v2309
    %3325 = vmatpush.bf16.msra.mxu0 %v2301
    %3326 = vmatpush.bf16.msra.mxu0 %v2293
    %3327 = vmatpush.bf16.msra.mxu0 %v2285
    %3328 = vmatmul.bf16.gmra.mxu0 %v84
    %v3329 = vpop.f32.mrf.mxu0
    %v3330 = vadd.f32 %v3316, %v3329
    %v3331 = vpop.f32.mrf.mxu0
    %v3332 = vadd.f32 %v3318, %v3331
    %3333 = vdwg.mxu0
    %3334 = vmatpush.bf16.msra.mxu0 %v2405
    %3335 = vmatpush.bf16.msra.mxu0 %v2397
    %3336 = vmatpush.bf16.msra.mxu0 %v2389
    %3337 = vmatpush.bf16.msra.mxu0 %v2381
    %3338 = vmatpush.bf16.msra.mxu0 %v2373
    %3339 = vmatpush.bf16.msra.mxu0 %v2365
    %3340 = vmatpush.bf16.msra.mxu0 %v2357
    %3341 = vmatpush.bf16.msra.mxu0 %v2349
    %3342 = vmatmul.bf16.gmra.mxu0 %v85
    %v3343 = vpop.f32.mrf.mxu0
    %v3344 = vadd.f32 %v3330, %v3343
    %v3345 = vpop.f32.mrf.mxu0
    %v3346 = vadd.f32 %v3332, %v3345
    %3347 = vdwg.mxu0
    %3348 = vmatpush.bf16.msra.mxu0 %v2469
    %3349 = vmatpush.bf16.msra.mxu0 %v2461
    %3350 = vmatpush.bf16.msra.mxu0 %v2453
    %3351 = vmatpush.bf16.msra.mxu0 %v2445
    %3352 = vmatpush.bf16.msra.mxu0 %v2437
    %3353 = vmatpush.bf16.msra.mxu0 %v2429
    %3354 = vmatpush.bf16.msra.mxu0 %v2421
    %3355 = vmatpush.bf16.msra.mxu0 %v2413
    %3356 = vmatmul.bf16.gmra.mxu0 %v86
    %v3357 = vpop.f32.mrf.mxu0
    %v3358 = vadd.f32 %v3344, %v3357
    %v3359 = vpop.f32.mrf.mxu0
    %v3360 = vadd.f32 %v3346, %v3359
    %3361 = vdwg.mxu0
    %3362 = vmatpush.bf16.msra.mxu0 %v2533
    %3363 = vmatpush.bf16.msra.mxu0 %v2525
    %3364 = vmatpush.bf16.msra.mxu0 %v2517
    %3365 = vmatpush.bf16.msra.mxu0 %v2509
    %3366 = vmatpush.bf16.msra.mxu0 %v2501
    %3367 = vmatpush.bf16.msra.mxu0 %v2493
    %3368 = vmatpush.bf16.msra.mxu0 %v2485
    %3369 = vmatpush.bf16.msra.mxu0 %v2477
    %3370 = vmatmul.bf16.gmra.mxu0 %v87
    %v3371 = vpop.f32.mrf.mxu0
    %v3372 = vadd.f32 %v3358, %v3371
    %v3373 = vpop.f32.mrf.mxu0
    %v3374 = vadd.f32 %v3360, %v3373
    %3375 = vdwg.mxu0
    %3376 = vmatpush.bf16.msra.mxu0 %v2597
    %3377 = vmatpush.bf16.msra.mxu0 %v2589
    %3378 = vmatpush.bf16.msra.mxu0 %v2581
    %3379 = vmatpush.bf16.msra.mxu0 %v2573
    %3380 = vmatpush.bf16.msra.mxu0 %v2565
    %3381 = vmatpush.bf16.msra.mxu0 %v2557
    %3382 = vmatpush.bf16.msra.mxu0 %v2549
    %3383 = vmatpush.bf16.msra.mxu0 %v2541
    %3384 = vmatmul.bf16.gmra.mxu0 %v88
    %v3385 = vpop.f32.mrf.mxu0
    %v3386 = vadd.f32 %v3372, %v3385
    %v3387 = vpop.f32.mrf.mxu0
    %v3388 = vadd.f32 %v3374, %v3387
    %3389 = vdwg.mxu0
    %3390 = vmatpush.bf16.msra.mxu0 %v2661
    %3391 = vmatpush.bf16.msra.mxu0 %v2653
    %3392 = vmatpush.bf16.msra.mxu0 %v2645
    %3393 = vmatpush.bf16.msra.mxu0 %v2637
    %3394 = vmatpush.bf16.msra.mxu0 %v2629
    %3395 = vmatpush.bf16.msra.mxu0 %v2621
    %3396 = vmatpush.bf16.msra.mxu0 %v2613
    %3397 = vmatpush.bf16.msra.mxu0 %v2605
    %3398 = vmatmul.bf16.gmra.mxu0 %v89
    %v3399 = vpop.f32.mrf.mxu0
    %v3400 = vadd.f32 %v3386, %v3399
    %v3401 = vpop.f32.mrf.mxu0
    %v3402 = vadd.f32 %v3388, %v3401
    %3403 = vdwg.mxu0
    %3404 = vmatpush.bf16.msra.mxu0 %v2214
    %3405 = vmatpush.bf16.msra.mxu0 %v2206
    %3406 = vmatpush.bf16.msra.mxu0 %v2198
    %3407 = vmatpush.bf16.msra.mxu0 %v2190
    %3408 = vmatpush.bf16.msra.mxu0 %v2182
    %3409 = vmatpush.bf16.msra.mxu0 %v2174
    %3410 = vmatpush.bf16.msra.mxu0 %v2166
    %3411 = vmatpush.bf16.msra.mxu0 %v2158
    %3412 = vmatmul.bf16.gmra.mxu0 %v82
    %v3413 = vpop.f32.mrf.mxu0
    %v3414 = vadd.f32 %v606, %v3413
    %v3415 = vpop.f32.mrf.mxu0
    %v3416 = vadd.f32 %v606, %v3415
    %3417 = vdwg.mxu0
    %3418 = vmatpush.bf16.msra.mxu0 %v2278
    %3419 = vmatpush.bf16.msra.mxu0 %v2270
    %3420 = vmatpush.bf16.msra.mxu0 %v2262
    %3421 = vmatpush.bf16.msra.mxu0 %v2254
    %3422 = vmatpush.bf16.msra.mxu0 %v2246
    %3423 = vmatpush.bf16.msra.mxu0 %v2238
    %3424 = vmatpush.bf16.msra.mxu0 %v2230
    %3425 = vmatpush.bf16.msra.mxu0 %v2222
    %3426 = vmatmul.bf16.gmra.mxu0 %v83
    %v3427 = vpop.f32.mrf.mxu0
    %v3428 = vadd.f32 %v3414, %v3427
    %v3429 = vpop.f32.mrf.mxu0
    %v3430 = vadd.f32 %v3416, %v3429
    %3431 = vdwg.mxu0
    %3432 = vmatpush.bf16.msra.mxu0 %v2342
    %3433 = vmatpush.bf16.msra.mxu0 %v2334
    %3434 = vmatpush.bf16.msra.mxu0 %v2326
    %3435 = vmatpush.bf16.msra.mxu0 %v2318
    %3436 = vmatpush.bf16.msra.mxu0 %v2310
    %3437 = vmatpush.bf16.msra.mxu0 %v2302
    %3438 = vmatpush.bf16.msra.mxu0 %v2294
    %3439 = vmatpush.bf16.msra.mxu0 %v2286
    %3440 = vmatmul.bf16.gmra.mxu0 %v84
    %v3441 = vpop.f32.mrf.mxu0
    %v3442 = vadd.f32 %v3428, %v3441
    %v3443 = vpop.f32.mrf.mxu0
    %v3444 = vadd.f32 %v3430, %v3443
    %3445 = vdwg.mxu0
    %3446 = vmatpush.bf16.msra.mxu0 %v2406
    %3447 = vmatpush.bf16.msra.mxu0 %v2398
    %3448 = vmatpush.bf16.msra.mxu0 %v2390
    %3449 = vmatpush.bf16.msra.mxu0 %v2382
    %3450 = vmatpush.bf16.msra.mxu0 %v2374
    %3451 = vmatpush.bf16.msra.mxu0 %v2366
    %3452 = vmatpush.bf16.msra.mxu0 %v2358
    %3453 = vmatpush.bf16.msra.mxu0 %v2350
    %3454 = vmatmul.bf16.gmra.mxu0 %v85
    %v3455 = vpop.f32.mrf.mxu0
    %v3456 = vadd.f32 %v3442, %v3455
    %v3457 = vpop.f32.mrf.mxu0
    %v3458 = vadd.f32 %v3444, %v3457
    %3459 = vdwg.mxu0
    %3460 = vmatpush.bf16.msra.mxu0 %v2470
    %3461 = vmatpush.bf16.msra.mxu0 %v2462
    %3462 = vmatpush.bf16.msra.mxu0 %v2454
    %3463 = vmatpush.bf16.msra.mxu0 %v2446
    %3464 = vmatpush.bf16.msra.mxu0 %v2438
    %3465 = vmatpush.bf16.msra.mxu0 %v2430
    %3466 = vmatpush.bf16.msra.mxu0 %v2422
    %3467 = vmatpush.bf16.msra.mxu0 %v2414
    %3468 = vmatmul.bf16.gmra.mxu0 %v86
    %v3469 = vpop.f32.mrf.mxu0
    %v3470 = vadd.f32 %v3456, %v3469
    %v3471 = vpop.f32.mrf.mxu0
    %v3472 = vadd.f32 %v3458, %v3471
    %3473 = vdwg.mxu0
    %3474 = vmatpush.bf16.msra.mxu0 %v2534
    %3475 = vmatpush.bf16.msra.mxu0 %v2526
    %3476 = vmatpush.bf16.msra.mxu0 %v2518
    %3477 = vmatpush.bf16.msra.mxu0 %v2510
    %3478 = vmatpush.bf16.msra.mxu0 %v2502
    %3479 = vmatpush.bf16.msra.mxu0 %v2494
    %3480 = vmatpush.bf16.msra.mxu0 %v2486
    %3481 = vmatpush.bf16.msra.mxu0 %v2478
    %3482 = vmatmul.bf16.gmra.mxu0 %v87
    %v3483 = vpop.f32.mrf.mxu0
    %v3484 = vadd.f32 %v3470, %v3483
    %v3485 = vpop.f32.mrf.mxu0
    %v3486 = vadd.f32 %v3472, %v3485
    %3487 = vdwg.mxu0
    %3488 = vmatpush.bf16.msra.mxu0 %v2598
    %3489 = vmatpush.bf16.msra.mxu0 %v2590
    %3490 = vmatpush.bf16.msra.mxu0 %v2582
    %3491 = vmatpush.bf16.msra.mxu0 %v2574
    %3492 = vmatpush.bf16.msra.mxu0 %v2566
    %3493 = vmatpush.bf16.msra.mxu0 %v2558
    %3494 = vmatpush.bf16.msra.mxu0 %v2550
    %3495 = vmatpush.bf16.msra.mxu0 %v2542
    %3496 = vmatmul.bf16.gmra.mxu0 %v88
    %v3497 = vpop.f32.mrf.mxu0
    %v3498 = vadd.f32 %v3484, %v3497
    %v3499 = vpop.f32.mrf.mxu0
    %v3500 = vadd.f32 %v3486, %v3499
    %3501 = vdwg.mxu0
    %3502 = vmatpush.bf16.msra.mxu0 %v2662
    %3503 = vmatpush.bf16.msra.mxu0 %v2654
    %3504 = vmatpush.bf16.msra.mxu0 %v2646
    %3505 = vmatpush.bf16.msra.mxu0 %v2638
    %3506 = vmatpush.bf16.msra.mxu0 %v2630
    %3507 = vmatpush.bf16.msra.mxu0 %v2622
    %3508 = vmatpush.bf16.msra.mxu0 %v2614
    %3509 = vmatpush.bf16.msra.mxu0 %v2606
    %3510 = vmatmul.bf16.gmra.mxu0 %v89
    %v3511 = vpop.f32.mrf.mxu0
    %v3512 = vadd.f32 %v3498, %v3511
    %v3513 = vpop.f32.mrf.mxu0
    %v3514 = vadd.f32 %v3500, %v3513
    %3515 = vdwg.mxu0
    %3516 = vmatpush.bf16.msra.mxu0 %v2215
    %3517 = vmatpush.bf16.msra.mxu0 %v2207
    %3518 = vmatpush.bf16.msra.mxu0 %v2199
    %3519 = vmatpush.bf16.msra.mxu0 %v2191
    %3520 = vmatpush.bf16.msra.mxu0 %v2183
    %3521 = vmatpush.bf16.msra.mxu0 %v2175
    %3522 = vmatpush.bf16.msra.mxu0 %v2167
    %3523 = vmatpush.bf16.msra.mxu0 %v2159
    %3524 = vmatmul.bf16.gmra.mxu0 %v82
    %v3525 = vpop.f32.mrf.mxu0
    %v3526 = vadd.f32 %v607, %v3525
    %v3527 = vpop.f32.mrf.mxu0
    %v3528 = vadd.f32 %v607, %v3527
    %3529 = vdwg.mxu0
    %3530 = vmatpush.bf16.msra.mxu0 %v2279
    %3531 = vmatpush.bf16.msra.mxu0 %v2271
    %3532 = vmatpush.bf16.msra.mxu0 %v2263
    %3533 = vmatpush.bf16.msra.mxu0 %v2255
    %3534 = vmatpush.bf16.msra.mxu0 %v2247
    %3535 = vmatpush.bf16.msra.mxu0 %v2239
    %3536 = vmatpush.bf16.msra.mxu0 %v2231
    %3537 = vmatpush.bf16.msra.mxu0 %v2223
    %3538 = vmatmul.bf16.gmra.mxu0 %v83
    %v3539 = vpop.f32.mrf.mxu0
    %v3540 = vadd.f32 %v3526, %v3539
    %v3541 = vpop.f32.mrf.mxu0
    %v3542 = vadd.f32 %v3528, %v3541
    %3543 = vdwg.mxu0
    %3544 = vmatpush.bf16.msra.mxu0 %v2343
    %3545 = vmatpush.bf16.msra.mxu0 %v2335
    %3546 = vmatpush.bf16.msra.mxu0 %v2327
    %3547 = vmatpush.bf16.msra.mxu0 %v2319
    %3548 = vmatpush.bf16.msra.mxu0 %v2311
    %3549 = vmatpush.bf16.msra.mxu0 %v2303
    %3550 = vmatpush.bf16.msra.mxu0 %v2295
    %3551 = vmatpush.bf16.msra.mxu0 %v2287
    %3552 = vmatmul.bf16.gmra.mxu0 %v84
    %v3553 = vpop.f32.mrf.mxu0
    %v3554 = vadd.f32 %v3540, %v3553
    %v3555 = vpop.f32.mrf.mxu0
    %v3556 = vadd.f32 %v3542, %v3555
    %3557 = vdwg.mxu0
    %3558 = vmatpush.bf16.msra.mxu0 %v2407
    %3559 = vmatpush.bf16.msra.mxu0 %v2399
    %3560 = vmatpush.bf16.msra.mxu0 %v2391
    %3561 = vmatpush.bf16.msra.mxu0 %v2383
    %3562 = vmatpush.bf16.msra.mxu0 %v2375
    %3563 = vmatpush.bf16.msra.mxu0 %v2367
    %3564 = vmatpush.bf16.msra.mxu0 %v2359
    %3565 = vmatpush.bf16.msra.mxu0 %v2351
    %3566 = vmatmul.bf16.gmra.mxu0 %v85
    %v3567 = vpop.f32.mrf.mxu0
    %v3568 = vadd.f32 %v3554, %v3567
    %v3569 = vpop.f32.mrf.mxu0
    %v3570 = vadd.f32 %v3556, %v3569
    %3571 = vdwg.mxu0
    %3572 = vmatpush.bf16.msra.mxu0 %v2471
    %3573 = vmatpush.bf16.msra.mxu0 %v2463
    %3574 = vmatpush.bf16.msra.mxu0 %v2455
    %3575 = vmatpush.bf16.msra.mxu0 %v2447
    %3576 = vmatpush.bf16.msra.mxu0 %v2439
    %3577 = vmatpush.bf16.msra.mxu0 %v2431
    %3578 = vmatpush.bf16.msra.mxu0 %v2423
    %3579 = vmatpush.bf16.msra.mxu0 %v2415
    %3580 = vmatmul.bf16.gmra.mxu0 %v86
    %v3581 = vpop.f32.mrf.mxu0
    %v3582 = vadd.f32 %v3568, %v3581
    %v3583 = vpop.f32.mrf.mxu0
    %v3584 = vadd.f32 %v3570, %v3583
    %3585 = vdwg.mxu0
    %3586 = vmatpush.bf16.msra.mxu0 %v2535
    %3587 = vmatpush.bf16.msra.mxu0 %v2527
    %3588 = vmatpush.bf16.msra.mxu0 %v2519
    %3589 = vmatpush.bf16.msra.mxu0 %v2511
    %3590 = vmatpush.bf16.msra.mxu0 %v2503
    %3591 = vmatpush.bf16.msra.mxu0 %v2495
    %3592 = vmatpush.bf16.msra.mxu0 %v2487
    %3593 = vmatpush.bf16.msra.mxu0 %v2479
    %3594 = vmatmul.bf16.gmra.mxu0 %v87
    %v3595 = vpop.f32.mrf.mxu0
    %v3596 = vadd.f32 %v3582, %v3595
    %v3597 = vpop.f32.mrf.mxu0
    %v3598 = vadd.f32 %v3584, %v3597
    %3599 = vdwg.mxu0
    %3600 = vmatpush.bf16.msra.mxu0 %v2599
    %3601 = vmatpush.bf16.msra.mxu0 %v2591
    %3602 = vmatpush.bf16.msra.mxu0 %v2583
    %3603 = vmatpush.bf16.msra.mxu0 %v2575
    %3604 = vmatpush.bf16.msra.mxu0 %v2567
    %3605 = vmatpush.bf16.msra.mxu0 %v2559
    %3606 = vmatpush.bf16.msra.mxu0 %v2551
    %3607 = vmatpush.bf16.msra.mxu0 %v2543
    %3608 = vmatmul.bf16.gmra.mxu0 %v88
    %v3609 = vpop.f32.mrf.mxu0
    %v3610 = vadd.f32 %v3596, %v3609
    %v3611 = vpop.f32.mrf.mxu0
    %v3612 = vadd.f32 %v3598, %v3611
    %3613 = vdwg.mxu0
    %3614 = vmatpush.bf16.msra.mxu0 %v2663
    %3615 = vmatpush.bf16.msra.mxu0 %v2655
    %3616 = vmatpush.bf16.msra.mxu0 %v2647
    %3617 = vmatpush.bf16.msra.mxu0 %v2639
    %3618 = vmatpush.bf16.msra.mxu0 %v2631
    %3619 = vmatpush.bf16.msra.mxu0 %v2623
    %3620 = vmatpush.bf16.msra.mxu0 %v2615
    %3621 = vmatpush.bf16.msra.mxu0 %v2607
    %3622 = vmatmul.bf16.gmra.mxu0 %v89
    %v3623 = vpop.f32.mrf.mxu0
    %v3624 = vadd.f32 %v3610, %v3623
    %v3625 = vpop.f32.mrf.mxu0
    %v3626 = vadd.f32 %v3612, %v3625
    %3627 = vdwg.mxu0
    %3628 = vmatpush.bf16.msra.mxu0 %v2216
    %3629 = vmatpush.bf16.msra.mxu0 %v2208
    %3630 = vmatpush.bf16.msra.mxu0 %v2200
    %3631 = vmatpush.bf16.msra.mxu0 %v2192
    %3632 = vmatpush.bf16.msra.mxu0 %v2184
    %3633 = vmatpush.bf16.msra.mxu0 %v2176
    %3634 = vmatpush.bf16.msra.mxu0 %v2168
    %3635 = vmatpush.bf16.msra.mxu0 %v2160
    %3636 = vmatmul.bf16.gmra.mxu0 %v82
    %v3637 = vpop.f32.mrf.mxu0
    %v3638 = vadd.f32 %v608, %v3637
    %v3639 = vpop.f32.mrf.mxu0
    %v3640 = vadd.f32 %v608, %v3639
    %3641 = vdwg.mxu0
    %3642 = vmatpush.bf16.msra.mxu0 %v2280
    %3643 = vmatpush.bf16.msra.mxu0 %v2272
    %3644 = vmatpush.bf16.msra.mxu0 %v2264
    %3645 = vmatpush.bf16.msra.mxu0 %v2256
    %3646 = vmatpush.bf16.msra.mxu0 %v2248
    %3647 = vmatpush.bf16.msra.mxu0 %v2240
    %3648 = vmatpush.bf16.msra.mxu0 %v2232
    %3649 = vmatpush.bf16.msra.mxu0 %v2224
    %3650 = vmatmul.bf16.gmra.mxu0 %v83
    %v3651 = vpop.f32.mrf.mxu0
    %v3652 = vadd.f32 %v3638, %v3651
    %v3653 = vpop.f32.mrf.mxu0
    %v3654 = vadd.f32 %v3640, %v3653
    %3655 = vdwg.mxu0
    %3656 = vmatpush.bf16.msra.mxu0 %v2344
    %3657 = vmatpush.bf16.msra.mxu0 %v2336
    %3658 = vmatpush.bf16.msra.mxu0 %v2328
    %3659 = vmatpush.bf16.msra.mxu0 %v2320
    %3660 = vmatpush.bf16.msra.mxu0 %v2312
    %3661 = vmatpush.bf16.msra.mxu0 %v2304
    %3662 = vmatpush.bf16.msra.mxu0 %v2296
    %3663 = vmatpush.bf16.msra.mxu0 %v2288
    %3664 = vmatmul.bf16.gmra.mxu0 %v84
    %v3665 = vpop.f32.mrf.mxu0
    %v3666 = vadd.f32 %v3652, %v3665
    %v3667 = vpop.f32.mrf.mxu0
    %v3668 = vadd.f32 %v3654, %v3667
    %3669 = vdwg.mxu0
    %3670 = vmatpush.bf16.msra.mxu0 %v2408
    %3671 = vmatpush.bf16.msra.mxu0 %v2400
    %3672 = vmatpush.bf16.msra.mxu0 %v2392
    %3673 = vmatpush.bf16.msra.mxu0 %v2384
    %3674 = vmatpush.bf16.msra.mxu0 %v2376
    %3675 = vmatpush.bf16.msra.mxu0 %v2368
    %3676 = vmatpush.bf16.msra.mxu0 %v2360
    %3677 = vmatpush.bf16.msra.mxu0 %v2352
    %3678 = vmatmul.bf16.gmra.mxu0 %v85
    %v3679 = vpop.f32.mrf.mxu0
    %v3680 = vadd.f32 %v3666, %v3679
    %v3681 = vpop.f32.mrf.mxu0
    %v3682 = vadd.f32 %v3668, %v3681
    %3683 = vdwg.mxu0
    %3684 = vmatpush.bf16.msra.mxu0 %v2472
    %3685 = vmatpush.bf16.msra.mxu0 %v2464
    %3686 = vmatpush.bf16.msra.mxu0 %v2456
    %3687 = vmatpush.bf16.msra.mxu0 %v2448
    %3688 = vmatpush.bf16.msra.mxu0 %v2440
    %3689 = vmatpush.bf16.msra.mxu0 %v2432
    %3690 = vmatpush.bf16.msra.mxu0 %v2424
    %3691 = vmatpush.bf16.msra.mxu0 %v2416
    %3692 = vmatmul.bf16.gmra.mxu0 %v86
    %v3693 = vpop.f32.mrf.mxu0
    %v3694 = vadd.f32 %v3680, %v3693
    %v3695 = vpop.f32.mrf.mxu0
    %v3696 = vadd.f32 %v3682, %v3695
    %3697 = vdwg.mxu0
    %3698 = vmatpush.bf16.msra.mxu0 %v2536
    %3699 = vmatpush.bf16.msra.mxu0 %v2528
    %3700 = vmatpush.bf16.msra.mxu0 %v2520
    %3701 = vmatpush.bf16.msra.mxu0 %v2512
    %3702 = vmatpush.bf16.msra.mxu0 %v2504
    %3703 = vmatpush.bf16.msra.mxu0 %v2496
    %3704 = vmatpush.bf16.msra.mxu0 %v2488
    %3705 = vmatpush.bf16.msra.mxu0 %v2480
    %3706 = vmatmul.bf16.gmra.mxu0 %v87
    %v3707 = vpop.f32.mrf.mxu0
    %v3708 = vadd.f32 %v3694, %v3707
    %v3709 = vpop.f32.mrf.mxu0
    %v3710 = vadd.f32 %v3696, %v3709
    %3711 = vdwg.mxu0
    %3712 = vmatpush.bf16.msra.mxu0 %v2600
    %3713 = vmatpush.bf16.msra.mxu0 %v2592
    %3714 = vmatpush.bf16.msra.mxu0 %v2584
    %3715 = vmatpush.bf16.msra.mxu0 %v2576
    %3716 = vmatpush.bf16.msra.mxu0 %v2568
    %3717 = vmatpush.bf16.msra.mxu0 %v2560
    %3718 = vmatpush.bf16.msra.mxu0 %v2552
    %3719 = vmatpush.bf16.msra.mxu0 %v2544
    %3720 = vmatmul.bf16.gmra.mxu0 %v88
    %v3721 = vpop.f32.mrf.mxu0
    %v3722 = vadd.f32 %v3708, %v3721
    %v3723 = vpop.f32.mrf.mxu0
    %v3724 = vadd.f32 %v3710, %v3723
    %3725 = vdwg.mxu0
    %3726 = vmatpush.bf16.msra.mxu0 %v2664
    %3727 = vmatpush.bf16.msra.mxu0 %v2656
    %3728 = vmatpush.bf16.msra.mxu0 %v2648
    %3729 = vmatpush.bf16.msra.mxu0 %v2640
    %3730 = vmatpush.bf16.msra.mxu0 %v2632
    %3731 = vmatpush.bf16.msra.mxu0 %v2624
    %3732 = vmatpush.bf16.msra.mxu0 %v2616
    %3733 = vmatpush.bf16.msra.mxu0 %v2608
    %3734 = vmatmul.bf16.gmra.mxu0 %v89
    %v3735 = vpop.f32.mrf.mxu0
    %v3736 = vadd.f32 %v3722, %v3735
    %v3737 = vpop.f32.mrf.mxu0
    %v3738 = vadd.f32 %v3724, %v3737
    %3739 = vdwg.mxu0
    %3740 = vmatpush.bf16.msra.mxu0 %v2217
    %3741 = vmatpush.bf16.msra.mxu0 %v2209
    %3742 = vmatpush.bf16.msra.mxu0 %v2201
    %3743 = vmatpush.bf16.msra.mxu0 %v2193
    %3744 = vmatpush.bf16.msra.mxu0 %v2185
    %3745 = vmatpush.bf16.msra.mxu0 %v2177
    %3746 = vmatpush.bf16.msra.mxu0 %v2169
    %3747 = vmatpush.bf16.msra.mxu0 %v2161
    %3748 = vmatmul.bf16.gmra.mxu0 %v82
    %v3749 = vpop.f32.mrf.mxu0
    %v3750 = vadd.f32 %v609, %v3749
    %v3751 = vpop.f32.mrf.mxu0
    %v3752 = vadd.f32 %v609, %v3751
    %3753 = vdwg.mxu0
    %3754 = vmatpush.bf16.msra.mxu0 %v2281
    %3755 = vmatpush.bf16.msra.mxu0 %v2273
    %3756 = vmatpush.bf16.msra.mxu0 %v2265
    %3757 = vmatpush.bf16.msra.mxu0 %v2257
    %3758 = vmatpush.bf16.msra.mxu0 %v2249
    %3759 = vmatpush.bf16.msra.mxu0 %v2241
    %3760 = vmatpush.bf16.msra.mxu0 %v2233
    %3761 = vmatpush.bf16.msra.mxu0 %v2225
    %3762 = vmatmul.bf16.gmra.mxu0 %v83
    %v3763 = vpop.f32.mrf.mxu0
    %v3764 = vadd.f32 %v3750, %v3763
    %v3765 = vpop.f32.mrf.mxu0
    %v3766 = vadd.f32 %v3752, %v3765
    %3767 = vdwg.mxu0
    %3768 = vmatpush.bf16.msra.mxu0 %v2345
    %3769 = vmatpush.bf16.msra.mxu0 %v2337
    %3770 = vmatpush.bf16.msra.mxu0 %v2329
    %3771 = vmatpush.bf16.msra.mxu0 %v2321
    %3772 = vmatpush.bf16.msra.mxu0 %v2313
    %3773 = vmatpush.bf16.msra.mxu0 %v2305
    %3774 = vmatpush.bf16.msra.mxu0 %v2297
    %3775 = vmatpush.bf16.msra.mxu0 %v2289
    %3776 = vmatmul.bf16.gmra.mxu0 %v84
    %v3777 = vpop.f32.mrf.mxu0
    %v3778 = vadd.f32 %v3764, %v3777
    %v3779 = vpop.f32.mrf.mxu0
    %v3780 = vadd.f32 %v3766, %v3779
    %3781 = vdwg.mxu0
    %3782 = vmatpush.bf16.msra.mxu0 %v2409
    %3783 = vmatpush.bf16.msra.mxu0 %v2401
    %3784 = vmatpush.bf16.msra.mxu0 %v2393
    %3785 = vmatpush.bf16.msra.mxu0 %v2385
    %3786 = vmatpush.bf16.msra.mxu0 %v2377
    %3787 = vmatpush.bf16.msra.mxu0 %v2369
    %3788 = vmatpush.bf16.msra.mxu0 %v2361
    %3789 = vmatpush.bf16.msra.mxu0 %v2353
    %3790 = vmatmul.bf16.gmra.mxu0 %v85
    %v3791 = vpop.f32.mrf.mxu0
    %v3792 = vadd.f32 %v3778, %v3791
    %v3793 = vpop.f32.mrf.mxu0
    %v3794 = vadd.f32 %v3780, %v3793
    %3795 = vdwg.mxu0
    %3796 = vmatpush.bf16.msra.mxu0 %v2473
    %3797 = vmatpush.bf16.msra.mxu0 %v2465
    %3798 = vmatpush.bf16.msra.mxu0 %v2457
    %3799 = vmatpush.bf16.msra.mxu0 %v2449
    %3800 = vmatpush.bf16.msra.mxu0 %v2441
    %3801 = vmatpush.bf16.msra.mxu0 %v2433
    %3802 = vmatpush.bf16.msra.mxu0 %v2425
    %3803 = vmatpush.bf16.msra.mxu0 %v2417
    %3804 = vmatmul.bf16.gmra.mxu0 %v86
    %v3805 = vpop.f32.mrf.mxu0
    %v3806 = vadd.f32 %v3792, %v3805
    %v3807 = vpop.f32.mrf.mxu0
    %v3808 = vadd.f32 %v3794, %v3807
    %3809 = vdwg.mxu0
    %3810 = vmatpush.bf16.msra.mxu0 %v2537
    %3811 = vmatpush.bf16.msra.mxu0 %v2529
    %3812 = vmatpush.bf16.msra.mxu0 %v2521
    %3813 = vmatpush.bf16.msra.mxu0 %v2513
    %3814 = vmatpush.bf16.msra.mxu0 %v2505
    %3815 = vmatpush.bf16.msra.mxu0 %v2497
    %3816 = vmatpush.bf16.msra.mxu0 %v2489
    %3817 = vmatpush.bf16.msra.mxu0 %v2481
    %3818 = vmatmul.bf16.gmra.mxu0 %v87
    %v3819 = vpop.f32.mrf.mxu0
    %v3820 = vadd.f32 %v3806, %v3819
    %v3821 = vpop.f32.mrf.mxu0
    %v3822 = vadd.f32 %v3808, %v3821
    %3823 = vdwg.mxu0
    %3824 = vmatpush.bf16.msra.mxu0 %v2601
    %3825 = vmatpush.bf16.msra.mxu0 %v2593
    %3826 = vmatpush.bf16.msra.mxu0 %v2585
    %3827 = vmatpush.bf16.msra.mxu0 %v2577
    %3828 = vmatpush.bf16.msra.mxu0 %v2569
    %3829 = vmatpush.bf16.msra.mxu0 %v2561
    %3830 = vmatpush.bf16.msra.mxu0 %v2553
    %3831 = vmatpush.bf16.msra.mxu0 %v2545
    %3832 = vmatmul.bf16.gmra.mxu0 %v88
    %v3833 = vpop.f32.mrf.mxu0
    %v3834 = vadd.f32 %v3820, %v3833
    %v3835 = vpop.f32.mrf.mxu0
    %v3836 = vadd.f32 %v3822, %v3835
    %3837 = vdwg.mxu0
    %3838 = vmatpush.bf16.msra.mxu0 %v2665
    %3839 = vmatpush.bf16.msra.mxu0 %v2657
    %3840 = vmatpush.bf16.msra.mxu0 %v2649
    %3841 = vmatpush.bf16.msra.mxu0 %v2641
    %3842 = vmatpush.bf16.msra.mxu0 %v2633
    %3843 = vmatpush.bf16.msra.mxu0 %v2625
    %3844 = vmatpush.bf16.msra.mxu0 %v2617
    %3845 = vmatpush.bf16.msra.mxu0 %v2609
    %3846 = vmatmul.bf16.gmra.mxu0 %v89
    %v3847 = vpop.f32.mrf.mxu0
    %v3848 = vadd.f32 %v3834, %v3847
    %v3849 = vpop.f32.mrf.mxu0
    %v3850 = vadd.f32 %v3836, %v3849
    %3851 = vdwg.mxu0
    %3852 = vmatpush.bf16.msra.mxu0 %v2218
    %3853 = vmatpush.bf16.msra.mxu0 %v2210
    %3854 = vmatpush.bf16.msra.mxu0 %v2202
    %3855 = vmatpush.bf16.msra.mxu0 %v2194
    %3856 = vmatpush.bf16.msra.mxu0 %v2186
    %3857 = vmatpush.bf16.msra.mxu0 %v2178
    %3858 = vmatpush.bf16.msra.mxu0 %v2170
    %3859 = vmatpush.bf16.msra.mxu0 %v2162
    %3860 = vmatmul.bf16.gmra.mxu0 %v82
    %v3861 = vpop.f32.mrf.mxu0
    %v3862 = vadd.f32 %v610, %v3861
    %v3863 = vpop.f32.mrf.mxu0
    %v3864 = vadd.f32 %v610, %v3863
    %3865 = vdwg.mxu0
    %3866 = vmatpush.bf16.msra.mxu0 %v2282
    %3867 = vmatpush.bf16.msra.mxu0 %v2274
    %3868 = vmatpush.bf16.msra.mxu0 %v2266
    %3869 = vmatpush.bf16.msra.mxu0 %v2258
    %3870 = vmatpush.bf16.msra.mxu0 %v2250
    %3871 = vmatpush.bf16.msra.mxu0 %v2242
    %3872 = vmatpush.bf16.msra.mxu0 %v2234
    %3873 = vmatpush.bf16.msra.mxu0 %v2226
    %3874 = vmatmul.bf16.gmra.mxu0 %v83
    %v3875 = vpop.f32.mrf.mxu0
    %v3876 = vadd.f32 %v3862, %v3875
    %v3877 = vpop.f32.mrf.mxu0
    %v3878 = vadd.f32 %v3864, %v3877
    %3879 = vdwg.mxu0
    %3880 = vmatpush.bf16.msra.mxu0 %v2346
    %3881 = vmatpush.bf16.msra.mxu0 %v2338
    %3882 = vmatpush.bf16.msra.mxu0 %v2330
    %3883 = vmatpush.bf16.msra.mxu0 %v2322
    %3884 = vmatpush.bf16.msra.mxu0 %v2314
    %3885 = vmatpush.bf16.msra.mxu0 %v2306
    %3886 = vmatpush.bf16.msra.mxu0 %v2298
    %3887 = vmatpush.bf16.msra.mxu0 %v2290
    %3888 = vmatmul.bf16.gmra.mxu0 %v84
    %v3889 = vpop.f32.mrf.mxu0
    %v3890 = vadd.f32 %v3876, %v3889
    %v3891 = vpop.f32.mrf.mxu0
    %v3892 = vadd.f32 %v3878, %v3891
    %3893 = vdwg.mxu0
    %3894 = vmatpush.bf16.msra.mxu0 %v2410
    %3895 = vmatpush.bf16.msra.mxu0 %v2402
    %3896 = vmatpush.bf16.msra.mxu0 %v2394
    %3897 = vmatpush.bf16.msra.mxu0 %v2386
    %3898 = vmatpush.bf16.msra.mxu0 %v2378
    %3899 = vmatpush.bf16.msra.mxu0 %v2370
    %3900 = vmatpush.bf16.msra.mxu0 %v2362
    %3901 = vmatpush.bf16.msra.mxu0 %v2354
    %3902 = vmatmul.bf16.gmra.mxu0 %v85
    %v3903 = vpop.f32.mrf.mxu0
    %v3904 = vadd.f32 %v3890, %v3903
    %v3905 = vpop.f32.mrf.mxu0
    %v3906 = vadd.f32 %v3892, %v3905
    %3907 = vdwg.mxu0
    %3908 = vmatpush.bf16.msra.mxu0 %v2474
    %3909 = vmatpush.bf16.msra.mxu0 %v2466
    %3910 = vmatpush.bf16.msra.mxu0 %v2458
    %3911 = vmatpush.bf16.msra.mxu0 %v2450
    %3912 = vmatpush.bf16.msra.mxu0 %v2442
    %3913 = vmatpush.bf16.msra.mxu0 %v2434
    %3914 = vmatpush.bf16.msra.mxu0 %v2426
    %3915 = vmatpush.bf16.msra.mxu0 %v2418
    %3916 = vmatmul.bf16.gmra.mxu0 %v86
    %v3917 = vpop.f32.mrf.mxu0
    %v3918 = vadd.f32 %v3904, %v3917
    %v3919 = vpop.f32.mrf.mxu0
    %v3920 = vadd.f32 %v3906, %v3919
    %3921 = vdwg.mxu0
    %3922 = vmatpush.bf16.msra.mxu0 %v2538
    %3923 = vmatpush.bf16.msra.mxu0 %v2530
    %3924 = vmatpush.bf16.msra.mxu0 %v2522
    %3925 = vmatpush.bf16.msra.mxu0 %v2514
    %3926 = vmatpush.bf16.msra.mxu0 %v2506
    %3927 = vmatpush.bf16.msra.mxu0 %v2498
    %3928 = vmatpush.bf16.msra.mxu0 %v2490
    %3929 = vmatpush.bf16.msra.mxu0 %v2482
    %3930 = vmatmul.bf16.gmra.mxu0 %v87
    %v3931 = vpop.f32.mrf.mxu0
    %v3932 = vadd.f32 %v3918, %v3931
    %v3933 = vpop.f32.mrf.mxu0
    %v3934 = vadd.f32 %v3920, %v3933
    %3935 = vdwg.mxu0
    %3936 = vmatpush.bf16.msra.mxu0 %v2602
    %3937 = vmatpush.bf16.msra.mxu0 %v2594
    %3938 = vmatpush.bf16.msra.mxu0 %v2586
    %3939 = vmatpush.bf16.msra.mxu0 %v2578
    %3940 = vmatpush.bf16.msra.mxu0 %v2570
    %3941 = vmatpush.bf16.msra.mxu0 %v2562
    %3942 = vmatpush.bf16.msra.mxu0 %v2554
    %3943 = vmatpush.bf16.msra.mxu0 %v2546
    %3944 = vmatmul.bf16.gmra.mxu0 %v88
    %v3945 = vpop.f32.mrf.mxu0
    %v3946 = vadd.f32 %v3932, %v3945
    %v3947 = vpop.f32.mrf.mxu0
    %v3948 = vadd.f32 %v3934, %v3947
    %3949 = vdwg.mxu0
    %3950 = vmatpush.bf16.msra.mxu0 %v2666
    %3951 = vmatpush.bf16.msra.mxu0 %v2658
    %3952 = vmatpush.bf16.msra.mxu0 %v2650
    %3953 = vmatpush.bf16.msra.mxu0 %v2642
    %3954 = vmatpush.bf16.msra.mxu0 %v2634
    %3955 = vmatpush.bf16.msra.mxu0 %v2626
    %3956 = vmatpush.bf16.msra.mxu0 %v2618
    %3957 = vmatpush.bf16.msra.mxu0 %v2610
    %3958 = vmatmul.bf16.gmra.mxu0 %v89
    %v3959 = vpop.f32.mrf.mxu0
    %v3960 = vadd.f32 %v3946, %v3959
    %v3961 = vpop.f32.mrf.mxu0
    %v3962 = vadd.f32 %v3948, %v3961
    %3963 = vdwg.mxu0
    %3964 = vmatpush.bf16.msra.mxu0 %v2219
    %3965 = vmatpush.bf16.msra.mxu0 %v2211
    %3966 = vmatpush.bf16.msra.mxu0 %v2203
    %3967 = vmatpush.bf16.msra.mxu0 %v2195
    %3968 = vmatpush.bf16.msra.mxu0 %v2187
    %3969 = vmatpush.bf16.msra.mxu0 %v2179
    %3970 = vmatpush.bf16.msra.mxu0 %v2171
    %3971 = vmatpush.bf16.msra.mxu0 %v2163
    %3972 = vmatmul.bf16.gmra.mxu0 %v82
    %v3973 = vpop.f32.mrf.mxu0
    %v3974 = vadd.f32 %v611, %v3973
    %v3975 = vpop.f32.mrf.mxu0
    %v3976 = vadd.f32 %v611, %v3975
    %3977 = vdwg.mxu0
    %3978 = vmatpush.bf16.msra.mxu0 %v2283
    %3979 = vmatpush.bf16.msra.mxu0 %v2275
    %3980 = vmatpush.bf16.msra.mxu0 %v2267
    %3981 = vmatpush.bf16.msra.mxu0 %v2259
    %3982 = vmatpush.bf16.msra.mxu0 %v2251
    %3983 = vmatpush.bf16.msra.mxu0 %v2243
    %3984 = vmatpush.bf16.msra.mxu0 %v2235
    %3985 = vmatpush.bf16.msra.mxu0 %v2227
    %3986 = vmatmul.bf16.gmra.mxu0 %v83
    %v3987 = vpop.f32.mrf.mxu0
    %v3988 = vadd.f32 %v3974, %v3987
    %v3989 = vpop.f32.mrf.mxu0
    %v3990 = vadd.f32 %v3976, %v3989
    %3991 = vdwg.mxu0
    %3992 = vmatpush.bf16.msra.mxu0 %v2347
    %3993 = vmatpush.bf16.msra.mxu0 %v2339
    %3994 = vmatpush.bf16.msra.mxu0 %v2331
    %3995 = vmatpush.bf16.msra.mxu0 %v2323
    %3996 = vmatpush.bf16.msra.mxu0 %v2315
    %3997 = vmatpush.bf16.msra.mxu0 %v2307
    %3998 = vmatpush.bf16.msra.mxu0 %v2299
    %3999 = vmatpush.bf16.msra.mxu0 %v2291
    %4000 = vmatmul.bf16.gmra.mxu0 %v84
    %v4001 = vpop.f32.mrf.mxu0
    %v4002 = vadd.f32 %v3988, %v4001
    %v4003 = vpop.f32.mrf.mxu0
    %v4004 = vadd.f32 %v3990, %v4003
    %4005 = vdwg.mxu0
    %4006 = vmatpush.bf16.msra.mxu0 %v2411
    %4007 = vmatpush.bf16.msra.mxu0 %v2403
    %4008 = vmatpush.bf16.msra.mxu0 %v2395
    %4009 = vmatpush.bf16.msra.mxu0 %v2387
    %4010 = vmatpush.bf16.msra.mxu0 %v2379
    %4011 = vmatpush.bf16.msra.mxu0 %v2371
    %4012 = vmatpush.bf16.msra.mxu0 %v2363
    %4013 = vmatpush.bf16.msra.mxu0 %v2355
    %4014 = vmatmul.bf16.gmra.mxu0 %v85
    %v4015 = vpop.f32.mrf.mxu0
    %v4016 = vadd.f32 %v4002, %v4015
    %v4017 = vpop.f32.mrf.mxu0
    %v4018 = vadd.f32 %v4004, %v4017
    %4019 = vdwg.mxu0
    %4020 = vmatpush.bf16.msra.mxu0 %v2475
    %4021 = vmatpush.bf16.msra.mxu0 %v2467
    %4022 = vmatpush.bf16.msra.mxu0 %v2459
    %4023 = vmatpush.bf16.msra.mxu0 %v2451
    %4024 = vmatpush.bf16.msra.mxu0 %v2443
    %4025 = vmatpush.bf16.msra.mxu0 %v2435
    %4026 = vmatpush.bf16.msra.mxu0 %v2427
    %4027 = vmatpush.bf16.msra.mxu0 %v2419
    %4028 = vmatmul.bf16.gmra.mxu0 %v86
    %v4029 = vpop.f32.mrf.mxu0
    %v4030 = vadd.f32 %v4016, %v4029
    %v4031 = vpop.f32.mrf.mxu0
    %v4032 = vadd.f32 %v4018, %v4031
    %4033 = vdwg.mxu0
    %4034 = vmatpush.bf16.msra.mxu0 %v2539
    %4035 = vmatpush.bf16.msra.mxu0 %v2531
    %4036 = vmatpush.bf16.msra.mxu0 %v2523
    %4037 = vmatpush.bf16.msra.mxu0 %v2515
    %4038 = vmatpush.bf16.msra.mxu0 %v2507
    %4039 = vmatpush.bf16.msra.mxu0 %v2499
    %4040 = vmatpush.bf16.msra.mxu0 %v2491
    %4041 = vmatpush.bf16.msra.mxu0 %v2483
    %4042 = vmatmul.bf16.gmra.mxu0 %v87
    %v4043 = vpop.f32.mrf.mxu0
    %v4044 = vadd.f32 %v4030, %v4043
    %v4045 = vpop.f32.mrf.mxu0
    %v4046 = vadd.f32 %v4032, %v4045
    %4047 = vdwg.mxu0
    %4048 = vmatpush.bf16.msra.mxu0 %v2603
    %4049 = vmatpush.bf16.msra.mxu0 %v2595
    %4050 = vmatpush.bf16.msra.mxu0 %v2587
    %4051 = vmatpush.bf16.msra.mxu0 %v2579
    %4052 = vmatpush.bf16.msra.mxu0 %v2571
    %4053 = vmatpush.bf16.msra.mxu0 %v2563
    %4054 = vmatpush.bf16.msra.mxu0 %v2555
    %4055 = vmatpush.bf16.msra.mxu0 %v2547
    %4056 = vmatmul.bf16.gmra.mxu0 %v88
    %v4057 = vpop.f32.mrf.mxu0
    %v4058 = vadd.f32 %v4044, %v4057
    %v4059 = vpop.f32.mrf.mxu0
    %v4060 = vadd.f32 %v4046, %v4059
    %4061 = vdwg.mxu0
    %4062 = vmatpush.bf16.msra.mxu0 %v2667
    %4063 = vmatpush.bf16.msra.mxu0 %v2659
    %4064 = vmatpush.bf16.msra.mxu0 %v2651
    %4065 = vmatpush.bf16.msra.mxu0 %v2643
    %4066 = vmatpush.bf16.msra.mxu0 %v2635
    %4067 = vmatpush.bf16.msra.mxu0 %v2627
    %4068 = vmatpush.bf16.msra.mxu0 %v2619
    %4069 = vmatpush.bf16.msra.mxu0 %v2611
    %4070 = vmatmul.bf16.gmra.mxu0 %v89
    %v4071 = vpop.f32.mrf.mxu0
    %v4072 = vadd.f32 %v4058, %v4071
    %v4073 = vpop.f32.mrf.mxu0
    %v4074 = vadd.f32 %v4060, %v4073
    %4075 = vdwg.mxu0
    %v4076 = vtanh.pop %v3288
    %v4077 = vtanh.pop %v3400
    %v4078 = vtanh.pop %v3512
    %v4079 = vtanh.pop %v3624
    %v4080 = vtanh.pop %v3736
    %v4081 = vtanh.pop %v3848
    %v4082 = vtanh.pop %v3960
    %v4083 = vtanh.pop %v4072
    %v4084 = vtanh.pop %v3290
    %v4085 = vtanh.pop %v3402
    %v4086 = vtanh.pop %v3514
    %v4087 = vtanh.pop %v3626
    %v4088 = vtanh.pop %v3738
    %v4089 = vtanh.pop %v3850
    %v4090 = vtanh.pop %v3962
    %v4091 = vtanh.pop %v4074
    %v4092 = vpack.c.bf16 %v4084, %v4076
    %v4093 = vpack.c.bf16 %v4085, %v4077
    %v4094 = vpack.c.bf16 %v4086, %v4078
    %v4095 = vpack.c.bf16 %v4087, %v4079
    %v4096 = vpack.c.bf16 %v4088, %v4080
    %v4097 = vpack.c.bf16 %v4089, %v4081
    %v4098 = vpack.c.bf16 %v4090, %v4082
    %v4099 = vpack.c.bf16 %v4091, %v4083
    %v4100 = vld [vmem:[%s3] sm:$0xff]
    %v4101 = vld [vmem:[%s3 + $0x8] sm:$0xff]
    %v4102 = vld [vmem:[%s3 + $0x10] sm:$0xff]
    %v4103 = vld [vmem:[%s3 + $0x18] sm:$0xff]
    %v4104 = vld [vmem:[%s3 + $0x20] sm:$0xff]
    %v4105 = vld [vmem:[%s3 + $0x28] sm:$0xff]
    %v4106 = vld [vmem:[%s3 + $0x30] sm:$0xff]
    %v4107 = vld [vmem:[%s3 + $0x38] sm:$0xff]
    %v4108 = vld [vmem:[%s3 + $0x40] sm:$0xff]
    %v4109 = vld [vmem:[%s3 + $0x48] sm:$0xff]
    %v4110 = vld [vmem:[%s3 + $0x50] sm:$0xff]
    %v4111 = vld [vmem:[%s3 + $0x58] sm:$0xff]
    %v4112 = vld [vmem:[%s3 + $0x60] sm:$0xff]
    %v4113 = vld [vmem:[%s3 + $0x68] sm:$0xff]
    %v4114 = vld [vmem:[%s3 + $0x70] sm:$0xff]
    %v4115 = vld [vmem:[%s3 + $0x78] sm:$0xff]
    %v4116 = vld [vmem:[%s3 + $0x80] sm:$0xff]
    %v4117 = vld [vmem:[%s3 + $0x88] sm:$0xff]
    %v4118 = vld [vmem:[%s3 + $0x90] sm:$0xff]
    %v4119 = vld [vmem:[%s3 + $0x98] sm:$0xff]
    %v4120 = vld [vmem:[%s3 + $0xa0] sm:$0xff]
    %v4121 = vld [vmem:[%s3 + $0xa8] sm:$0xff]
    %v4122 = vld [vmem:[%s3 + $0xb0] sm:$0xff]
    %v4123 = vld [vmem:[%s3 + $0xb8] sm:$0xff]
    %v4124 = vld [vmem:[%s3 + $0xc0] sm:$0xff]
    %v4125 = vld [vmem:[%s3 + $0xc8] sm:$0xff]
    %v4126 = vld [vmem:[%s3 + $0xd0] sm:$0xff]
    %v4127 = vld [vmem:[%s3 + $0xd8] sm:$0xff]
    %v4128 = vld [vmem:[%s3 + $0xe0] sm:$0xff]
    %v4129 = vld [vmem:[%s3 + $0xe8] sm:$0xff]
    %v4130 = vld [vmem:[%s3 + $0xf0] sm:$0xff]
    %v4131 = vld [vmem:[%s3 + $0xf8] sm:$0xff]
    %v4132 = vld [vmem:[%s3 + $0x100] sm:$0xff]
    %v4133 = vld [vmem:[%s3 + $0x108] sm:$0xff]
    %v4134 = vld [vmem:[%s3 + $0x110] sm:$0xff]
    %v4135 = vld [vmem:[%s3 + $0x118] sm:$0xff]
    %v4136 = vld [vmem:[%s3 + $0x120] sm:$0xff]
    %v4137 = vld [vmem:[%s3 + $0x128] sm:$0xff]
    %v4138 = vld [vmem:[%s3 + $0x130] sm:$0xff]
    %v4139 = vld [vmem:[%s3 + $0x138] sm:$0xff]
    %v4140 = vld [vmem:[%s3 + $0x140] sm:$0xff]
    %v4141 = vld [vmem:[%s3 + $0x148] sm:$0xff]
    %v4142 = vld [vmem:[%s3 + $0x150] sm:$0xff]
    %v4143 = vld [vmem:[%s3 + $0x158] sm:$0xff]
    %v4144 = vld [vmem:[%s3 + $0x160] sm:$0xff]
    %v4145 = vld [vmem:[%s3 + $0x168] sm:$0xff]
    %v4146 = vld [vmem:[%s3 + $0x170] sm:$0xff]
    %v4147 = vld [vmem:[%s3 + $0x178] sm:$0xff]
    %v4148 = vld [vmem:[%s3 + $0x180] sm:$0xff]
    %v4149 = vld [vmem:[%s3 + $0x188] sm:$0xff]
    %v4150 = vld [vmem:[%s3 + $0x190] sm:$0xff]
    %v4151 = vld [vmem:[%s3 + $0x198] sm:$0xff]
    %v4152 = vld [vmem:[%s3 + $0x1a0] sm:$0xff]
    %v4153 = vld [vmem:[%s3 + $0x1a8] sm:$0xff]
    %v4154 = vld [vmem:[%s3 + $0x1b0] sm:$0xff]
    %v4155 = vld [vmem:[%s3 + $0x1b8] sm:$0xff]
    %v4156 = vld [vmem:[%s3 + $0x1c0] sm:$0xff]
    %v4157 = vld [vmem:[%s3 + $0x1c8] sm:$0xff]
    %v4158 = vld [vmem:[%s3 + $0x1d0] sm:$0xff]
    %v4159 = vld [vmem:[%s3 + $0x1d8] sm:$0xff]
    %v4160 = vld [vmem:[%s3 + $0x1e0] sm:$0xff]
    %v4161 = vld [vmem:[%s3 + $0x1e8] sm:$0xff]
    %v4162 = vld [vmem:[%s3 + $0x1f0] sm:$0xff]
    %v4163 = vld [vmem:[%s3 + $0x1f8] sm:$0xff]
    %v4164 = vld [vmem:[%s3 + $0x200] sm:$0xff]
    %v4165 = vld [vmem:[%s3 + $0x208] sm:$0xff]
    %v4166 = vld [vmem:[%s3 + $0x210] sm:$0xff]
    %v4167 = vld [vmem:[%s3 + $0x218] sm:$0xff]
    %v4168 = vld [vmem:[%s3 + $0x220] sm:$0xff]
    %v4169 = vld [vmem:[%s3 + $0x228] sm:$0xff]
    %v4170 = vld [vmem:[%s3 + $0x230] sm:$0xff]
    %v4171 = vld [vmem:[%s3 + $0x238] sm:$0xff]
    %v4172 = vld [vmem:[%s3 + $0x240] sm:$0xff]
    %v4173 = vld [vmem:[%s3 + $0x248] sm:$0xff]
    %v4174 = vld [vmem:[%s3 + $0x250] sm:$0xff]
    %v4175 = vld [vmem:[%s3 + $0x258] sm:$0xff]
    %v4176 = vld [vmem:[%s3 + $0x260] sm:$0xff]
    %v4177 = vld [vmem:[%s3 + $0x268] sm:$0xff]
    %v4178 = vld [vmem:[%s3 + $0x270] sm:$0xff]
    %v4179 = vld [vmem:[%s3 + $0x278] sm:$0xff]
    %v4180 = vld [vmem:[%s3 + $0x280] sm:$0xff]
    %v4181 = vld [vmem:[%s3 + $0x288] sm:$0xff]
    %v4182 = vld [vmem:[%s3 + $0x290] sm:$0xff]
    %v4183 = vld [vmem:[%s3 + $0x298] sm:$0xff]
    %v4184 = vld [vmem:[%s3 + $0x2a0] sm:$0xff]
    %v4185 = vld [vmem:[%s3 + $0x2a8] sm:$0xff]
    %v4186 = vld [vmem:[%s3 + $0x2b0] sm:$0xff]
    %v4187 = vld [vmem:[%s3 + $0x2b8] sm:$0xff]
    %v4188 = vld [vmem:[%s3 + $0x2c0] sm:$0xff]
    %v4189 = vld [vmem:[%s3 + $0x2c8] sm:$0xff]
    %v4190 = vld [vmem:[%s3 + $0x2d0] sm:$0xff]
    %v4191 = vld [vmem:[%s3 + $0x2d8] sm:$0xff]
    %v4192 = vld [vmem:[%s3 + $0x2e0] sm:$0xff]
    %v4193 = vld [vmem:[%s3 + $0x2e8] sm:$0xff]
    %v4194 = vld [vmem:[%s3 + $0x2f0] sm:$0xff]
    %v4195 = vld [vmem:[%s3 + $0x2f8] sm:$0xff]
    %v4196 = vld [vmem:[%s3 + $0x300] sm:$0xff]
    %v4197 = vld [vmem:[%s3 + $0x308] sm:$0xff]
    %v4198 = vld [vmem:[%s3 + $0x310] sm:$0xff]
    %v4199 = vld [vmem:[%s3 + $0x318] sm:$0xff]
    %v4200 = vld [vmem:[%s3 + $0x320] sm:$0xff]
    %v4201 = vld [vmem:[%s3 + $0x328] sm:$0xff]
    %v4202 = vld [vmem:[%s3 + $0x330] sm:$0xff]
    %v4203 = vld [vmem:[%s3 + $0x338] sm:$0xff]
    %v4204 = vld [vmem:[%s3 + $0x340] sm:$0xff]
    %v4205 = vld [vmem:[%s3 + $0x348] sm:$0xff]
    %v4206 = vld [vmem:[%s3 + $0x350] sm:$0xff]
    %v4207 = vld [vmem:[%s3 + $0x358] sm:$0xff]
    %v4208 = vld [vmem:[%s3 + $0x360] sm:$0xff]
    %v4209 = vld [vmem:[%s3 + $0x368] sm:$0xff]
    %v4210 = vld [vmem:[%s3 + $0x370] sm:$0xff]
    %v4211 = vld [vmem:[%s3 + $0x378] sm:$0xff]
    %v4212 = vld [vmem:[%s3 + $0x380] sm:$0xff]
    %v4213 = vld [vmem:[%s3 + $0x388] sm:$0xff]
    %v4214 = vld [vmem:[%s3 + $0x390] sm:$0xff]
    %v4215 = vld [vmem:[%s3 + $0x398] sm:$0xff]
    %v4216 = vld [vmem:[%s3 + $0x3a0] sm:$0xff]
    %v4217 = vld [vmem:[%s3 + $0x3a8] sm:$0xff]
    %v4218 = vld [vmem:[%s3 + $0x3b0] sm:$0xff]
    %v4219 = vld [vmem:[%s3 + $0x3b8] sm:$0xff]
    %v4220 = vld [vmem:[%s3 + $0x3c0] sm:$0xff]
    %v4221 = vld [vmem:[%s3 + $0x3c8] sm:$0xff]
    %v4222 = vld [vmem:[%s3 + $0x3d0] sm:$0xff]
    %v4223 = vld [vmem:[%s3 + $0x3d8] sm:$0xff]
    %v4224 = vld [vmem:[%s3 + $0x3e0] sm:$0xff]
    %v4225 = vld [vmem:[%s3 + $0x3e8] sm:$0xff]
    %v4226 = vld [vmem:[%s3 + $0x3f0] sm:$0xff]
    %v4227 = vld [vmem:[%s3 + $0x3f8] sm:$0xff]
    %v4228 = vld [vmem:[%s4] sm:$0x3]
    %v4230 = vperm.slane %v4228, 0
    %v4231 = vperm.slane %v4228, 1
    %v4362 = vunpack.c.l.b16 %v4100
    %v4363 = vunpack.c.h.b16 %v4100
    %v4364 = vunpack.c.l.b16 %v4101
    %v4365 = vunpack.c.h.b16 %v4101
    %v4366 = vunpack.c.l.b16 %v4102
    %v4367 = vunpack.c.h.b16 %v4102
    %v4368 = vunpack.c.l.b16 %v4103
    %v4369 = vunpack.c.h.b16 %v4103
    %v4370 = vunpack.c.l.b16 %v4104
    %v4371 = vunpack.c.h.b16 %v4104
    %v4372 = vunpack.c.l.b16 %v4105
    %v4373 = vunpack.c.h.b16 %v4105
    %v4374 = vunpack.c.l.b16 %v4106
    %v4375 = vunpack.c.h.b16 %v4106
    %v4376 = vunpack.c.l.b16 %v4107
    %v4377 = vunpack.c.h.b16 %v4107
    %v4378 = vunpack.c.l.b16 %v4108
    %v4379 = vunpack.c.h.b16 %v4108
    %v4380 = vunpack.c.l.b16 %v4109
    %v4381 = vunpack.c.h.b16 %v4109
    %v4382 = vunpack.c.l.b16 %v4110
    %v4383 = vunpack.c.h.b16 %v4110
    %v4384 = vunpack.c.l.b16 %v4111
    %v4385 = vunpack.c.h.b16 %v4111
    %v4386 = vunpack.c.l.b16 %v4112
    %v4387 = vunpack.c.h.b16 %v4112
    %v4388 = vunpack.c.l.b16 %v4113
    %v4389 = vunpack.c.h.b16 %v4113
    %v4390 = vunpack.c.l.b16 %v4114
    %v4391 = vunpack.c.h.b16 %v4114
    %v4392 = vunpack.c.l.b16 %v4115
    %v4393 = vunpack.c.h.b16 %v4115
    %v4394 = vunpack.c.l.b16 %v4116
    %v4395 = vunpack.c.h.b16 %v4116
    %v4396 = vunpack.c.l.b16 %v4117
    %v4397 = vunpack.c.h.b16 %v4117
    %v4398 = vunpack.c.l.b16 %v4118
    %v4399 = vunpack.c.h.b16 %v4118
    %v4400 = vunpack.c.l.b16 %v4119
    %v4401 = vunpack.c.h.b16 %v4119
    %v4402 = vunpack.c.l.b16 %v4120
    %v4403 = vunpack.c.h.b16 %v4120
    %v4404 = vunpack.c.l.b16 %v4121
    %v4405 = vunpack.c.h.b16 %v4121
    %v4406 = vunpack.c.l.b16 %v4122
    %v4407 = vunpack.c.h.b16 %v4122
    %v4408 = vunpack.c.l.b16 %v4123
    %v4409 = vunpack.c.h.b16 %v4123
    %v4410 = vunpack.c.l.b16 %v4124
    %v4411 = vunpack.c.h.b16 %v4124
    %v4412 = vunpack.c.l.b16 %v4125
    %v4413 = vunpack.c.h.b16 %v4125
    %v4414 = vunpack.c.l.b16 %v4126
    %v4415 = vunpack.c.h.b16 %v4126
    %v4416 = vunpack.c.l.b16 %v4127
    %v4417 = vunpack.c.h.b16 %v4127
    %v4418 = vunpack.c.l.b16 %v4128
    %v4419 = vunpack.c.h.b16 %v4128
    %v4420 = vunpack.c.l.b16 %v4129
    %v4421 = vunpack.c.h.b16 %v4129
    %v4422 = vunpack.c.l.b16 %v4130
    %v4423 = vunpack.c.h.b16 %v4130
    %v4424 = vunpack.c.l.b16 %v4131
    %v4425 = vunpack.c.h.b16 %v4131
    %v4426 = vunpack.c.l.b16 %v4132
    %v4427 = vunpack.c.h.b16 %v4132
    %v4428 = vunpack.c.l.b16 %v4133
    %v4429 = vunpack.c.h.b16 %v4133
    %v4430 = vunpack.c.l.b16 %v4134
    %v4431 = vunpack.c.h.b16 %v4134
    %v4432 = vunpack.c.l.b16 %v4135
    %v4433 = vunpack.c.h.b16 %v4135
    %v4434 = vunpack.c.l.b16 %v4136
    %v4435 = vunpack.c.h.b16 %v4136
    %v4436 = vunpack.c.l.b16 %v4137
    %v4437 = vunpack.c.h.b16 %v4137
    %v4438 = vunpack.c.l.b16 %v4138
    %v4439 = vunpack.c.h.b16 %v4138
    %v4440 = vunpack.c.l.b16 %v4139
    %v4441 = vunpack.c.h.b16 %v4139
    %v4442 = vunpack.c.l.b16 %v4140
    %v4443 = vunpack.c.h.b16 %v4140
    %v4444 = vunpack.c.l.b16 %v4141
    %v4445 = vunpack.c.h.b16 %v4141
    %v4446 = vunpack.c.l.b16 %v4142
    %v4447 = vunpack.c.h.b16 %v4142
    %v4448 = vunpack.c.l.b16 %v4143
    %v4449 = vunpack.c.h.b16 %v4143
    %v4450 = vunpack.c.l.b16 %v4144
    %v4451 = vunpack.c.h.b16 %v4144
    %v4452 = vunpack.c.l.b16 %v4145
    %v4453 = vunpack.c.h.b16 %v4145
    %v4454 = vunpack.c.l.b16 %v4146
    %v4455 = vunpack.c.h.b16 %v4146
    %v4456 = vunpack.c.l.b16 %v4147
    %v4457 = vunpack.c.h.b16 %v4147
    %v4458 = vunpack.c.l.b16 %v4148
    %v4459 = vunpack.c.h.b16 %v4148
    %v4460 = vunpack.c.l.b16 %v4149
    %v4461 = vunpack.c.h.b16 %v4149
    %v4462 = vunpack.c.l.b16 %v4150
    %v4463 = vunpack.c.h.b16 %v4150
    %v4464 = vunpack.c.l.b16 %v4151
    %v4465 = vunpack.c.h.b16 %v4151
    %v4466 = vunpack.c.l.b16 %v4152
    %v4467 = vunpack.c.h.b16 %v4152
    %v4468 = vunpack.c.l.b16 %v4153
    %v4469 = vunpack.c.h.b16 %v4153
    %v4470 = vunpack.c.l.b16 %v4154
    %v4471 = vunpack.c.h.b16 %v4154
    %v4472 = vunpack.c.l.b16 %v4155
    %v4473 = vunpack.c.h.b16 %v4155
    %v4474 = vunpack.c.l.b16 %v4156
    %v4475 = vunpack.c.h.b16 %v4156
    %v4476 = vunpack.c.l.b16 %v4157
    %v4477 = vunpack.c.h.b16 %v4157
    %v4478 = vunpack.c.l.b16 %v4158
    %v4479 = vunpack.c.h.b16 %v4158
    %v4480 = vunpack.c.l.b16 %v4159
    %v4481 = vunpack.c.h.b16 %v4159
    %v4482 = vunpack.c.l.b16 %v4160
    %v4483 = vunpack.c.h.b16 %v4160
    %v4484 = vunpack.c.l.b16 %v4161
    %v4485 = vunpack.c.h.b16 %v4161
    %v4486 = vunpack.c.l.b16 %v4162
    %v4487 = vunpack.c.h.b16 %v4162
    %v4488 = vunpack.c.l.b16 %v4163
    %v4489 = vunpack.c.h.b16 %v4163
    %v4490 = vunpack.c.l.b16 %v4164
    %v4491 = vunpack.c.h.b16 %v4164
    %v4492 = vunpack.c.l.b16 %v4165
    %v4493 = vunpack.c.h.b16 %v4165
    %v4494 = vunpack.c.l.b16 %v4166
    %v4495 = vunpack.c.h.b16 %v4166
    %v4496 = vunpack.c.l.b16 %v4167
    %v4497 = vunpack.c.h.b16 %v4167
    %v4498 = vunpack.c.l.b16 %v4168
    %v4499 = vunpack.c.h.b16 %v4168
    %v4500 = vunpack.c.l.b16 %v4169
    %v4501 = vunpack.c.h.b16 %v4169
    %v4502 = vunpack.c.l.b16 %v4170
    %v4503 = vunpack.c.h.b16 %v4170
    %v4504 = vunpack.c.l.b16 %v4171
    %v4505 = vunpack.c.h.b16 %v4171
    %v4506 = vunpack.c.l.b16 %v4172
    %v4507 = vunpack.c.h.b16 %v4172
    %v4508 = vunpack.c.l.b16 %v4173
    %v4509 = vunpack.c.h.b16 %v4173
    %v4510 = vunpack.c.l.b16 %v4174
    %v4511 = vunpack.c.h.b16 %v4174
    %v4512 = vunpack.c.l.b16 %v4175
    %v4513 = vunpack.c.h.b16 %v4175
    %v4514 = vunpack.c.l.b16 %v4176
    %v4515 = vunpack.c.h.b16 %v4176
    %v4516 = vunpack.c.l.b16 %v4177
    %v4517 = vunpack.c.h.b16 %v4177
    %v4518 = vunpack.c.l.b16 %v4178
    %v4519 = vunpack.c.h.b16 %v4178
    %v4520 = vunpack.c.l.b16 %v4179
    %v4521 = vunpack.c.h.b16 %v4179
    %v4522 = vunpack.c.l.b16 %v4180
    %v4523 = vunpack.c.h.b16 %v4180
    %v4524 = vunpack.c.l.b16 %v4181
    %v4525 = vunpack.c.h.b16 %v4181
    %v4526 = vunpack.c.l.b16 %v4182
    %v4527 = vunpack.c.h.b16 %v4182
    %v4528 = vunpack.c.l.b16 %v4183
    %v4529 = vunpack.c.h.b16 %v4183
    %v4530 = vunpack.c.l.b16 %v4184
    %v4531 = vunpack.c.h.b16 %v4184
    %v4532 = vunpack.c.l.b16 %v4185
    %v4533 = vunpack.c.h.b16 %v4185
    %v4534 = vunpack.c.l.b16 %v4186
    %v4535 = vunpack.c.h.b16 %v4186
    %v4536 = vunpack.c.l.b16 %v4187
    %v4537 = vunpack.c.h.b16 %v4187
    %v4538 = vunpack.c.l.b16 %v4188
    %v4539 = vunpack.c.h.b16 %v4188
    %v4540 = vunpack.c.l.b16 %v4189
    %v4541 = vunpack.c.h.b16 %v4189
    %v4542 = vunpack.c.l.b16 %v4190
    %v4543 = vunpack.c.h.b16 %v4190
    %v4544 = vunpack.c.l.b16 %v4191
    %v4545 = vunpack.c.h.b16 %v4191
    %v4546 = vunpack.c.l.b16 %v4192
    %v4547 = vunpack.c.h.b16 %v4192
    %v4548 = vunpack.c.l.b16 %v4193
    %v4549 = vunpack.c.h.b16 %v4193
    %v4550 = vunpack.c.l.b16 %v4194
    %v4551 = vunpack.c.h.b16 %v4194
    %v4552 = vunpack.c.l.b16 %v4195
    %v4553 = vunpack.c.h.b16 %v4195
    %v4554 = vunpack.c.l.b16 %v4196
    %v4555 = vunpack.c.h.b16 %v4196
    %v4556 = vunpack.c.l.b16 %v4197
    %v4557 = vunpack.c.h.b16 %v4197
    %v4558 = vunpack.c.l.b16 %v4198
    %v4559 = vunpack.c.h.b16 %v4198
    %v4560 = vunpack.c.l.b16 %v4199
    %v4561 = vunpack.c.h.b16 %v4199
    %v4562 = vunpack.c.l.b16 %v4200
    %v4563 = vunpack.c.h.b16 %v4200
    %v4564 = vunpack.c.l.b16 %v4201
    %v4565 = vunpack.c.h.b16 %v4201
    %v4566 = vunpack.c.l.b16 %v4202
    %v4567 = vunpack.c.h.b16 %v4202
    %v4568 = vunpack.c.l.b16 %v4203
    %v4569 = vunpack.c.h.b16 %v4203
    %v4570 = vunpack.c.l.b16 %v4204
    %v4571 = vunpack.c.h.b16 %v4204
    %v4572 = vunpack.c.l.b16 %v4205
    %v4573 = vunpack.c.h.b16 %v4205
    %v4574 = vunpack.c.l.b16 %v4206
    %v4575 = vunpack.c.h.b16 %v4206
    %v4576 = vunpack.c.l.b16 %v4207
    %v4577 = vunpack.c.h.b16 %v4207
    %v4578 = vunpack.c.l.b16 %v4208
    %v4579 = vunpack.c.h.b16 %v4208
    %v4580 = vunpack.c.l.b16 %v4209
    %v4581 = vunpack.c.h.b16 %v4209
    %v4582 = vunpack.c.l.b16 %v4210
    %v4583 = vunpack.c.h.b16 %v4210
    %v4584 = vunpack.c.l.b16 %v4211
    %v4585 = vunpack.c.h.b16 %v4211
    %v4586 = vunpack.c.l.b16 %v4212
    %v4587 = vunpack.c.h.b16 %v4212
    %v4588 = vunpack.c.l.b16 %v4213
    %v4589 = vunpack.c.h.b16 %v4213
    %v4590 = vunpack.c.l.b16 %v4214
    %v4591 = vunpack.c.h.b16 %v4214
    %v4592 = vunpack.c.l.b16 %v4215
    %v4593 = vunpack.c.h.b16 %v4215
    %v4594 = vunpack.c.l.b16 %v4216
    %v4595 = vunpack.c.h.b16 %v4216
    %v4596 = vunpack.c.l.b16 %v4217
    %v4597 = vunpack.c.h.b16 %v4217
    %v4598 = vunpack.c.l.b16 %v4218
    %v4599 = vunpack.c.h.b16 %v4218
    %v4600 = vunpack.c.l.b16 %v4219
    %v4601 = vunpack.c.h.b16 %v4219
    %v4602 = vunpack.c.l.b16 %v4220
    %v4603 = vunpack.c.h.b16 %v4220
    %v4604 = vunpack.c.l.b16 %v4221
    %v4605 = vunpack.c.h.b16 %v4221
    %v4606 = vunpack.c.l.b16 %v4222
    %v4607 = vunpack.c.h.b16 %v4222
    %v4608 = vunpack.c.l.b16 %v4223
    %v4609 = vunpack.c.h.b16 %v4223
    %v4610 = vunpack.c.l.b16 %v4224
    %v4611 = vunpack.c.h.b16 %v4224
    %v4612 = vunpack.c.l.b16 %v4225
    %v4613 = vunpack.c.h.b16 %v4225
    %v4614 = vunpack.c.l.b16 %v4226
    %v4615 = vunpack.c.h.b16 %v4226
    %v4616 = vunpack.c.l.b16 %v4227
    %v4617 = vunpack.c.h.b16 %v4227
    %v4618 = vpack.c.b16 %v4364, %v4362
    %v4619 = vpack.c.b16 %v4365, %v4363
    %v4620 = vpack.c.b16 %v4368, %v4366
    %v4621 = vpack.c.b16 %v4369, %v4367
    %v4622 = vpack.c.b16 %v4372, %v4370
    %v4623 = vpack.c.b16 %v4373, %v4371
    %v4624 = vpack.c.b16 %v4376, %v4374
    %v4625 = vpack.c.b16 %v4377, %v4375
    %v4626 = vpack.c.b16 %v4380, %v4378
    %v4627 = vpack.c.b16 %v4381, %v4379
    %v4628 = vpack.c.b16 %v4384, %v4382
    %v4629 = vpack.c.b16 %v4385, %v4383
    %v4630 = vpack.c.b16 %v4388, %v4386
    %v4631 = vpack.c.b16 %v4389, %v4387
    %v4632 = vpack.c.b16 %v4392, %v4390
    %v4633 = vpack.c.b16 %v4393, %v4391
    %v4634 = vpack.c.b16 %v4396, %v4394
    %v4635 = vpack.c.b16 %v4397, %v4395
    %v4636 = vpack.c.b16 %v4400, %v4398
    %v4637 = vpack.c.b16 %v4401, %v4399
    %v4638 = vpack.c.b16 %v4404, %v4402
    %v4639 = vpack.c.b16 %v4405, %v4403
    %v4640 = vpack.c.b16 %v4408, %v4406
    %v4641 = vpack.c.b16 %v4409, %v4407
    %v4642 = vpack.c.b16 %v4412, %v4410
    %v4643 = vpack.c.b16 %v4413, %v4411
    %v4644 = vpack.c.b16 %v4416, %v4414
    %v4645 = vpack.c.b16 %v4417, %v4415
    %v4646 = vpack.c.b16 %v4420, %v4418
    %v4647 = vpack.c.b16 %v4421, %v4419
    %v4648 = vpack.c.b16 %v4424, %v4422
    %v4649 = vpack.c.b16 %v4425, %v4423
    %v4650 = vpack.c.b16 %v4428, %v4426
    %v4651 = vpack.c.b16 %v4429, %v4427
    %v4652 = vpack.c.b16 %v4432, %v4430
    %v4653 = vpack.c.b16 %v4433, %v4431
    %v4654 = vpack.c.b16 %v4436, %v4434
    %v4655 = vpack.c.b16 %v4437, %v4435
    %v4656 = vpack.c.b16 %v4440, %v4438
    %v4657 = vpack.c.b16 %v4441, %v4439
    %v4658 = vpack.c.b16 %v4444, %v4442
    %v4659 = vpack.c.b16 %v4445, %v4443
    %v4660 = vpack.c.b16 %v4448, %v4446
    %v4661 = vpack.c.b16 %v4449, %v4447
    %v4662 = vpack.c.b16 %v4452, %v4450
    %v4663 = vpack.c.b16 %v4453, %v4451
    %v4664 = vpack.c.b16 %v4456, %v4454
    %v4665 = vpack.c.b16 %v4457, %v4455
    %v4666 = vpack.c.b16 %v4460, %v4458
    %v4667 = vpack.c.b16 %v4461, %v4459
    %v4668 = vpack.c.b16 %v4464, %v4462
    %v4669 = vpack.c.b16 %v4465, %v4463
    %v4670 = vpack.c.b16 %v4468, %v4466
    %v4671 = vpack.c.b16 %v4469, %v4467
    %v4672 = vpack.c.b16 %v4472, %v4470
    %v4673 = vpack.c.b16 %v4473, %v4471
    %v4674 = vpack.c.b16 %v4476, %v4474
    %v4675 = vpack.c.b16 %v4477, %v4475
    %v4676 = vpack.c.b16 %v4480, %v4478
    %v4677 = vpack.c.b16 %v4481, %v4479
    %v4678 = vpack.c.b16 %v4484, %v4482
    %v4679 = vpack.c.b16 %v4485, %v4483
    %v4680 = vpack.c.b16 %v4488, %v4486
    %v4681 = vpack.c.b16 %v4489, %v4487
    %v4682 = vpack.c.b16 %v4492, %v4490
    %v4683 = vpack.c.b16 %v4493, %v4491
    %v4684 = vpack.c.b16 %v4496, %v4494
    %v4685 = vpack.c.b16 %v4497, %v4495
    %v4686 = vpack.c.b16 %v4500, %v4498
    %v4687 = vpack.c.b16 %v4501, %v4499
    %v4688 = vpack.c.b16 %v4504, %v4502
    %v4689 = vpack.c.b16 %v4505, %v4503
    %v4690 = vpack.c.b16 %v4508, %v4506
    %v4691 = vpack.c.b16 %v4509, %v4507
    %v4692 = vpack.c.b16 %v4512, %v4510
    %v4693 = vpack.c.b16 %v4513, %v4511
    %v4694 = vpack.c.b16 %v4516, %v4514
    %v4695 = vpack.c.b16 %v4517, %v4515
    %v4696 = vpack.c.b16 %v4520, %v4518
    %v4697 = vpack.c.b16 %v4521, %v4519
    %v4698 = vpack.c.b16 %v4524, %v4522
    %v4699 = vpack.c.b16 %v4525, %v4523
    %v4700 = vpack.c.b16 %v4528, %v4526
    %v4701 = vpack.c.b16 %v4529, %v4527
    %v4702 = vpack.c.b16 %v4532, %v4530
    %v4703 = vpack.c.b16 %v4533, %v4531
    %v4704 = vpack.c.b16 %v4536, %v4534
    %v4705 = vpack.c.b16 %v4537, %v4535
    %v4706 = vpack.c.b16 %v4540, %v4538
    %v4707 = vpack.c.b16 %v4541, %v4539
    %v4708 = vpack.c.b16 %v4544, %v4542
    %v4709 = vpack.c.b16 %v4545, %v4543
    %v4710 = vpack.c.b16 %v4548, %v4546
    %v4711 = vpack.c.b16 %v4549, %v4547
    %v4712 = vpack.c.b16 %v4552, %v4550
    %v4713 = vpack.c.b16 %v4553, %v4551
    %v4714 = vpack.c.b16 %v4556, %v4554
    %v4715 = vpack.c.b16 %v4557, %v4555
    %v4716 = vpack.c.b16 %v4560, %v4558
    %v4717 = vpack.c.b16 %v4561, %v4559
    %v4718 = vpack.c.b16 %v4564, %v4562
    %v4719 = vpack.c.b16 %v4565, %v4563
    %v4720 = vpack.c.b16 %v4568, %v4566
    %v4721 = vpack.c.b16 %v4569, %v4567
    %v4722 = vpack.c.b16 %v4572, %v4570
    %v4723 = vpack.c.b16 %v4573, %v4571
    %v4724 = vpack.c.b16 %v4576, %v4574
    %v4725 = vpack.c.b16 %v4577, %v4575
    %v4726 = vpack.c.b16 %v4580, %v4578
    %v4727 = vpack.c.b16 %v4581, %v4579
    %v4728 = vpack.c.b16 %v4584, %v4582
    %v4729 = vpack.c.b16 %v4585, %v4583
    %v4730 = vpack.c.b16 %v4588, %v4586
    %v4731 = vpack.c.b16 %v4589, %v4587
    %v4732 = vpack.c.b16 %v4592, %v4590
    %v4733 = vpack.c.b16 %v4593, %v4591
    %v4734 = vpack.c.b16 %v4596, %v4594
    %v4735 = vpack.c.b16 %v4597, %v4595
    %v4736 = vpack.c.b16 %v4600, %v4598
    %v4737 = vpack.c.b16 %v4601, %v4599
    %v4738 = vpack.c.b16 %v4604, %v4602
    %v4739 = vpack.c.b16 %v4605, %v4603
    %v4740 = vpack.c.b16 %v4608, %v4606
    %v4741 = vpack.c.b16 %v4609, %v4607
    %v4742 = vpack.c.b16 %v4612, %v4610
    %v4743 = vpack.c.b16 %v4613, %v4611
    %v4744 = vpack.c.b16 %v4616, %v4614
    %v4745 = vpack.c.b16 %v4617, %v4615
    %4874 = vmatpush.bf16.msra.mxu0 %v4632
    %4875 = vmatpush.bf16.msra.mxu0 %v4630
    %4876 = vmatpush.bf16.msra.mxu0 %v4628
    %4877 = vmatpush.bf16.msra.mxu0 %v4626
    %4878 = vmatpush.bf16.msra.mxu0 %v4624
    %4879 = vmatpush.bf16.msra.mxu0 %v4622
    %4880 = vmatpush.bf16.msra.mxu0 %v4620
    %4881 = vmatpush.bf16.msra.mxu0 %v4618
    %4882 = vmatmul.bf16.gmra.mxu0 %v4092
    %v4883 = vpop.f32.mrf.mxu0
    %v4884 = vadd.f32 %v4230, %v4883
    %v4885 = vpop.f32.mrf.mxu0
    %v4886 = vadd.f32 %v4230, %v4885
    %4887 = vdwg.mxu0
    %4888 = vmatpush.bf16.msra.mxu0 %v4648
    %4889 = vmatpush.bf16.msra.mxu0 %v4646
    %4890 = vmatpush.bf16.msra.mxu0 %v4644
    %4891 = vmatpush.bf16.msra.mxu0 %v4642
    %4892 = vmatpush.bf16.msra.mxu0 %v4640
    %4893 = vmatpush.bf16.msra.mxu0 %v4638
    %4894 = vmatpush.bf16.msra.mxu0 %v4636
    %4895 = vmatpush.bf16.msra.mxu0 %v4634
    %4896 = vmatmul.bf16.gmra.mxu0 %v4093
    %v4897 = vpop.f32.mrf.mxu0
    %v4898 = vadd.f32 %v4884, %v4897
    %v4899 = vpop.f32.mrf.mxu0
    %v4900 = vadd.f32 %v4886, %v4899
    %4901 = vdwg.mxu0
    %4902 = vmatpush.bf16.msra.mxu0 %v4664
    %4903 = vmatpush.bf16.msra.mxu0 %v4662
    %4904 = vmatpush.bf16.msra.mxu0 %v4660
    %4905 = vmatpush.bf16.msra.mxu0 %v4658
    %4906 = vmatpush.bf16.msra.mxu0 %v4656
    %4907 = vmatpush.bf16.msra.mxu0 %v4654
    %4908 = vmatpush.bf16.msra.mxu0 %v4652
    %4909 = vmatpush.bf16.msra.mxu0 %v4650
    %4910 = vmatmul.bf16.gmra.mxu0 %v4094
    %v4911 = vpop.f32.mrf.mxu0
    %v4912 = vadd.f32 %v4898, %v4911
    %v4913 = vpop.f32.mrf.mxu0
    %v4914 = vadd.f32 %v4900, %v4913
    %4915 = vdwg.mxu0
    %4916 = vmatpush.bf16.msra.mxu0 %v4680
    %4917 = vmatpush.bf16.msra.mxu0 %v4678
    %4918 = vmatpush.bf16.msra.mxu0 %v4676
    %4919 = vmatpush.bf16.msra.mxu0 %v4674
    %4920 = vmatpush.bf16.msra.mxu0 %v4672
    %4921 = vmatpush.bf16.msra.mxu0 %v4670
    %4922 = vmatpush.bf16.msra.mxu0 %v4668
    %4923 = vmatpush.bf16.msra.mxu0 %v4666
    %4924 = vmatmul.bf16.gmra.mxu0 %v4095
    %v4925 = vpop.f32.mrf.mxu0
    %v4926 = vadd.f32 %v4912, %v4925
    %v4927 = vpop.f32.mrf.mxu0
    %v4928 = vadd.f32 %v4914, %v4927
    %4929 = vdwg.mxu0
    %4930 = vmatpush.bf16.msra.mxu0 %v4696
    %4931 = vmatpush.bf16.msra.mxu0 %v4694
    %4932 = vmatpush.bf16.msra.mxu0 %v4692
    %4933 = vmatpush.bf16.msra.mxu0 %v4690
    %4934 = vmatpush.bf16.msra.mxu0 %v4688
    %4935 = vmatpush.bf16.msra.mxu0 %v4686
    %4936 = vmatpush.bf16.msra.mxu0 %v4684
    %4937 = vmatpush.bf16.msra.mxu0 %v4682
    %4938 = vmatmul.bf16.gmra.mxu0 %v4096
    %v4939 = vpop.f32.mrf.mxu0
    %v4940 = vadd.f32 %v4926, %v4939
    %v4941 = vpop.f32.mrf.mxu0
    %v4942 = vadd.f32 %v4928, %v4941
    %4943 = vdwg.mxu0
    %4944 = vmatpush.bf16.msra.mxu0 %v4712
    %4945 = vmatpush.bf16.msra.mxu0 %v4710
    %4946 = vmatpush.bf16.msra.mxu0 %v4708
    %4947 = vmatpush.bf16.msra.mxu0 %v4706
    %4948 = vmatpush.bf16.msra.mxu0 %v4704
    %4949 = vmatpush.bf16.msra.mxu0 %v4702
    %4950 = vmatpush.bf16.msra.mxu0 %v4700
    %4951 = vmatpush.bf16.msra.mxu0 %v4698
    %4952 = vmatmul.bf16.gmra.mxu0 %v4097
    %v4953 = vpop.f32.mrf.mxu0
    %v4954 = vadd.f32 %v4940, %v4953
    %v4955 = vpop.f32.mrf.mxu0
    %v4956 = vadd.f32 %v4942, %v4955
    %4957 = vdwg.mxu0
    %4958 = vmatpush.bf16.msra.mxu0 %v4728
    %4959 = vmatpush.bf16.msra.mxu0 %v4726
    %4960 = vmatpush.bf16.msra.mxu0 %v4724
    %4961 = vmatpush.bf16.msra.mxu0 %v4722
    %4962 = vmatpush.bf16.msra.mxu0 %v4720
    %4963 = vmatpush.bf16.msra.mxu0 %v4718
    %4964 = vmatpush.bf16.msra.mxu0 %v4716
    %4965 = vmatpush.bf16.msra.mxu0 %v4714
    %4966 = vmatmul.bf16.gmra.mxu0 %v4098
    %v4967 = vpop.f32.mrf.mxu0
    %v4968 = vadd.f32 %v4954, %v4967
    %v4969 = vpop.f32.mrf.mxu0
    %v4970 = vadd.f32 %v4956, %v4969
    %4971 = vdwg.mxu0
    %4972 = vmatpush.bf16.msra.mxu0 %v4744
    %4973 = vmatpush.bf16.msra.mxu0 %v4742
    %4974 = vmatpush.bf16.msra.mxu0 %v4740
    %4975 = vmatpush.bf16.msra.mxu0 %v4738
    %4976 = vmatpush.bf16.msra.mxu0 %v4736
    %4977 = vmatpush.bf16.msra.mxu0 %v4734
    %4978 = vmatpush.bf16.msra.mxu0 %v4732
    %4979 = vmatpush.bf16.msra.mxu0 %v4730
    %4980 = vmatmul.bf16.gmra.mxu0 %v4099
    %v4981 = vpop.f32.mrf.mxu0
    %v4982 = vadd.f32 %v4968, %v4981
    %v4983 = vpop.f32.mrf.mxu0
    %v4984 = vadd.f32 %v4970, %v4983
    %4985 = vdwg.mxu0
    %4986 = vmatpush.bf16.msra.mxu0 %v4633
    %4987 = vmatpush.bf16.msra.mxu0 %v4631
    %4988 = vmatpush.bf16.msra.mxu0 %v4629
    %4989 = vmatpush.bf16.msra.mxu0 %v4627
    %4990 = vmatpush.bf16.msra.mxu0 %v4625
    %4991 = vmatpush.bf16.msra.mxu0 %v4623
    %4992 = vmatpush.bf16.msra.mxu0 %v4621
    %4993 = vmatpush.bf16.msra.mxu0 %v4619
    %4994 = vmatmul.bf16.gmra.mxu0 %v4092
    %v4995 = vpop.f32.mrf.mxu0
    %v4996 = vadd.f32 %v4231, %v4995
    %v4997 = vpop.f32.mrf.mxu0
    %v4998 = vadd.f32 %v4231, %v4997
    %4999 = vdwg.mxu0
    %5000 = vmatpush.bf16.msra.mxu0 %v4649
    %5001 = vmatpush.bf16.msra.mxu0 %v4647
    %5002 = vmatpush.bf16.msra.mxu0 %v4645
    %5003 = vmatpush.bf16.msra.mxu0 %v4643
    %5004 = vmatpush.bf16.msra.mxu0 %v4641
    %5005 = vmatpush.bf16.msra.mxu0 %v4639
    %5006 = vmatpush.bf16.msra.mxu0 %v4637
    %5007 = vmatpush.bf16.msra.mxu0 %v4635
    %5008 = vmatmul.bf16.gmra.mxu0 %v4093
    %v5009 = vpop.f32.mrf.mxu0
    %v5010 = vadd.f32 %v4996, %v5009
    %v5011 = vpop.f32.mrf.mxu0
    %v5012 = vadd.f32 %v4998, %v5011
    %5013 = vdwg.mxu0
    %5014 = vmatpush.bf16.msra.mxu0 %v4665
    %5015 = vmatpush.bf16.msra.mxu0 %v4663
    %5016 = vmatpush.bf16.msra.mxu0 %v4661
    %5017 = vmatpush.bf16.msra.mxu0 %v4659
    %5018 = vmatpush.bf16.msra.mxu0 %v4657
    %5019 = vmatpush.bf16.msra.mxu0 %v4655
    %5020 = vmatpush.bf16.msra.mxu0 %v4653
    %5021 = vmatpush.bf16.msra.mxu0 %v4651
    %5022 = vmatmul.bf16.gmra.mxu0 %v4094
    %v5023 = vpop.f32.mrf.mxu0
    %v5024 = vadd.f32 %v5010, %v5023
    %v5025 = vpop.f32.mrf.mxu0
    %v5026 = vadd.f32 %v5012, %v5025
    %5027 = vdwg.mxu0
    %5028 = vmatpush.bf16.msra.mxu0 %v4681
    %5029 = vmatpush.bf16.msra.mxu0 %v4679
    %5030 = vmatpush.bf16.msra.mxu0 %v4677
    %5031 = vmatpush.bf16.msra.mxu0 %v4675
    %5032 = vmatpush.bf16.msra.mxu0 %v4673
    %5033 = vmatpush.bf16.msra.mxu0 %v4671
    %5034 = vmatpush.bf16.msra.mxu0 %v4669
    %5035 = vmatpush.bf16.msra.mxu0 %v4667
    %5036 = vmatmul.bf16.gmra.mxu0 %v4095
    %v5037 = vpop.f32.mrf.mxu0
    %v5038 = vadd.f32 %v5024, %v5037
    %v5039 = vpop.f32.mrf.mxu0
    %v5040 = vadd.f32 %v5026, %v5039
    %5041 = vdwg.mxu0
    %5042 = vmatpush.bf16.msra.mxu0 %v4697
    %5043 = vmatpush.bf16.msra.mxu0 %v4695
    %5044 = vmatpush.bf16.msra.mxu0 %v4693
    %5045 = vmatpush.bf16.msra.mxu0 %v4691
    %5046 = vmatpush.bf16.msra.mxu0 %v4689
    %5047 = vmatpush.bf16.msra.mxu0 %v4687
    %5048 = vmatpush.bf16.msra.mxu0 %v4685
    %5049 = vmatpush.bf16.msra.mxu0 %v4683
    %5050 = vmatmul.bf16.gmra.mxu0 %v4096
    %v5051 = vpop.f32.mrf.mxu0
    %v5052 = vadd.f32 %v5038, %v5051
    %v5053 = vpop.f32.mrf.mxu0
    %v5054 = vadd.f32 %v5040, %v5053
    %5055 = vdwg.mxu0
    %5056 = vmatpush.bf16.msra.mxu0 %v4713
    %5057 = vmatpush.bf16.msra.mxu0 %v4711
    %5058 = vmatpush.bf16.msra.mxu0 %v4709
    %5059 = vmatpush.bf16.msra.mxu0 %v4707
    %5060 = vmatpush.bf16.msra.mxu0 %v4705
    %5061 = vmatpush.bf16.msra.mxu0 %v4703
    %5062 = vmatpush.bf16.msra.mxu0 %v4701
    %5063 = vmatpush.bf16.msra.mxu0 %v4699
    %5064 = vmatmul.bf16.gmra.mxu0 %v4097
    %v5065 = vpop.f32.mrf.mxu0
    %v5066 = vadd.f32 %v5052, %v5065
    %v5067 = vpop.f32.mrf.mxu0
    %v5068 = vadd.f32 %v5054, %v5067
    %5069 = vdwg.mxu0
    %5070 = vmatpush.bf16.msra.mxu0 %v4729
    %5071 = vmatpush.bf16.msra.mxu0 %v4727
    %5072 = vmatpush.bf16.msra.mxu0 %v4725
    %5073 = vmatpush.bf16.msra.mxu0 %v4723
    %5074 = vmatpush.bf16.msra.mxu0 %v4721
    %5075 = vmatpush.bf16.msra.mxu0 %v4719
    %5076 = vmatpush.bf16.msra.mxu0 %v4717
    %5077 = vmatpush.bf16.msra.mxu0 %v4715
    %5078 = vmatmul.bf16.gmra.mxu0 %v4098
    %v5079 = vpop.f32.mrf.mxu0
    %v5080 = vadd.f32 %v5066, %v5079
    %v5081 = vpop.f32.mrf.mxu0
    %v5082 = vadd.f32 %v5068, %v5081
    %5083 = vdwg.mxu0
    %5084 = vmatpush.bf16.msra.mxu0 %v4745
    %5085 = vmatpush.bf16.msra.mxu0 %v4743
    %5086 = vmatpush.bf16.msra.mxu0 %v4741
    %5087 = vmatpush.bf16.msra.mxu0 %v4739
    %5088 = vmatpush.bf16.msra.mxu0 %v4737
    %5089 = vmatpush.bf16.msra.mxu0 %v4735
    %5090 = vmatpush.bf16.msra.mxu0 %v4733
    %5091 = vmatpush.bf16.msra.mxu0 %v4731
    %5092 = vmatmul.bf16.gmra.mxu0 %v4099
    %v5093 = vpop.f32.mrf.mxu0
    %v5094 = vadd.f32 %v5080, %v5093
    %v5095 = vpop.f32.mrf.mxu0
    %v5096 = vadd.f32 %v5082, %v5095
    %5097 = vdwg.mxu0
    %v5098 = vtanh.pop %v4982
    %v5099 = vtanh.pop %v5094
    %v5100 = vtanh.pop %v4984
    %v5101 = vtanh.pop %v5096
    %5102 = vst [vmem:[#allocation8] sm:$0xff] %v5098
    %5103 = vst [vmem:[#allocation8 + $0x8] sm:$0xff] %v5099
    %5104 = vst [vmem:[#allocation8 + $0x10] sm:$0xff] %v5100
    %5105 = vst [vmem:[#allocation8 + $0x18] sm:$0xff] %v5101
    // Predicated region
    $region34: #{mlp_forward.1} parent=1 // pred_check
      _
    $region35: #{mlp_forward.1} parent=1 // pred_check_branch
      %5107 = sbr.rel (0) target = $region37
    $region36: #{mlp_forward.1} parent=1 // pred_region
      %5109 = vsyncadd [#allocation4], 0
      %s5110 = sshll.u32 [#allocation8], 4
      %s5111 = int_to_ptr.vmem [resolvable:$true] %s5110
      %s5112 = sshll.u32 %s5, 4
      %s5113 = int_to_ptr.hbm [resolvable:$true] %s5112
      %5118 = dma.vmem_to_hbm [thread:$0]  %s5111, 512, %s5113, [#allocation4], 256, 256, 16
    $region37: #{mlp_forward.1} parent=1 // pred_fallthru
      _
    // Predicated region
    $region38: #{mlp_forward.1} parent=1 // pred_check
      _
    $region39: #{mlp_forward.1} parent=1 // pred_check_branch
      %5120 = sbr.rel (0) target = $region41
    $region40: #{mlp_forward.1} parent=1 // pred_region
      %5122 = dma.done [#allocation4], 512
    $region41: #{mlp_forward.1} parent=1 // pred_fallthru
      _
    %5123 = vsyncpa [#allocation3], 1
    %5124 = vsyncpa [#allocation6], 1
    %5125 = vsyncpa [#allocation4], 1

</llo_original>
